<compile_context>
chip_gen: v7x
topology: tpu7x:2x2x1
jax: 0.10.0
libtpu: 0.0.40
codegen_flags: <defaults>
</compile_context>

<pallas_src>
import jax
import jax.numpy as jnp
import numpy as np
from jax import lax
from jax.experimental import pallas as pl
from jax.experimental.pallas import tpu as pltpu


def _store_dh_padded(pad_ref, interior):
    """Write `interior` (D, H, W*C) into pad_ref (D+2, H+2, W*C) with zero D/H halo.

    All stores are full-lane stores. The halo is rewritten every grid step on
    purpose: a one-time pl.when(program_id==0) init would be wrong if the batch
    grid axis is sharded across TensorCores (scratch is per-core).
    """
    d, h, l = interior.shape
    dt = pad_ref.dtype
    zslab = jnp.zeros((1, h + 2, l), dt)
    zline = jnp.zeros((d, 1, l), dt)
    pad_ref[0:1, :, :] = zslab
    pad_ref[d + 1:d + 2, :, :] = zslab
    pad_ref[1:d + 1, 0:1, :] = zline
    pad_ref[1:d + 1, h + 1:h + 2, :] = zline
    pad_ref[1:d + 1, 1:h + 1, :] = interior.astype(dt)


def _conv3x3_banded(pad_ref, w_ref):
    """'Same' 3x3x3 conv via 9 banded matmuls.

    pad_ref: (D+2, H+2, W*Ci) bf16 scratch, zero-padded along D/H only.
    w_ref:   (9, W*Ci, Ncols) bf16 banded weights (kw taps + W padding folded
             into the band structure; output layout is (w, cout) on lanes).
    returns  (D*H, Ncols) float32.
    """
    dp, hp, kdim = pad_ref.shape
    d, h = dp - 2, hp - 2
    ncols = w_ref.shape[-1]
    acc = jnp.zeros((d * h, ncols), jnp.float32)
    k = 0
    for kd in range(3):
        for kh in range(3):
            slab = pad_ref[kd:kd + d, kh:kh + h, :]        # (D, H, W*Ci) bf16
            slab = slab.reshape(d * h, kdim)
            acc = acc + jnp.dot(slab, w_ref[k],
                                preferred_element_type=jnp.float32)
            k += 1
    return acc


def att_double_conv_kernel(x_ref, wx_ref, w2_ref, wb_ref, par_ref,
                           y_ref, xpad_ref, hpad_ref):
    _, D, H, _ = x_ref.shape
    WCo = y_ref.shape[-1]

    # Per-channel params, pre-tiled in the wrapper to the (w, cout) lane layout.
    b1a = par_ref[0:1, :]
    s1a = par_ref[1:2, :]
    t1a = par_ref[2:3, :]
    b1b = par_ref[3:4, :]
    s1b = par_ref[4:5, :]
    t1b = par_ref[5:6, :]
    ba = par_ref[6:7, :]
    bb = par_ref[7:8, :]

    # Stage the D/H zero-padded input block in VMEM (bf16).
    _store_dh_padded(xpad_ref, x_ref[0])

    # Fused x-branch conv: DoubleConv.conv1 || Attention.conv3x3 (shared input).
    accx = _conv3x3_banded(xpad_ref, wx_ref)               # (D*H, 2*WCo) f32

    # Attention branch first so its pre-activation is dead before conv2 runs:
    # ReLU -> 1x1x1 conv (block-diagonal matmul) -> sigmoid -> +1.
    a = jnp.maximum(accx[:, WCo:] + ba, 0.0)
    a = jnp.dot(a.astype(jnp.bfloat16), wb_ref[...],
                preferred_element_type=jnp.float32) + bb
    x2 = jax.nn.sigmoid(a) + 1.0

    # DoubleConv conv1 -> BN(eval) -> ReLU, staged padded for conv2.
    h1 = jnp.maximum((accx[:, :WCo] + b1a) * s1a + t1a, 0.0)
    _store_dh_padded(hpad_ref, h1.reshape(D, H, WCo))

    # DoubleConv conv2 -> BN(eval) -> ReLU.
    acc2 = _conv3x3_banded(hpad_ref, w2_ref)               # (D*H, WCo) f32
    x1 = jnp.maximum((acc2 + b1b) * s1b + t1b, 0.0)

    y_ref[...] = (x2 * x1).reshape(1, D * H, WCo).astype(y_ref.dtype)


def _banded_weights(w_dhwio, w_dim):
    """(3,3,3,Ci,Co) DHWIO conv weights -> (9, W*Ci, W*Co) banded matrices.

    B[kd*3+kh][win*Ci + c, wout*Co + o] = w[kd, kh, win-wout+1, c, o] when the
    tap index is in [0, 3), else 0 — i.e. kw and the W 'same' padding are folded
    into the contraction / output dimensions.
    """
    _, _, _, ci, co = w_dhwio.shape
    kw = jnp.arange(3).reshape(3, 1, 1)
    win = jnp.arange(w_dim).reshape(1, w_dim, 1)
    wout = jnp.arange(w_dim).reshape(1, 1, w_dim)
    sel = (win == wout + kw - 1).astype(w_dhwio.dtype)        # (3, W, W)
    band = jnp.einsum("dhkco,kpw->dhpcwo", w_dhwio, sel)      # (3,3,W,Ci,W,Co)
    return band.reshape(9, w_dim * ci, w_dim * co)


def att_double_conv(x_ncdhw, p):
    """Wrapper: NCDHW in, NCDHW out. All hot-path compute runs in the Pallas kernel."""
    N, Cin, D, H, W = x_ncdhw.shape
    Cout = p["w1a"].shape[-1]
    WCo = W * Cout

    # NCDHW -> (N, D, H, W*Cin), bf16 matmul operands (accumulation stays f32).
    x = jnp.transpose(x_ncdhw, (0, 2, 3, 4, 1)).reshape(N, D, H, W * Cin)
    x = x.astype(jnp.bfloat16)

    # Fused x-branch banded weights: [DoubleConv.conv1 | Attention.conv3x3].
    wx = jnp.concatenate([_banded_weights(p["w1a"], W),
                          _banded_weights(p["wa"], W)], axis=-1)
    wx = wx.astype(jnp.bfloat16)                              # (9, W*Cin, 2*WCo)
    w2 = _banded_weights(p["w1b"], W).astype(jnp.bfloat16)    # (9, WCo, WCo)
    # 1x1x1 attention conv as a block-diagonal (WCo, WCo) matrix.
    wb = jnp.kron(jnp.eye(W, dtype=jnp.float32),
                  p["wb"].astype(jnp.float32)).astype(jnp.bfloat16)

    def tile_row(v):
        return jnp.tile(v.astype(jnp.float32), W)             # lane index w*Co + o

    par = jnp.stack([tile_row(p["b1a"]), tile_row(p["s1a"]), tile_row(p["t1a"]),
                     tile_row(p["b1b"]), tile_row(p["s1b"]), tile_row(p["t1b"]),
                     tile_row(p["ba"]), tile_row(p["bb"])], axis=0)  # (8, WCo) f32

    flops = N * (2 * 9 * D * H * (W * Cin) * (2 * WCo)
                 + 2 * 9 * D * H * WCo * WCo
                 + 2 * D * H * WCo * WCo)
    bytes_accessed = (x.size * 2 + wx.size * 2 + w2.size * 2 + wb.size * 2
                      + par.size * 4 + N * D * H * WCo * 4)
    cost = pl.CostEstimate(flops=int(flops),
                           transcendentals=int(N * D * H * WCo),
                           bytes_accessed=int(bytes_accessed))

    out = pl.pallas_call(
        att_double_conv_kernel,
        out_shape=jax.ShapeDtypeStruct((N, D * H, WCo), jnp.float32),
        grid=(N,),
        in_specs=[
            pl.BlockSpec((1, D, H, W * Cin), lambda n: (n, 0, 0, 0)),
            pl.BlockSpec(wx.shape, lambda n: (0, 0, 0)),
            pl.BlockSpec(w2.shape, lambda n: (0, 0, 0)),
            pl.BlockSpec(wb.shape, lambda n: (0, 0)),
            pl.BlockSpec(par.shape, lambda n: (0, 0)),
        ],
        out_specs=pl.BlockSpec((1, D * H, WCo), lambda n: (n, 0, 0)),
        scratch_shapes=[
            pltpu.VMEM((D + 2, H + 2, W * Cin), jnp.bfloat16),   # padded x block
            pltpu.VMEM((D + 2, H + 2, WCo), jnp.bfloat16),       # padded conv1 act
        ],
        compiler_params=pltpu.CompilerParams(dimension_semantics=("parallel",)),
        cost_estimate=cost,
    )(x, wx, w2, wb, par)

    y = out.reshape(N, D, H, W, Cout)
    return jnp.transpose(y, (0, 4, 1, 2, 3))                  # -> NCDHW


def init_params(key, cin, cout):
    """Deterministic synthetic parameters (shapes match the PyTorch module)."""
    ks = jax.random.split(key, 12)

    def nrm(k, shape, s=0.1):
        return s * jax.random.normal(k, shape, jnp.float32)

    eps = 1e-5
    inv_std = 1.0 / jnp.sqrt(jnp.float32(1.0 + eps))  # BN eval: mean=0, var=1
    p = {}
    # DoubleConv conv1 + BN1
    p["w1a"] = nrm(ks[0], (3, 3, 3, cin, cout))   # DHWIO
    p["b1a"] = nrm(ks[1], (cout,))
    p["s1a"] = (1.0 + nrm(ks[2], (cout,))) * inv_std
    p["t1a"] = nrm(ks[3], (cout,))
    # DoubleConv conv2 + BN2
    p["w1b"] = nrm(ks[4], (3, 3, 3, cout, cout))
    p["b1b"] = nrm(ks[5], (cout,))
    p["s1b"] = (1.0 + nrm(ks[6], (cout,))) * inv_std
    p["t1b"] = nrm(ks[7], (cout,))
    # Attention conv 3x3x3 and 1x1x1
    p["wa"] = nrm(ks[8], (3, 3, 3, cin, cout))
    p["ba"] = nrm(ks[9], (cout,))
    p["wb"] = nrm(ks[10], (cout, cout))           # [c_in, c_out]
    p["bb"] = nrm(ks[11], (cout,))
    return p


def ref_forward(x_ncdhw, p):
    """Pure-JAX f32 reference (same eval-mode BN semantics), for validation."""
    x = jnp.transpose(x_ncdhw, (0, 2, 3, 4, 1)).astype(jnp.float32)

    def conv3(v, w, b):
        return lax.conv_general_dilated(
            v, w, window_strides=(1, 1, 1), padding="SAME",
            dimension_numbers=("NDHWC", "DHWIO", "NDHWC"),
            precision=lax.Precision.HIGHEST) + b

    h = jnp.maximum(conv3(x, p["w1a"], p["b1a"]) * p["s1a"] + p["t1a"], 0.0)
    x1 = jnp.maximum(conv3(h, p["w1b"], p["b1b"]) * p["s1b"] + p["t1b"], 0.0)
    a = jnp.maximum(conv3(x, p["wa"], p["ba"]), 0.0)
    a = jnp.einsum("ndhwc,co->ndhwo", a, p["wb"],
                   precision=lax.Precision.HIGHEST) + p["bb"]
    x2 = jax.nn.sigmoid(a) + 1.0
    y = x2 * x1
    return jnp.transpose(y, (0, 4, 1, 2, 3))


if __name__ == "__main__":
    N, Cin, Cout, D, H, W = 2, 4, 8, 8, 8, 8
    key = jax.random.PRNGKey(0)
    kx, kp = jax.random.split(key)
    x = jax.random.normal(kx, (N, Cin, D, H, W), jnp.float32)  # PyTorch NCDHW
    params = init_params(kp, Cin, Cout)

    y = jax.block_until_ready(att_double_conv(x, params))

    y_ref = ref_forward(x, params)
    # bf16 matmul operands vs f32 reference -> slightly looser tolerance.
    np.testing.assert_allclose(np.asarray(y), np.asarray(y_ref),
                               rtol=3e-2, atol=3e-2)
    print("KERNEL_OK")
</pallas_src>

<mosaic_0001>
module attributes {stable_mosaic.version = 11 : i64} {
  func.func @att_double_conv_kernel(%arg0: i32, %arg1: memref<1x8x8x32xbf16, #tpu.memory_space<vmem>>, %arg2: memref<9x32x128xbf16, #tpu.memory_space<vmem>>, %arg3: memref<9x64x64xbf16, #tpu.memory_space<vmem>>, %arg4: memref<64x64xbf16, #tpu.memory_space<vmem>>, %arg5: memref<8x64xf32, #tpu.memory_space<vmem>>, %arg6: memref<1x64x64xf32, #tpu.memory_space<vmem>>, %arg7: memref<10x10x32xbf16, #tpu.memory_space<vmem>>, %arg8: memref<10x10x64xbf16, #tpu.memory_space<vmem>>) attributes {dimension_semantics = [#tpu.dimension_semantics<parallel>], iteration_bounds = array<i64: 2>, scalar_prefetch = 0 : i64, scratch_operands = 2 : i64, tpu.core_type = #tpu.core_type<tc>, window_params = [{transform_indices = @transform_0, window_bounds = array<i64: 1, 8, 8, 32>}, {pipeline_mode = #tpu.pipeline_mode<synchronous>, transform_indices = @transform_1, window_bounds = array<i64: 9, 32, 128>}, {pipeline_mode = #tpu.pipeline_mode<synchronous>, transform_indices = @transform_2, window_bounds = array<i64: 9, 64, 64>}, {pipeline_mode = #tpu.pipeline_mode<synchronous>, transform_indices = @transform_3, window_bounds = array<i64: 64, 64>}, {pipeline_mode = #tpu.pipeline_mode<synchronous>, transform_indices = @transform_4, window_bounds = array<i64: 8, 64>}, {transform_indices = @transform_5, window_bounds = array<i64: 1, 64, 64>}]} {
    %c0 = arith.constant 0 : index
    %c0_0 = arith.constant 0 : index
    %0 = vector.load %arg5[%c0, %c0_0] : memref<8x64xf32, #tpu.memory_space<vmem>>, vector<1x64xf32>
    %c1 = arith.constant 1 : index
    %c0_1 = arith.constant 0 : index
    %1 = vector.load %arg5[%c1, %c0_1] : memref<8x64xf32, #tpu.memory_space<vmem>>, vector<1x64xf32>
    %c2 = arith.constant 2 : index
    %c0_2 = arith.constant 0 : index
    %2 = vector.load %arg5[%c2, %c0_2] : memref<8x64xf32, #tpu.memory_space<vmem>>, vector<1x64xf32>
    %c3 = arith.constant 3 : index
    %c0_3 = arith.constant 0 : index
    %3 = vector.load %arg5[%c3, %c0_3] : memref<8x64xf32, #tpu.memory_space<vmem>>, vector<1x64xf32>
    %c4 = arith.constant 4 : index
    %c0_4 = arith.constant 0 : index
    %4 = vector.load %arg5[%c4, %c0_4] : memref<8x64xf32, #tpu.memory_space<vmem>>, vector<1x64xf32>
    %c5 = arith.constant 5 : index
    %c0_5 = arith.constant 0 : index
    %5 = vector.load %arg5[%c5, %c0_5] : memref<8x64xf32, #tpu.memory_space<vmem>>, vector<1x64xf32>
    %c6 = arith.constant 6 : index
    %c0_6 = arith.constant 0 : index
    %6 = vector.load %arg5[%c6, %c0_6] : memref<8x64xf32, #tpu.memory_space<vmem>>, vector<1x64xf32>
    %c7 = arith.constant 7 : index
    %c0_7 = arith.constant 0 : index
    %7 = vector.load %arg5[%c7, %c0_7] : memref<8x64xf32, #tpu.memory_space<vmem>>, vector<1x64xf32>
    %c0_8 = arith.constant 0 : index
    %c0_9 = arith.constant 0 : index
    %c0_10 = arith.constant 0 : index
    %c0_11 = arith.constant 0 : index
    %8 = vector.load %arg1[%c0_8, %c0_9, %c0_10, %c0_11] : memref<1x8x8x32xbf16, #tpu.memory_space<vmem>>, vector<1x8x8x32xbf16>
    %9 = vector.shape_cast %8 : vector<1x8x8x32xbf16> to vector<8x8x32xbf16>
    %cst = arith.constant 0.000000e+00 : bf16
    %10 = vector.broadcast %cst : bf16 to vector<1x10x32xbf16>
    %cst_12 = arith.constant 0.000000e+00 : bf16
    %11 = vector.broadcast %cst_12 : bf16 to vector<8x1x32xbf16>
    %c0_13 = arith.constant 0 : index
    %c0_14 = arith.constant 0 : index
    %c0_15 = arith.constant 0 : index
    %12 = vector.load %arg7[%c0_13, %c0_14, %c0_15] : memref<10x10x32xbf16, #tpu.memory_space<vmem>>, vector<1x10x32xbf16>
    tpu.vector_store %arg7[%c0_13, %c0_14, %c0_15], %10 {strides = array<i32>} : memref<10x10x32xbf16, #tpu.memory_space<vmem>>, vector<1x10x32xbf16>,
    %c9 = arith.constant 9 : index
    %c0_16 = arith.constant 0 : index
    %c0_17 = arith.constant 0 : index
    %13 = vector.load %arg7[%c9, %c0_16, %c0_17] : memref<10x10x32xbf16, #tpu.memory_space<vmem>>, vector<1x10x32xbf16>
    tpu.vector_store %arg7[%c9, %c0_16, %c0_17], %10 {strides = array<i32>} : memref<10x10x32xbf16, #tpu.memory_space<vmem>>, vector<1x10x32xbf16>,
    %c1_18 = arith.constant 1 : index
    %c0_19 = arith.constant 0 : index
    %c0_20 = arith.constant 0 : index
    %14 = vector.load %arg7[%c1_18, %c0_19, %c0_20] : memref<10x10x32xbf16, #tpu.memory_space<vmem>>, vector<8x1x32xbf16>
    tpu.vector_store %arg7[%c1_18, %c0_19, %c0_20], %11 {strides = array<i32>} : memref<10x10x32xbf16, #tpu.memory_space<vmem>>, vector<8x1x32xbf16>,
    %c1_21 = arith.constant 1 : index
    %c9_22 = arith.constant 9 : index
    %c0_23 = arith.constant 0 : index
    %15 = vector.load %arg7[%c1_21, %c9_22, %c0_23] : memref<10x10x32xbf16, #tpu.memory_space<vmem>>, vector<8x1x32xbf16>
    tpu.vector_store %arg7[%c1_21, %c9_22, %c0_23], %11 {strides = array<i32>} : memref<10x10x32xbf16, #tpu.memory_space<vmem>>, vector<8x1x32xbf16>,
    %c1_24 = arith.constant 1 : index
    %c1_25 = arith.constant 1 : index
    %c0_26 = arith.constant 0 : index
    %16 = vector.load %arg7[%c1_24, %c1_25, %c0_26] : memref<10x10x32xbf16, #tpu.memory_space<vmem>>, vector<8x8x32xbf16>
    tpu.vector_store %arg7[%c1_24, %c1_25, %c0_26], %9 {strides = array<i32>} : memref<10x10x32xbf16, #tpu.memory_space<vmem>>, vector<8x8x32xbf16>,
    %cst_27 = arith.constant 0.000000e+00 : f32
    %17 = vector.broadcast %cst_27 : f32 to vector<64x128xf32>
    %c0_28 = arith.constant 0 : index
    %c0_29 = arith.constant 0 : index
    %c0_30 = arith.constant 0 : index
    %18 = vector.load %arg7[%c0_28, %c0_29, %c0_30] : memref<10x10x32xbf16, #tpu.memory_space<vmem>>, vector<8x8x32xbf16>
    %19 = vector.shape_cast %18 : vector<8x8x32xbf16> to vector<64x32xbf16>
    %c0_31 = arith.constant 0 : index
    %c0_32 = arith.constant 0 : index
    %c0_33 = arith.constant 0 : index
    %20 = vector.load %arg2[%c0_31, %c0_32, %c0_33] : memref<9x32x128xbf16, #tpu.memory_space<vmem>>, vector<1x32x128xbf16>
    %21 = vector.shape_cast %20 : vector<1x32x128xbf16> to vector<32x128xbf16>
    %cst_34 = arith.constant dense<0.000000e+00> : vector<64x128xf32>
    %22 = tpu.matmul %19, %21, %cst_34 {dimension_numbers = #tpu.dot_dimension_numbers<[1], [0], [0], [1], [0, 0, 1, 1], [], []>} : vector<64x32xbf16>, vector<32x128xbf16>, vector<64x128xf32> -> vector<64x128xf32>
    %23 = arith.addf %17, %22 : vector<64x128xf32>
    %c0_35 = arith.constant 0 : index
    %c1_36 = arith.constant 1 : index
    %c0_37 = arith.constant 0 : index
    %24 = vector.load %arg7[%c0_35, %c1_36, %c0_37] : memref<10x10x32xbf16, #tpu.memory_space<vmem>>, vector<8x8x32xbf16>
    %25 = vector.shape_cast %24 : vector<8x8x32xbf16> to vector<64x32xbf16>
    %c1_38 = arith.constant 1 : index
    %c0_39 = arith.constant 0 : index
    %c0_40 = arith.constant 0 : index
    %26 = vector.load %arg2[%c1_38, %c0_39, %c0_40] : memref<9x32x128xbf16, #tpu.memory_space<vmem>>, vector<1x32x128xbf16>
    %27 = vector.shape_cast %26 : vector<1x32x128xbf16> to vector<32x128xbf16>
    %cst_41 = arith.constant dense<0.000000e+00> : vector<64x128xf32>
    %28 = tpu.matmul %25, %27, %cst_41 {dimension_numbers = #tpu.dot_dimension_numbers<[1], [0], [0], [1], [0, 0, 1, 1], [], []>} : vector<64x32xbf16>, vector<32x128xbf16>, vector<64x128xf32> -> vector<64x128xf32>
    %29 = arith.addf %23, %28 : vector<64x128xf32>
    %c0_42 = arith.constant 0 : index
    %c2_43 = arith.constant 2 : index
    %c0_44 = arith.constant 0 : index
    %30 = vector.load %arg7[%c0_42, %c2_43, %c0_44] : memref<10x10x32xbf16, #tpu.memory_space<vmem>>, vector<8x8x32xbf16>
    %31 = vector.shape_cast %30 : vector<8x8x32xbf16> to vector<64x32xbf16>
    %c2_45 = arith.constant 2 : index
    %c0_46 = arith.constant 0 : index
    %c0_47 = arith.constant 0 : index
    %32 = vector.load %arg2[%c2_45, %c0_46, %c0_47] : memref<9x32x128xbf16, #tpu.memory_space<vmem>>, vector<1x32x128xbf16>
    %33 = vector.shape_cast %32 : vector<1x32x128xbf16> to vector<32x128xbf16>
    %cst_48 = arith.constant dense<0.000000e+00> : vector<64x128xf32>
    %34 = tpu.matmul %31, %33, %cst_48 {dimension_numbers = #tpu.dot_dimension_numbers<[1], [0], [0], [1], [0, 0, 1, 1], [], []>} : vector<64x32xbf16>, vector<32x128xbf16>, vector<64x128xf32> -> vector<64x128xf32>
    %35 = arith.addf %29, %34 : vector<64x128xf32>
    %c1_49 = arith.constant 1 : index
    %c0_50 = arith.constant 0 : index
    %c0_51 = arith.constant 0 : index
    %36 = vector.load %arg7[%c1_49, %c0_50, %c0_51] : memref<10x10x32xbf16, #tpu.memory_space<vmem>>, vector<8x8x32xbf16>
    %37 = vector.shape_cast %36 : vector<8x8x32xbf16> to vector<64x32xbf16>
    %c3_52 = arith.constant 3 : index
    %c0_53 = arith.constant 0 : index
    %c0_54 = arith.constant 0 : index
    %38 = vector.load %arg2[%c3_52, %c0_53, %c0_54] : memref<9x32x128xbf16, #tpu.memory_space<vmem>>, vector<1x32x128xbf16>
    %39 = vector.shape_cast %38 : vector<1x32x128xbf16> to vector<32x128xbf16>
    %cst_55 = arith.constant dense<0.000000e+00> : vector<64x128xf32>
    %40 = tpu.matmul %37, %39, %cst_55 {dimension_numbers = #tpu.dot_dimension_numbers<[1], [0], [0], [1], [0, 0, 1, 1], [], []>} : vector<64x32xbf16>, vector<32x128xbf16>, vector<64x128xf32> -> vector<64x128xf32>
    %41 = arith.addf %35, %40 : vector<64x128xf32>
    %c1_56 = arith.constant 1 : index
    %c1_57 = arith.constant 1 : index
    %c0_58 = arith.constant 0 : index
    %42 = vector.load %arg7[%c1_56, %c1_57, %c0_58] : memref<10x10x32xbf16, #tpu.memory_space<vmem>>, vector<8x8x32xbf16>
    %43 = vector.shape_cast %42 : vector<8x8x32xbf16> to vector<64x32xbf16>
    %c4_59 = arith.constant 4 : index
    %c0_60 = arith.constant 0 : index
    %c0_61 = arith.constant 0 : index
    %44 = vector.load %arg2[%c4_59, %c0_60, %c0_61] : memref<9x32x128xbf16, #tpu.memory_space<vmem>>, vector<1x32x128xbf16>
    %45 = vector.shape_cast %44 : vector<1x32x128xbf16> to vector<32x128xbf16>
    %cst_62 = arith.constant dense<0.000000e+00> : vector<64x128xf32>
    %46 = tpu.matmul %43, %45, %cst_62 {dimension_numbers = #tpu.dot_dimension_numbers<[1], [0], [0], [1], [0, 0, 1, 1], [], []>} : vector<64x32xbf16>, vector<32x128xbf16>, vector<64x128xf32> -> vector<64x128xf32>
    %47 = arith.addf %41, %46 : vector<64x128xf32>
    %c1_63 = arith.constant 1 : index
    %c2_64 = arith.constant 2 : index
    %c0_65 = arith.constant 0 : index
    %48 = vector.load %arg7[%c1_63, %c2_64, %c0_65] : memref<10x10x32xbf16, #tpu.memory_space<vmem>>, vector<8x8x32xbf16>
    %49 = vector.shape_cast %48 : vector<8x8x32xbf16> to vector<64x32xbf16>
    %c5_66 = arith.constant 5 : index
    %c0_67 = arith.constant 0 : index
    %c0_68 = arith.constant 0 : index
    %50 = vector.load %arg2[%c5_66, %c0_67, %c0_68] : memref<9x32x128xbf16, #tpu.memory_space<vmem>>, vector<1x32x128xbf16>
    %51 = vector.shape_cast %50 : vector<1x32x128xbf16> to vector<32x128xbf16>
    %cst_69 = arith.constant dense<0.000000e+00> : vector<64x128xf32>
    %52 = tpu.matmul %49, %51, %cst_69 {dimension_numbers = #tpu.dot_dimension_numbers<[1], [0], [0], [1], [0, 0, 1, 1], [], []>} : vector<64x32xbf16>, vector<32x128xbf16>, vector<64x128xf32> -> vector<64x128xf32>
    %53 = arith.addf %47, %52 : vector<64x128xf32>
    %c2_70 = arith.constant 2 : index
    %c0_71 = arith.constant 0 : index
    %c0_72 = arith.constant 0 : index
    %54 = vector.load %arg7[%c2_70, %c0_71, %c0_72] : memref<10x10x32xbf16, #tpu.memory_space<vmem>>, vector<8x8x32xbf16>
    %55 = vector.shape_cast %54 : vector<8x8x32xbf16> to vector<64x32xbf16>
    %c6_73 = arith.constant 6 : index
    %c0_74 = arith.constant 0 : index
    %c0_75 = arith.constant 0 : index
    %56 = vector.load %arg2[%c6_73, %c0_74, %c0_75] : memref<9x32x128xbf16, #tpu.memory_space<vmem>>, vector<1x32x128xbf16>
    %57 = vector.shape_cast %56 : vector<1x32x128xbf16> to vector<32x128xbf16>
    %cst_76 = arith.constant dense<0.000000e+00> : vector<64x128xf32>
    %58 = tpu.matmul %55, %57, %cst_76 {dimension_numbers = #tpu.dot_dimension_numbers<[1], [0], [0], [1], [0, 0, 1, 1], [], []>} : vector<64x32xbf16>, vector<32x128xbf16>, vector<64x128xf32> -> vector<64x128xf32>
    %59 = arith.addf %53, %58 : vector<64x128xf32>
    %c2_77 = arith.constant 2 : index
    %c1_78 = arith.constant 1 : index
    %c0_79 = arith.constant 0 : index
    %60 = vector.load %arg7[%c2_77, %c1_78, %c0_79] : memref<10x10x32xbf16, #tpu.memory_space<vmem>>, vector<8x8x32xbf16>
    %61 = vector.shape_cast %60 : vector<8x8x32xbf16> to vector<64x32xbf16>
    %c7_80 = arith.constant 7 : index
    %c0_81 = arith.constant 0 : index
    %c0_82 = arith.constant 0 : index
    %62 = vector.load %arg2[%c7_80, %c0_81, %c0_82] : memref<9x32x128xbf16, #tpu.memory_space<vmem>>, vector<1x32x128xbf16>
    %63 = vector.shape_cast %62 : vector<1x32x128xbf16> to vector<32x128xbf16>
    %cst_83 = arith.constant dense<0.000000e+00> : vector<64x128xf32>
    %64 = tpu.matmul %61, %63, %cst_83 {dimension_numbers = #tpu.dot_dimension_numbers<[1], [0], [0], [1], [0, 0, 1, 1], [], []>} : vector<64x32xbf16>, vector<32x128xbf16>, vector<64x128xf32> -> vector<64x128xf32>
    %65 = arith.addf %59, %64 : vector<64x128xf32>
    %c2_84 = arith.constant 2 : index
    %c2_85 = arith.constant 2 : index
    %c0_86 = arith.constant 0 : index
    %66 = vector.load %arg7[%c2_84, %c2_85, %c0_86] : memref<10x10x32xbf16, #tpu.memory_space<vmem>>, vector<8x8x32xbf16>
    %67 = vector.shape_cast %66 : vector<8x8x32xbf16> to vector<64x32xbf16>
    %c8 = arith.constant 8 : index
    %c0_87 = arith.constant 0 : index
    %c0_88 = arith.constant 0 : index
    %68 = vector.load %arg2[%c8, %c0_87, %c0_88] : memref<9x32x128xbf16, #tpu.memory_space<vmem>>, vector<1x32x128xbf16>
    %69 = vector.shape_cast %68 : vector<1x32x128xbf16> to vector<32x128xbf16>
    %cst_89 = arith.constant dense<0.000000e+00> : vector<64x128xf32>
    %70 = tpu.matmul %67, %69, %cst_89 {dimension_numbers = #tpu.dot_dimension_numbers<[1], [0], [0], [1], [0, 0, 1, 1], [], []>} : vector<64x32xbf16>, vector<32x128xbf16>, vector<64x128xf32> -> vector<64x128xf32>
    %71 = arith.addf %65, %70 : vector<64x128xf32>
    %72 = vector.extract_strided_slice %71 {offsets = [0, 64], sizes = [64, 64], strides = [1, 1]} : vector<64x128xf32> to vector<64x64xf32>
    %73 = vector.broadcast %6 : vector<1x64xf32> to vector<64x64xf32>
    %74 = arith.addf %72, %73 : vector<64x64xf32>
    %cst_90 = arith.constant 0.000000e+00 : f32
    %75 = vector.broadcast %cst_90 : f32 to vector<64x64xf32>
    %76 = arith.maximumf %74, %75 : vector<64x64xf32>
    %77 = arith.truncf %76 : vector<64x64xf32> to vector<64x64xbf16>
    %c0_91 = arith.constant 0 : index
    %c0_92 = arith.constant 0 : index
    %78 = vector.load %arg4[%c0_91, %c0_92] : memref<64x64xbf16, #tpu.memory_space<vmem>>, vector<64x64xbf16>
    %cst_93 = arith.constant dense<0.000000e+00> : vector<64x64xf32>
    %79 = tpu.matmul %77, %78, %cst_93 {dimension_numbers = #tpu.dot_dimension_numbers<[1], [0], [0], [1], [0, 0, 1, 1], [], []>} : vector<64x64xbf16>, vector<64x64xbf16>, vector<64x64xf32> -> vector<64x64xf32>
    %80 = vector.broadcast %7 : vector<1x64xf32> to vector<64x64xf32>
    %81 = arith.addf %79, %80 : vector<64x64xf32>
    %82 = arith.negf %81 : vector<64x64xf32>
    %83 = math.exp %82 : vector<64x64xf32>
    %cst_94 = arith.constant 1.000000e+00 : f32
    %84 = vector.broadcast %cst_94 : f32 to vector<64x64xf32>
    %85 = arith.addf %84, %83 : vector<64x64xf32>
    %86 = arith.divf %84, %85 : vector<64x64xf32>
    %cst_95 = arith.constant 1.000000e+00 : f32
    %87 = vector.broadcast %cst_95 : f32 to vector<64x64xf32>
    %88 = arith.addf %86, %87 : vector<64x64xf32>
    %89 = vector.extract_strided_slice %71 {offsets = [0, 0], sizes = [64, 64], strides = [1, 1]} : vector<64x128xf32> to vector<64x64xf32>
    %90 = vector.broadcast %0 : vector<1x64xf32> to vector<64x64xf32>
    %91 = arith.addf %89, %90 : vector<64x64xf32>
    %92 = vector.broadcast %1 : vector<1x64xf32> to vector<64x64xf32>
    %93 = arith.mulf %91, %92 : vector<64x64xf32>
    %94 = vector.broadcast %2 : vector<1x64xf32> to vector<64x64xf32>
    %95 = arith.addf %93, %94 : vector<64x64xf32>
    %cst_96 = arith.constant 0.000000e+00 : f32
    %96 = vector.broadcast %cst_96 : f32 to vector<64x64xf32>
    %97 = arith.maximumf %95, %96 : vector<64x64xf32>
    %98 = vector.shape_cast %97 : vector<64x64xf32> to vector<8x8x64xf32>
    %cst_97 = arith.constant 0.000000e+00 : bf16
    %99 = vector.broadcast %cst_97 : bf16 to vector<1x10x64xbf16>
    %cst_98 = arith.constant 0.000000e+00 : bf16
    %100 = vector.broadcast %cst_98 : bf16 to vector<8x1x64xbf16>
    %c0_99 = arith.constant 0 : index
    %c0_100 = arith.constant 0 : index
    %c0_101 = arith.constant 0 : index
    %101 = vector.load %arg8[%c0_99, %c0_100, %c0_101] : memref<10x10x64xbf16, #tpu.memory_space<vmem>>, vector<1x10x64xbf16>
    tpu.vector_store %arg8[%c0_99, %c0_100, %c0_101], %99 {strides = array<i32>} : memref<10x10x64xbf16, #tpu.memory_space<vmem>>, vector<1x10x64xbf16>,
    %c9_102 = arith.constant 9 : index
    %c0_103 = arith.constant 0 : index
    %c0_104 = arith.constant 0 : index
    %102 = vector.load %arg8[%c9_102, %c0_103, %c0_104] : memref<10x10x64xbf16, #tpu.memory_space<vmem>>, vector<1x10x64xbf16>
    tpu.vector_store %arg8[%c9_102, %c0_103, %c0_104], %99 {strides = array<i32>} : memref<10x10x64xbf16, #tpu.memory_space<vmem>>, vector<1x10x64xbf16>,
    %c1_105 = arith.constant 1 : index
    %c0_106 = arith.constant 0 : index
    %c0_107 = arith.constant 0 : index
    %103 = vector.load %arg8[%c1_105, %c0_106, %c0_107] : memref<10x10x64xbf16, #tpu.memory_space<vmem>>, vector<8x1x64xbf16>
    tpu.vector_store %arg8[%c1_105, %c0_106, %c0_107], %100 {strides = array<i32>} : memref<10x10x64xbf16, #tpu.memory_space<vmem>>, vector<8x1x64xbf16>,
    %c1_108 = arith.constant 1 : index
    %c9_109 = arith.constant 9 : index
    %c0_110 = arith.constant 0 : index
    %104 = vector.load %arg8[%c1_108, %c9_109, %c0_110] : memref<10x10x64xbf16, #tpu.memory_space<vmem>>, vector<8x1x64xbf16>
    tpu.vector_store %arg8[%c1_108, %c9_109, %c0_110], %100 {strides = array<i32>} : memref<10x10x64xbf16, #tpu.memory_space<vmem>>, vector<8x1x64xbf16>,
    %105 = arith.truncf %98 : vector<8x8x64xf32> to vector<8x8x64xbf16>
    %c1_111 = arith.constant 1 : index
    %c1_112 = arith.constant 1 : index
    %c0_113 = arith.constant 0 : index
    %106 = vector.load %arg8[%c1_111, %c1_112, %c0_113] : memref<10x10x64xbf16, #tpu.memory_space<vmem>>, vector<8x8x64xbf16>
    tpu.vector_store %arg8[%c1_111, %c1_112, %c0_113], %105 {strides = array<i32>} : memref<10x10x64xbf16, #tpu.memory_space<vmem>>, vector<8x8x64xbf16>,
    %cst_114 = arith.constant 0.000000e+00 : f32
    %107 = vector.broadcast %cst_114 : f32 to vector<64x64xf32>
    %c0_115 = arith.constant 0 : index
    %c0_116 = arith.constant 0 : index
    %c0_117 = arith.constant 0 : index
    %108 = vector.load %arg8[%c0_115, %c0_116, %c0_117] : memref<10x10x64xbf16, #tpu.memory_space<vmem>>, vector<8x8x64xbf16>
    %109 = vector.shape_cast %108 : vector<8x8x64xbf16> to vector<64x64xbf16>
    %c0_118 = arith.constant 0 : index
    %c0_119 = arith.constant 0 : index
    %c0_120 = arith.constant 0 : index
    %110 = vector.load %arg3[%c0_118, %c0_119, %c0_120] : memref<9x64x64xbf16, #tpu.memory_space<vmem>>, vector<1x64x64xbf16>
    %111 = vector.shape_cast %110 : vector<1x64x64xbf16> to vector<64x64xbf16>
    %cst_121 = arith.constant dense<0.000000e+00> : vector<64x64xf32>
    %112 = tpu.matmul %109, %111, %cst_121 {dimension_numbers = #tpu.dot_dimension_numbers<[1], [0], [0], [1], [0, 0, 1, 1], [], []>} : vector<64x64xbf16>, vector<64x64xbf16>, vector<64x64xf32> -> vector<64x64xf32>
    %113 = arith.addf %107, %112 : vector<64x64xf32>
    %c0_122 = arith.constant 0 : index
    %c1_123 = arith.constant 1 : index
    %c0_124 = arith.constant 0 : index
    %114 = vector.load %arg8[%c0_122, %c1_123, %c0_124] : memref<10x10x64xbf16, #tpu.memory_space<vmem>>, vector<8x8x64xbf16>
    %115 = vector.shape_cast %114 : vector<8x8x64xbf16> to vector<64x64xbf16>
    %c1_125 = arith.constant 1 : index
    %c0_126 = arith.constant 0 : index
    %c0_127 = arith.constant 0 : index
    %116 = vector.load %arg3[%c1_125, %c0_126, %c0_127] : memref<9x64x64xbf16, #tpu.memory_space<vmem>>, vector<1x64x64xbf16>
    %117 = vector.shape_cast %116 : vector<1x64x64xbf16> to vector<64x64xbf16>
    %cst_128 = arith.constant dense<0.000000e+00> : vector<64x64xf32>
    %118 = tpu.matmul %115, %117, %cst_128 {dimension_numbers = #tpu.dot_dimension_numbers<[1], [0], [0], [1], [0, 0, 1, 1], [], []>} : vector<64x64xbf16>, vector<64x64xbf16>, vector<64x64xf32> -> vector<64x64xf32>
    %119 = arith.addf %113, %118 : vector<64x64xf32>
    %c0_129 = arith.constant 0 : index
    %c2_130 = arith.constant 2 : index
    %c0_131 = arith.constant 0 : index
    %120 = vector.load %arg8[%c0_129, %c2_130, %c0_131] : memref<10x10x64xbf16, #tpu.memory_space<vmem>>, vector<8x8x64xbf16>
    %121 = vector.shape_cast %120 : vector<8x8x64xbf16> to vector<64x64xbf16>
    %c2_132 = arith.constant 2 : index
    %c0_133 = arith.constant 0 : index
    %c0_134 = arith.constant 0 : index
    %122 = vector.load %arg3[%c2_132, %c0_133, %c0_134] : memref<9x64x64xbf16, #tpu.memory_space<vmem>>, vector<1x64x64xbf16>
    %123 = vector.shape_cast %122 : vector<1x64x64xbf16> to vector<64x64xbf16>
    %cst_135 = arith.constant dense<0.000000e+00> : vector<64x64xf32>
    %124 = tpu.matmul %121, %123, %cst_135 {dimension_numbers = #tpu.dot_dimension_numbers<[1], [0], [0], [1], [0, 0, 1, 1], [], []>} : vector<64x64xbf16>, vector<64x64xbf16>, vector<64x64xf32> -> vector<64x64xf32>
    %125 = arith.addf %119, %124 : vector<64x64xf32>
    %c1_136 = arith.constant 1 : index
    %c0_137 = arith.constant 0 : index
    %c0_138 = arith.constant 0 : index
    %126 = vector.load %arg8[%c1_136, %c0_137, %c0_138] : memref<10x10x64xbf16, #tpu.memory_space<vmem>>, vector<8x8x64xbf16>
    %127 = vector.shape_cast %126 : vector<8x8x64xbf16> to vector<64x64xbf16>
    %c3_139 = arith.constant 3 : index
    %c0_140 = arith.constant 0 : index
    %c0_141 = arith.constant 0 : index
    %128 = vector.load %arg3[%c3_139, %c0_140, %c0_141] : memref<9x64x64xbf16, #tpu.memory_space<vmem>>, vector<1x64x64xbf16>
    %129 = vector.shape_cast %128 : vector<1x64x64xbf16> to vector<64x64xbf16>
    %cst_142 = arith.constant dense<0.000000e+00> : vector<64x64xf32>
    %130 = tpu.matmul %127, %129, %cst_142 {dimension_numbers = #tpu.dot_dimension_numbers<[1], [0], [0], [1], [0, 0, 1, 1], [], []>} : vector<64x64xbf16>, vector<64x64xbf16>, vector<64x64xf32> -> vector<64x64xf32>
    %131 = arith.addf %125, %130 : vector<64x64xf32>
    %c1_143 = arith.constant 1 : index
    %c1_144 = arith.constant 1 : index
    %c0_145 = arith.constant 0 : index
    %132 = vector.load %arg8[%c1_143, %c1_144, %c0_145] : memref<10x10x64xbf16, #tpu.memory_space<vmem>>, vector<8x8x64xbf16>
    %133 = vector.shape_cast %132 : vector<8x8x64xbf16> to vector<64x64xbf16>
    %c4_146 = arith.constant 4 : index
    %c0_147 = arith.constant 0 : index
    %c0_148 = arith.constant 0 : index
    %134 = vector.load %arg3[%c4_146, %c0_147, %c0_148] : memref<9x64x64xbf16, #tpu.memory_space<vmem>>, vector<1x64x64xbf16>
    %135 = vector.shape_cast %134 : vector<1x64x64xbf16> to vector<64x64xbf16>
    %cst_149 = arith.constant dense<0.000000e+00> : vector<64x64xf32>
    %136 = tpu.matmul %133, %135, %cst_149 {dimension_numbers = #tpu.dot_dimension_numbers<[1], [0], [0], [1], [0, 0, 1, 1], [], []>} : vector<64x64xbf16>, vector<64x64xbf16>, vector<64x64xf32> -> vector<64x64xf32>
    %137 = arith.addf %131, %136 : vector<64x64xf32>
    %c1_150 = arith.constant 1 : index
    %c2_151 = arith.constant 2 : index
    %c0_152 = arith.constant 0 : index
    %138 = vector.load %arg8[%c1_150, %c2_151, %c0_152] : memref<10x10x64xbf16, #tpu.memory_space<vmem>>, vector<8x8x64xbf16>
    %139 = vector.shape_cast %138 : vector<8x8x64xbf16> to vector<64x64xbf16>
    %c5_153 = arith.constant 5 : index
    %c0_154 = arith.constant 0 : index
    %c0_155 = arith.constant 0 : index
    %140 = vector.load %arg3[%c5_153, %c0_154, %c0_155] : memref<9x64x64xbf16, #tpu.memory_space<vmem>>, vector<1x64x64xbf16>
    %141 = vector.shape_cast %140 : vector<1x64x64xbf16> to vector<64x64xbf16>
    %cst_156 = arith.constant dense<0.000000e+00> : vector<64x64xf32>
    %142 = tpu.matmul %139, %141, %cst_156 {dimension_numbers = #tpu.dot_dimension_numbers<[1], [0], [0], [1], [0, 0, 1, 1], [], []>} : vector<64x64xbf16>, vector<64x64xbf16>, vector<64x64xf32> -> vector<64x64xf32>
    %143 = arith.addf %137, %142 : vector<64x64xf32>
    %c2_157 = arith.constant 2 : index
    %c0_158 = arith.constant 0 : index
    %c0_159 = arith.constant 0 : index
    %144 = vector.load %arg8[%c2_157, %c0_158, %c0_159] : memref<10x10x64xbf16, #tpu.memory_space<vmem>>, vector<8x8x64xbf16>
    %145 = vector.shape_cast %144 : vector<8x8x64xbf16> to vector<64x64xbf16>
    %c6_160 = arith.constant 6 : index
    %c0_161 = arith.constant 0 : index
    %c0_162 = arith.constant 0 : index
    %146 = vector.load %arg3[%c6_160, %c0_161, %c0_162] : memref<9x64x64xbf16, #tpu.memory_space<vmem>>, vector<1x64x64xbf16>
    %147 = vector.shape_cast %146 : vector<1x64x64xbf16> to vector<64x64xbf16>
    %cst_163 = arith.constant dense<0.000000e+00> : vector<64x64xf32>
    %148 = tpu.matmul %145, %147, %cst_163 {dimension_numbers = #tpu.dot_dimension_numbers<[1], [0], [0], [1], [0, 0, 1, 1], [], []>} : vector<64x64xbf16>, vector<64x64xbf16>, vector<64x64xf32> -> vector<64x64xf32>
    %149 = arith.addf %143, %148 : vector<64x64xf32>
    %c2_164 = arith.constant 2 : index
    %c1_165 = arith.constant 1 : index
    %c0_166 = arith.constant 0 : index
    %150 = vector.load %arg8[%c2_164, %c1_165, %c0_166] : memref<10x10x64xbf16, #tpu.memory_space<vmem>>, vector<8x8x64xbf16>
    %151 = vector.shape_cast %150 : vector<8x8x64xbf16> to vector<64x64xbf16>
    %c7_167 = arith.constant 7 : index
    %c0_168 = arith.constant 0 : index
    %c0_169 = arith.constant 0 : index
    %152 = vector.load %arg3[%c7_167, %c0_168, %c0_169] : memref<9x64x64xbf16, #tpu.memory_space<vmem>>, vector<1x64x64xbf16>
    %153 = vector.shape_cast %152 : vector<1x64x64xbf16> to vector<64x64xbf16>
    %cst_170 = arith.constant dense<0.000000e+00> : vector<64x64xf32>
    %154 = tpu.matmul %151, %153, %cst_170 {dimension_numbers = #tpu.dot_dimension_numbers<[1], [0], [0], [1], [0, 0, 1, 1], [], []>} : vector<64x64xbf16>, vector<64x64xbf16>, vector<64x64xf32> -> vector<64x64xf32>
    %155 = arith.addf %149, %154 : vector<64x64xf32>
    %c2_171 = arith.constant 2 : index
    %c2_172 = arith.constant 2 : index
    %c0_173 = arith.constant 0 : index
    %156 = vector.load %arg8[%c2_171, %c2_172, %c0_173] : memref<10x10x64xbf16, #tpu.memory_space<vmem>>, vector<8x8x64xbf16>
    %157 = vector.shape_cast %156 : vector<8x8x64xbf16> to vector<64x64xbf16>
    %c8_174 = arith.constant 8 : index
    %c0_175 = arith.constant 0 : index
    %c0_176 = arith.constant 0 : index
    %158 = vector.load %arg3[%c8_174, %c0_175, %c0_176] : memref<9x64x64xbf16, #tpu.memory_space<vmem>>, vector<1x64x64xbf16>
    %159 = vector.shape_cast %158 : vector<1x64x64xbf16> to vector<64x64xbf16>
    %cst_177 = arith.constant dense<0.000000e+00> : vector<64x64xf32>
    %160 = tpu.matmul %157, %159, %cst_177 {dimension_numbers = #tpu.dot_dimension_numbers<[1], [0], [0], [1], [0, 0, 1, 1], [], []>} : vector<64x64xbf16>, vector<64x64xbf16>, vector<64x64xf32> -> vector<64x64xf32>
    %161 = arith.addf %155, %160 : vector<64x64xf32>
    %162 = vector.broadcast %3 : vector<1x64xf32> to vector<64x64xf32>
    %163 = arith.addf %161, %162 : vector<64x64xf32>
    %164 = vector.broadcast %4 : vector<1x64xf32> to vector<64x64xf32>
    %165 = arith.mulf %163, %164 : vector<64x64xf32>
    %166 = vector.broadcast %5 : vector<1x64xf32> to vector<64x64xf32>
    %167 = arith.addf %165, %166 : vector<64x64xf32>
    %cst_178 = arith.constant 0.000000e+00 : f32
    %168 = vector.broadcast %cst_178 : f32 to vector<64x64xf32>
    %169 = arith.maximumf %167, %168 : vector<64x64xf32>
    %170 = arith.mulf %88, %169 : vector<64x64xf32>
    %171 = vector.shape_cast %170 : vector<64x64xf32> to vector<1x64x64xf32>
    %c0_179 = arith.constant 0 : index
    %c0_180 = arith.constant 0 : index
    %c0_181 = arith.constant 0 : index
    %172 = vector.load %arg6[%c0_179, %c0_180, %c0_181] : memref<1x64x64xf32, #tpu.memory_space<vmem>>, vector<1x64x64xf32>
    tpu.vector_store %arg6[%c0_179, %c0_180, %c0_181], %171 {strides = array<i32>} : memref<1x64x64xf32, #tpu.memory_space<vmem>>, vector<1x64x64xf32>,
    return
  }
  func.func @transform_0(%arg0: i32) -> (i32, i32, i32, i32) {
    %c0_i32 = arith.constant 0 : i32
    %c0_i32_0 = arith.constant 0 : i32
    %c0_i32_1 = arith.constant 0 : i32
    %c0_i32_2 = arith.constant 0 : i32
    return %arg0, %c0_i32, %c0_i32_0, %c0_i32_1 : i32, i32, i32, i32
  }
  func.func @transform_1(%arg0: i32) -> (i32, i32, i32) {
    %c0_i32 = arith.constant 0 : i32
    %c0_i32_0 = arith.constant 0 : i32
    %c0_i32_1 = arith.constant 0 : i32
    %c0_i32_2 = arith.constant 0 : i32
    return %c0_i32, %c0_i32_0, %c0_i32_1 : i32, i32, i32
  }
  func.func @transform_2(%arg0: i32) -> (i32, i32, i32) {
    %c0_i32 = arith.constant 0 : i32
    %c0_i32_0 = arith.constant 0 : i32
    %c0_i32_1 = arith.constant 0 : i32
    %c0_i32_2 = arith.constant 0 : i32
    return %c0_i32, %c0_i32_0, %c0_i32_1 : i32, i32, i32
  }
  func.func @transform_3(%arg0: i32) -> (i32, i32) {
    %c0_i32 = arith.constant 0 : i32
    %c0_i32_0 = arith.constant 0 : i32
    %c0_i32_1 = arith.constant 0 : i32
    return %c0_i32, %c0_i32_0 : i32, i32
  }
  func.func @transform_4(%arg0: i32) -> (i32, i32) {
    %c0_i32 = arith.constant 0 : i32
    %c0_i32_0 = arith.constant 0 : i32
    %c0_i32_1 = arith.constant 0 : i32
    return %c0_i32, %c0_i32_0 : i32, i32
  }
  func.func @transform_5(%arg0: i32) -> (i32, i32, i32) {
    %c0_i32 = arith.constant 0 : i32
    %c0_i32_0 = arith.constant 0 : i32
    %c0_i32_1 = arith.constant 0 : i32
    return %arg0, %c0_i32, %c0_i32_0 : i32, i32, i32
  }
}

</mosaic_0001>

<llo_original>
// kernel: tpu_custom_call.1
$region0: #{tpu_custom_call.1}
  #allocation0 [shape = 'u32[]', space=smem, size = 0x4, offset = 0x4, fixed_abs, tag = 'smem constant byte address 0x4 - core index']
  #allocation1 [shape = 'u32[144,128]{1,0:T(1,128)}', space=vmem, size = 0x12000, scoped, tag = 'internal scratch']
  #allocation2 [shape = 'bf16[10,10,32]{2,1,0:T(8,128)(2,1)}', space=vmem, size = 0xa000, scoped, tag = 'scratch operand']
  #allocation3 [shape = 'bf16[10,10,64]{2,1,0:T(8,128)(2,1)}', space=vmem, size = 0xa000, scoped, tag = 'scratch operand']
  %s0 = inlined_call_operand.hbm [shape: bf16[2,8,8,32], index: 0, kind: input, shape index: {}]
  %s1 = inlined_call_operand.hbm [shape: bf16[9,32,128], index: 1, kind: input, shape index: {}]
  %s2 = inlined_call_operand.hbm [shape: bf16[9,64,64], index: 2, kind: input, shape index: {}]
  %s3 = inlined_call_operand.hbm [shape: bf16[64,64], index: 3, kind: input, shape index: {}]
  %s4 = inlined_call_operand.vmem [shape: f32[8,64], index: 4, kind: input, shape index: {}]
  %s5 = inlined_call_operand.hbm [shape: f32[2,64,64], index: 5, kind: output, shape index: {}]
  %s6 = sld [smem:[#allocation0]]
  $region69: #{tpu_custom_call.1} parent=0
    _
  %s8 = ssub.s32 1, %s6
  %s9 = scalar_select 0, %s8, %s6
  $region1: #{tpu_custom_call.1} parent=0
    #allocation4 [shape = 'u8[32768]{0}', space=vmem, size = 0x8000, scoped, tag = 'input window, operand 0']
    #allocation5 [shape = 's32[2]{0}', space=sflag, size = 0x8, scoped, tag = 'scoped memory for tpu_custom_call.1']
    #allocation6 [shape = 's32[2]{0}', space=sflag, size = 0x8, scoped, tag = 'scoped memory for tpu_custom_call.1']
    #allocation7 [shape = 'u8[73728]{0}', space=vmem, size = 0x12000, scoped, tag = 'input window, operand 1, single buffered']
    #allocation8 [shape = 's32[1]{0}', space=sflag, size = 0x4, scoped, tag = 'scoped memory for tpu_custom_call.1']
    #allocation9 [shape = 'u8[147456]{0}', space=vmem, size = 0x24000, scoped, tag = 'input window, operand 2, single buffered']
    #allocation10 [shape = 'u8[16384]{0}', space=vmem, size = 0x4000, scoped, tag = 'input window, operand 3, single buffered']
    #allocation11 [shape = 's32[1]{0}', space=sflag, size = 0x4, scoped, tag = 'scoped memory for tpu_custom_call.1']
    #allocation12 [shape = 'u8[65536]{0}', space=vmem, size = 0x10000, scoped, tag = 'output window, operand 0']
    %10 = vsyncpa [#allocation5], 0
    %s11 = scalar_lea.sflag [#allocation5], 1
    %12 = vsyncpa %s11, 0
    %13 = vsyncpa [#allocation8], 0
    %14 = vsyncpa [#allocation11], 0
    %15 = vsyncpa [#allocation6], 0
    %s16 = scalar_lea.sflag [#allocation6], 1
    %17 = vsyncpa %s16, 0
    loop: start=0, step=1, limit=4
    $region2: #{tpu_custom_call.1} parent=1 // loop_pre_header
      _
    $region3: #{tpu_custom_call.1} parent=1 // loop_header
      %s19 = sphi 0, %s23
      %p20 = scmp.ge.s32.totalorder %s19, 4
      %s29 = sphi 0, %s31
      %s32 = sphi 0, %s29
      %s33 = sphi 0, %s32
      %s49 = sphi 0, %s33
      %s53 = sphi 0, %s53
      %s55 = sphi 0, %s53
      %s56 = sphi 0, %s55
      %s70 = sphi 0, %s56
      %s74 = sphi 0, %s74
      %s76 = sphi 0, %s74
      %s77 = sphi 0, %s76
      %s91 = sphi 0, %s77
      %s95 = sphi 0, %s95
      %s97 = sphi 0, %s95
      %s98 = sphi 0, %s97
      %s112 = sphi 0, %s98
      %s116 = sphi 0, %s116
      %s118 = sphi 0, %s116
      %s119 = sphi 0, %s118
      %s133 = sphi 0, %s119
      %s139 = sphi 0, %s141
      %s142 = sphi 0, %s139
      %s143 = sphi 0, %s142
      %s159 = sphi 0, %s143
    $region4: #{tpu_custom_call.1} parent=1 // loop_header_branch
      %22 = sbr.rel (%p20) target = $region8
    $region5: #{tpu_custom_call.1} parent=1 // loop_body
      %s24 = ssub.s32 %s19, 1
      %s25 = ssub.s32 %s19, 2
      %s26 = sadd.s32 %s19, 1
      %s27 = ssub.s32 %s19, %s26
      %p28 = scmp.eq.s32.totalorder %s27, 0
      %s30 = sadd.s32 %s29, 1
      %s31 = scalar_select %p28, %s29, %s30
      %p34 = pneg %p28
      %p35 = scmp.eq.s32.totalorder %s19, 1
      %p36 = por %p34, %p35
      %p37 = scmp.ne.s32.totalorder %s29, %s32
      %p38 = scmp.eq.s32.totalorder %s19, 0
      %p39 = por %p37, %p38
      %p40 = scmp.ne.s32.totalorder %s29, %s32
      %p41 = scmp.eq.s32.totalorder %s24, 1
      %p42 = por %p40, %p41
      %p43 = scmp.ne.s32.totalorder %s32, %s33
      %p44 = scmp.eq.s32.totalorder %s24, 0
      %p45 = por %p43, %p44
      %p46 = scmp.ne.s32.totalorder %s32, %s33
      %p47 = scmp.eq.s32.totalorder %s25, 1
      %p48 = por %p46, %p47
      %p50 = scmp.ne.s32.totalorder %s33, %s49
      %p51 = scmp.eq.s32.totalorder %s25, 0
      %p52 = por %p50, %p51
      %s54 = sadd.s32 %s53, 1
      %p57 = scmp.eq.s32.totalorder %s19, 1
      %p58 = scmp.ne.s32.totalorder %s53, %s55
      %p59 = scmp.eq.s32.totalorder %s19, 0
      %p60 = por %p58, %p59
      %p61 = scmp.ne.s32.totalorder %s53, %s55
      %p62 = scmp.eq.s32.totalorder %s24, 1
      %p63 = por %p61, %p62
      %p64 = scmp.ne.s32.totalorder %s55, %s56
      %p65 = scmp.eq.s32.totalorder %s24, 0
      %p66 = por %p64, %p65
      %p67 = scmp.ne.s32.totalorder %s55, %s56
      %p68 = scmp.eq.s32.totalorder %s25, 1
      %p69 = por %p67, %p68
      %p71 = scmp.ne.s32.totalorder %s56, %s70
      %p72 = scmp.eq.s32.totalorder %s25, 0
      %p73 = por %p71, %p72
      %s75 = sadd.s32 %s74, 1
      %p78 = scmp.eq.s32.totalorder %s19, 1
      %p79 = scmp.ne.s32.totalorder %s74, %s76
      %p80 = scmp.eq.s32.totalorder %s19, 0
      %p81 = por %p79, %p80
      %p82 = scmp.ne.s32.totalorder %s74, %s76
      %p83 = scmp.eq.s32.totalorder %s24, 1
      %p84 = por %p82, %p83
      %p85 = scmp.ne.s32.totalorder %s76, %s77
      %p86 = scmp.eq.s32.totalorder %s24, 0
      %p87 = por %p85, %p86
      %p88 = scmp.ne.s32.totalorder %s76, %s77
      %p89 = scmp.eq.s32.totalorder %s25, 1
      %p90 = por %p88, %p89
      %p92 = scmp.ne.s32.totalorder %s77, %s91
      %p93 = scmp.eq.s32.totalorder %s25, 0
      %p94 = por %p92, %p93
      %s96 = sadd.s32 %s95, 1
      %p99 = scmp.eq.s32.totalorder %s19, 1
      %p100 = scmp.ne.s32.totalorder %s95, %s97
      %p101 = scmp.eq.s32.totalorder %s19, 0
      %p102 = por %p100, %p101
      %p103 = scmp.ne.s32.totalorder %s95, %s97
      %p104 = scmp.eq.s32.totalorder %s24, 1
      %p105 = por %p103, %p104
      %p106 = scmp.ne.s32.totalorder %s97, %s98
      %p107 = scmp.eq.s32.totalorder %s24, 0
      %p108 = por %p106, %p107
      %p109 = scmp.ne.s32.totalorder %s97, %s98
      %p110 = scmp.eq.s32.totalorder %s25, 1
      %p111 = por %p109, %p110
      %p113 = scmp.ne.s32.totalorder %s98, %s112
      %p114 = scmp.eq.s32.totalorder %s25, 0
      %p115 = por %p113, %p114
      %s117 = sadd.s32 %s116, 1
      %p120 = scmp.eq.s32.totalorder %s19, 1
      %p121 = scmp.ne.s32.totalorder %s116, %s118
      %p122 = scmp.eq.s32.totalorder %s19, 0
      %p123 = por %p121, %p122
      %p124 = scmp.ne.s32.totalorder %s116, %s118
      %p125 = scmp.eq.s32.totalorder %s24, 1
      %p126 = por %p124, %p125
      %p127 = scmp.ne.s32.totalorder %s118, %s119
      %p128 = scmp.eq.s32.totalorder %s24, 0
      %p129 = por %p127, %p128
      %p130 = scmp.ne.s32.totalorder %s118, %s119
      %p131 = scmp.eq.s32.totalorder %s25, 1
      %p132 = por %p130, %p131
      %p134 = scmp.ne.s32.totalorder %s119, %s133
      %p135 = scmp.eq.s32.totalorder %s25, 0
      %p136 = por %p134, %p135
      %s137 = ssub.s32 %s19, %s26
      %p138 = scmp.eq.s32.totalorder %s137, 0
      %s140 = sadd.s32 %s139, 1
      %s141 = scalar_select %p138, %s139, %s140
      %p144 = pneg %p138
      %p145 = scmp.eq.s32.totalorder %s19, 1
      %p146 = por %p144, %p145
      %p147 = scmp.ne.s32.totalorder %s139, %s142
      %p148 = scmp.eq.s32.totalorder %s19, 0
      %p149 = por %p147, %p148
      %p150 = scmp.ne.s32.totalorder %s139, %s142
      %p151 = scmp.eq.s32.totalorder %s24, 1
      %p152 = por %p150, %p151
      %p153 = scmp.ne.s32.totalorder %s142, %s143
      %p154 = scmp.eq.s32.totalorder %s24, 0
      %p155 = por %p153, %p154
      %p156 = scmp.ne.s32.totalorder %s142, %s143
      %p157 = scmp.eq.s32.totalorder %s25, 1
      %p158 = por %p156, %p157
      %p160 = scmp.ne.s32.totalorder %s143, %s159
      %p161 = scmp.eq.s32.totalorder %s25, 0
      %p162 = por %p160, %p161
      %p163 = scmp.le.s32.totalorder 1, %s19
      %p164 = scmp.lt.s32.totalorder %s19, 3
      %p165 = pnand %p163, %p164
      %p166 = pneg %p165
      // Predicated region
      $region9: #{tpu_custom_call.1} parent=5 // pred_check
        _
      $region10: #{tpu_custom_call.1} parent=5 // pred_check_branch
        %168 = sbr.rel (%p165) target = $region12
      $region11: #{tpu_custom_call.1} parent=5 // pred_region
        %s169 = ssub.s32 %s19, 1
        // Predicated region
        $region13: #{tpu_custom_call.1} parent=11 // pred_check
          %p170 = pneg %p66
        $region14: #{tpu_custom_call.1} parent=11 // pred_check_branch
          %172 = sbr.rel (%p170) target = $region16
        $region15: #{tpu_custom_call.1} parent=11 // pred_region
          %s174 = ssub.s32 2304, 2304
          %175 = vsyncadd [#allocation8], %s174
          %s176 = sshll.u32 [#allocation7], 4
          %s177 = int_to_ptr.vmem [resolvable:$true] %s176
          %182 = dma.hbm_to_vmem [thread:$0]  %s1, 2304, %s177, [#allocation8], 64, 64, 4
        $region16: #{tpu_custom_call.1} parent=11 // pred_fallthru
          _
        // Predicated region
        $region17: #{tpu_custom_call.1} parent=11 // pred_check
          %p183 = pneg %p87
        $region18: #{tpu_custom_call.1} parent=11 // pred_check_branch
          %185 = sbr.rel (%p183) target = $region20
        $region19: #{tpu_custom_call.1} parent=11 // pred_region
          %s187 = ssub.s32 4608, 4608
          %188 = vsyncadd [#allocation8], %s187
          %s189 = sshll.u32 [#allocation9], 4
          %s190 = int_to_ptr.vmem [resolvable:$true] %s189
          %195 = dma.hbm_to_vmem [thread:$0]  %s2, 4608, %s190, [#allocation8], 64, 64, 4
        $region20: #{tpu_custom_call.1} parent=11 // pred_fallthru
          _
        // Predicated region
        $region21: #{tpu_custom_call.1} parent=11 // pred_check
          %p196 = pneg %p108
        $region22: #{tpu_custom_call.1} parent=11 // pred_check_branch
          %198 = sbr.rel (%p196) target = $region24
        $region23: #{tpu_custom_call.1} parent=11 // pred_region
          %s200 = ssub.s32 512, 512
          %201 = vsyncadd [#allocation11], %s200
          %s202 = sshll.u32 [#allocation10], 4
          %s203 = int_to_ptr.vmem [resolvable:$true] %s202
          %208 = dma.hbm_to_vmem [thread:$0]  %s3, 512, %s203, [#allocation11], 64, 64, 4
        $region24: #{tpu_custom_call.1} parent=11 // pred_fallthru
          _
        // Predicated region
        $region25: #{tpu_custom_call.1} parent=11 // pred_check
          %p209 = pneg %p129
        $region26: #{tpu_custom_call.1} parent=11 // pred_check_branch
          %211 = sbr.rel (%p209) target = $region28
        $region27: #{tpu_custom_call.1} parent=11 // pred_region
          _
        $region28: #{tpu_custom_call.1} parent=11 // pred_fallthru
          _
      $region12: #{tpu_custom_call.1} parent=5 // pred_fallthru
        _
      %p212 = scmp.lt.s32.totalorder %s19, 2
      // Predicated region
      $region29: #{tpu_custom_call.1} parent=5 // pred_check
        %p213 = pneg %p212
      $region30: #{tpu_custom_call.1} parent=5 // pred_check_branch
        %215 = sbr.rel (%p213) target = $region32
      $region31: #{tpu_custom_call.1} parent=5 // pred_region
        // Predicated region
        $region33: #{tpu_custom_call.1} parent=31 // pred_check
          %p216 = pneg %p39
        $region34: #{tpu_custom_call.1} parent=31 // pred_check_branch
          %218 = sbr.rel (%p216) target = $region36
        $region35: #{tpu_custom_call.1} parent=31 // pred_region
          %s219 = sand.u32 %s29, 1
          %s220 = scalar_lea.sflag [#allocation5], %s219
          %s221 = sand.u32 %s29, 1
          %s222 = smul.addr %s221, 32
          %s223 = scalar_lea.vmem [#allocation4], %s222
          %s225 = ssub.s32 512, 512
          %226 = vsyncadd %s220, %s225
          %s227 = smul.addr %s19, 8
          %s228 = smul.addr %s227, 64
          %s229 = scalar_lea.hbm %s0, %s228
          %s230 = sshll.u32 %s223, 4
          %s231 = int_to_ptr.vmem [resolvable:$true] %s230
          %236 = dma.hbm_to_vmem [thread:$0]  %s229, 512, %s231, %s220, 64, 64, 4
        $region36: #{tpu_custom_call.1} parent=31 // pred_fallthru
          _
      $region32: #{tpu_custom_call.1} parent=5 // pred_fallthru
        _
      %p237 = scmp.le.s32.totalorder 1, %s19
      %p238 = scmp.lt.s32.totalorder %s19, 3
      %p239 = pnand %p237, %p238
      %p240 = pneg %p239
      // Predicated region
      $region37: #{tpu_custom_call.1} parent=5 // pred_check
        _
      $region38: #{tpu_custom_call.1} parent=5 // pred_check_branch
        %242 = sbr.rel (%p239) target = $region40
      $region39: #{tpu_custom_call.1} parent=5 // pred_region
        %s243 = ssub.s32 %s19, 1
        %s244 = sand.u32 %s32, 1
        %s245 = scalar_lea.sflag [#allocation5], %s244
        %s246 = sand.u32 %s32, 1
        %s247 = smul.addr %s246, 32
        %s248 = scalar_lea.vmem [#allocation4], %s247
        // Predicated region
        $region41: #{tpu_custom_call.1} parent=39 // pred_check
          %p249 = pneg %p45
        $region42: #{tpu_custom_call.1} parent=39 // pred_check_branch
          %251 = sbr.rel (%p249) target = $region44
        $region43: #{tpu_custom_call.1} parent=39 // pred_region
          %252 = dma.done %s245, 512
        $region44: #{tpu_custom_call.1} parent=39 // pred_fallthru
          _
        // Predicated region
        $region45: #{tpu_custom_call.1} parent=39 // pred_check
          %p253 = pneg %p66
        $region46: #{tpu_custom_call.1} parent=39 // pred_check_branch
          %255 = sbr.rel (%p253) target = $region48
        $region47: #{tpu_custom_call.1} parent=39 // pred_region
          %256 = dma.done [#allocation8], 2304
        $region48: #{tpu_custom_call.1} parent=39 // pred_fallthru
          _
        // Predicated region
        $region49: #{tpu_custom_call.1} parent=39 // pred_check
          %p257 = pneg %p87
        $region50: #{tpu_custom_call.1} parent=39 // pred_check_branch
          %259 = sbr.rel (%p257) target = $region52
        $region51: #{tpu_custom_call.1} parent=39 // pred_region
          %260 = dma.done [#allocation8], 4608
        $region52: #{tpu_custom_call.1} parent=39 // pred_fallthru
          _
        // Predicated region
        $region53: #{tpu_custom_call.1} parent=39 // pred_check
          %p261 = pneg %p108
        $region54: #{tpu_custom_call.1} parent=39 // pred_check_branch
          %263 = sbr.rel (%p261) target = $region56
        $region55: #{tpu_custom_call.1} parent=39 // pred_region
          %264 = dma.done [#allocation11], 512
        $region56: #{tpu_custom_call.1} parent=39 // pred_fallthru
          _
        %s265 = sand.u32 %s32, 1
        %s266 = scalar_lea.sflag [#allocation5], %s265
        %s267 = sand.u32 %s32, 1
        %s268 = smul.addr %s267, 32
        %s269 = scalar_lea.vmem [#allocation4], %s268
        %p270 = pneg %p45
        %p271 = pneg %p42
        %p272 = pneg %p66
        %p273 = pneg %p63
        %p274 = pneg %p87
        %p275 = pneg %p84
        %p276 = pneg %p108
        %p277 = pneg %p105
        %p278 = pneg %p129
        %p279 = pneg %p126
        %p280 = pneg %p155
        %p281 = pneg %p152
        %s282 = sand.u32 %s142, 1
        %s283 = scalar_lea.sflag [#allocation6], %s282
        %s284 = sand.u32 %s142, 1
        %s285 = smul.addr %s284, 64
        %s286 = scalar_lea.vmem [#allocation12], %s285
        %v288 = vld [vmem:[%s4] sm:$0x1]
        %v289 = vld [vmem:[%s4 + $0x1] sm:$0x1]
        %v290 = vld [vmem:[%s4 + $0x2] sm:$0x1]
        %v291 = vld [vmem:[%s4 + $0x3] sm:$0x1]
        %v292 = vld [vmem:[%s4 + $0x4] sm:$0x1]
        %v293 = vld [vmem:[%s4 + $0x5] sm:$0x1]
        %v294 = vld [vmem:[%s4 + $0x6] sm:$0x1]
        %v295 = vld [vmem:[%s4 + $0x7] sm:$0x1]
        %v296 = vld [vmem:[%s248] sm:$0xf]
        %v297 = vld [vmem:[%s248 + $0x4] sm:$0xf]
        %v298 = vld [vmem:[%s248 + $0x8] sm:$0xf]
        %v299 = vld [vmem:[%s248 + $0xc] sm:$0xf]
        %v300 = vld [vmem:[%s248 + $0x10] sm:$0xf]
        %v301 = vld [vmem:[%s248 + $0x14] sm:$0xf]
        %v302 = vld [vmem:[%s248 + $0x18] sm:$0xf]
        %v303 = vld [vmem:[%s248 + $0x1c] sm:$0xf]
        %vm304 = vcmask 257024
        %305 = vst.msk [vmem:[#allocation2] sm:$0xf] %vm304, 0
        %vm306 = vcmask 253952
        %307 = vst.msk [vmem:[#allocation2 + $0x4] sm:$0x1] %vm306, 0
        %s308 = scalar_lea.vmem [#allocation2], 72
        %309 = vst.msk [vmem:[%s308] sm:$0xf] %vm304, 0
        %310 = vst.msk [vmem:[%s308 + $0x4] sm:$0x1] %vm306, 0
        %s311 = scalar_lea.vmem [#allocation2], 8
        %vm312 = vcmask 253952
        %vm313 = vsmask.f32 256
        %vm314 = vmand %vm312, %vm313
        %v315 = vld [vmem:[%s311] sm:$0x1]
        %v316 = vsel %vm314, 0, %v315
        %317 = vst [vmem:[%s311] sm:$0x1] %v316
        %v318 = vld [vmem:[%s311 + $0x8] sm:$0x1]
        %v319 = vsel %vm314, 0, %v318
        %320 = vst [vmem:[%s311 + $0x8] sm:$0x1] %v319
        %v321 = vld [vmem:[%s311 + $0x10] sm:$0x1]
        %v322 = vsel %vm314, 0, %v321
        %323 = vst [vmem:[%s311 + $0x10] sm:$0x1] %v322
        %v324 = vld [vmem:[%s311 + $0x18] sm:$0x1]
        %v325 = vsel %vm314, 0, %v324
        %326 = vst [vmem:[%s311 + $0x18] sm:$0x1] %v325
        %v327 = vld [vmem:[%s311 + $0x20] sm:$0x1]
        %v328 = vsel %vm314, 0, %v327
        %329 = vst [vmem:[%s311 + $0x20] sm:$0x1] %v328
        %v330 = vld [vmem:[%s311 + $0x28] sm:$0x1]
        %v331 = vsel %vm314, 0, %v330
        %332 = vst [vmem:[%s311 + $0x28] sm:$0x1] %v331
        %v333 = vld [vmem:[%s311 + $0x30] sm:$0x1]
        %v334 = vsel %vm314, 0, %v333
        %335 = vst [vmem:[%s311 + $0x30] sm:$0x1] %v334
        %v336 = vld [vmem:[%s311 + $0x38] sm:$0x1]
        %v337 = vsel %vm314, 0, %v336
        %338 = vst [vmem:[%s311 + $0x38] sm:$0x1] %v337
        %vm339 = vsmask.f32 7938
        %vm340 = vmand %vm312, %vm339
        %v341 = vld [vmem:[%s311 + $0x4] sm:$0x1]
        %v342 = vsel %vm340, 0, %v341
        %343 = vst [vmem:[%s311 + $0x4] sm:$0x1] %v342
        %v344 = vld [vmem:[%s311 + $0xc] sm:$0x1]
        %v345 = vsel %vm340, 0, %v344
        %346 = vst [vmem:[%s311 + $0xc] sm:$0x1] %v345
        %v347 = vld [vmem:[%s311 + $0x14] sm:$0x1]
        %v348 = vsel %vm340, 0, %v347
        %349 = vst [vmem:[%s311 + $0x14] sm:$0x1] %v348
        %v350 = vld [vmem:[%s311 + $0x1c] sm:$0x1]
        %v351 = vsel %vm340, 0, %v350
        %352 = vst [vmem:[%s311 + $0x1c] sm:$0x1] %v351
        %v353 = vld [vmem:[%s311 + $0x24] sm:$0x1]
        %v354 = vsel %vm340, 0, %v353
        %355 = vst [vmem:[%s311 + $0x24] sm:$0x1] %v354
        %v356 = vld [vmem:[%s311 + $0x2c] sm:$0x1]
        %v357 = vsel %vm340, 0, %v356
        %358 = vst [vmem:[%s311 + $0x2c] sm:$0x1] %v357
        %v359 = vld [vmem:[%s311 + $0x34] sm:$0x1]
        %v360 = vsel %vm340, 0, %v359
        %361 = vst [vmem:[%s311 + $0x34] sm:$0x1] %v360
        %v362 = vld [vmem:[%s311 + $0x3c] sm:$0x1]
        %v363 = vsel %vm340, 0, %v362
        %364 = vst [vmem:[%s311 + $0x3c] sm:$0x1] %v363
        %v366 = vshrl.u32 %v296, 16
        %v368 = vrot.slane %v366, 7
        %v369 = vshll.u32 %v296, 16
        %v371 = vor.u32 %v368, %v369
        %v372 = vrot.slane %v368, 4
        %v374 = vshrl.u32 %v297, 16
        %v376 = vrot.slane %v374, 7
        %v377 = vshll.u32 %v297, 16
        %v379 = vor.u32 %v376, %v377
        %v380 = vrot.slane %v376, 4
        %v382 = vshrl.u32 %v298, 16
        %v384 = vrot.slane %v382, 7
        %v385 = vshll.u32 %v298, 16
        %v387 = vor.u32 %v384, %v385
        %v388 = vrot.slane %v384, 4
        %v390 = vshrl.u32 %v299, 16
        %v392 = vrot.slane %v390, 7
        %v393 = vshll.u32 %v299, 16
        %v395 = vor.u32 %v392, %v393
        %v396 = vrot.slane %v392, 4
        %v398 = vshrl.u32 %v300, 16
        %v400 = vrot.slane %v398, 7
        %v401 = vshll.u32 %v300, 16
        %v403 = vor.u32 %v400, %v401
        %v404 = vrot.slane %v400, 4
        %v406 = vshrl.u32 %v301, 16
        %v408 = vrot.slane %v406, 7
        %v409 = vshll.u32 %v301, 16
        %v411 = vor.u32 %v408, %v409
        %v412 = vrot.slane %v408, 4
        %v414 = vshrl.u32 %v302, 16
        %v416 = vrot.slane %v414, 7
        %v417 = vshll.u32 %v302, 16
        %v419 = vor.u32 %v416, %v417
        %v420 = vrot.slane %v416, 4
        %v422 = vshrl.u32 %v303, 16
        %v424 = vrot.slane %v422, 7
        %v425 = vshll.u32 %v303, 16
        %v427 = vor.u32 %v424, %v425
        %v428 = vrot.slane %v424, 4
        %vm445 = vcmask 257024
        %vm446 = vmand %vm445, %vm339
        %v447 = vld [vmem:[%s311] sm:$0xf]
        %v448 = vsel %vm446, %v371, %v447
        %449 = vst [vmem:[%s311] sm:$0xf] %v448
        %v450 = vld [vmem:[%s311 + $0x4] sm:$0x1]
        %v451 = vsel %vm314, %v372, %v450
        %452 = vst [vmem:[%s311 + $0x4] sm:$0x1] %v451
        %v453 = vld [vmem:[%s311 + $0x8] sm:$0xf]
        %v454 = vsel %vm446, %v379, %v453
        %455 = vst [vmem:[%s311 + $0x8] sm:$0xf] %v454
        %v456 = vld [vmem:[%s311 + $0xc] sm:$0x1]
        %v457 = vsel %vm314, %v380, %v456
        %458 = vst [vmem:[%s311 + $0xc] sm:$0x1] %v457
        %v459 = vld [vmem:[%s311 + $0x10] sm:$0xf]
        %v460 = vsel %vm446, %v387, %v459
        %461 = vst [vmem:[%s311 + $0x10] sm:$0xf] %v460
        %v462 = vld [vmem:[%s311 + $0x14] sm:$0x1]
        %v463 = vsel %vm314, %v388, %v462
        %464 = vst [vmem:[%s311 + $0x14] sm:$0x1] %v463
        %v465 = vld [vmem:[%s311 + $0x18] sm:$0xf]
        %v466 = vsel %vm446, %v395, %v465
        %467 = vst [vmem:[%s311 + $0x18] sm:$0xf] %v466
        %v468 = vld [vmem:[%s311 + $0x1c] sm:$0x1]
        %v469 = vsel %vm314, %v396, %v468
        %470 = vst [vmem:[%s311 + $0x1c] sm:$0x1] %v469
        %v471 = vld [vmem:[%s311 + $0x20] sm:$0xf]
        %v472 = vsel %vm446, %v403, %v471
        %473 = vst [vmem:[%s311 + $0x20] sm:$0xf] %v472
        %v474 = vld [vmem:[%s311 + $0x24] sm:$0x1]
        %v475 = vsel %vm314, %v404, %v474
        %476 = vst [vmem:[%s311 + $0x24] sm:$0x1] %v475
        %v477 = vld [vmem:[%s311 + $0x28] sm:$0xf]
        %v478 = vsel %vm446, %v411, %v477
        %479 = vst [vmem:[%s311 + $0x28] sm:$0xf] %v478
        %v480 = vld [vmem:[%s311 + $0x2c] sm:$0x1]
        %v481 = vsel %vm314, %v412, %v480
        %482 = vst [vmem:[%s311 + $0x2c] sm:$0x1] %v481
        %v483 = vld [vmem:[%s311 + $0x30] sm:$0xf]
        %v484 = vsel %vm446, %v419, %v483
        %485 = vst [vmem:[%s311 + $0x30] sm:$0xf] %v484
        %v486 = vld [vmem:[%s311 + $0x34] sm:$0x1]
        %v487 = vsel %vm314, %v420, %v486
        %488 = vst [vmem:[%s311 + $0x34] sm:$0x1] %v487
        %v489 = vld [vmem:[%s311 + $0x38] sm:$0xf]
        %v490 = vsel %vm446, %v427, %v489
        %491 = vst [vmem:[%s311 + $0x38] sm:$0xf] %v490
        %v492 = vld [vmem:[%s311 + $0x3c] sm:$0x1]
        %v493 = vsel %vm314, %v428, %v492
        %494 = vst [vmem:[%s311 + $0x3c] sm:$0x1] %v493
        %v495 = vld [vmem:[#allocation2] sm:$0xf]
        %v496 = vld [vmem:[#allocation2 + $0x8] sm:$0xf]
        %v497 = vld [vmem:[#allocation2 + $0x10] sm:$0xf]
        %v498 = vld [vmem:[#allocation2 + $0x18] sm:$0xf]
        %v499 = vld [vmem:[#allocation2 + $0x20] sm:$0xf]
        %v500 = vld [vmem:[#allocation2 + $0x28] sm:$0xf]
        %v501 = vld [vmem:[#allocation2 + $0x30] sm:$0xf]
        %v502 = vld [vmem:[#allocation2 + $0x38] sm:$0xf]
        %v503 = vld [vmem:[#allocation7] sm:$0xf]
        %v504 = vld [vmem:[#allocation7 + $0x4] sm:$0xf]
        %v505 = vld [vmem:[#allocation7 + $0x8] sm:$0xf]
        %v506 = vld [vmem:[#allocation7 + $0xc] sm:$0xf]
        %v507 = vld [vmem:[#allocation2 + $0x4] sm:$0x1]
        %v508 = vld [vmem:[#allocation2 + $0xc] sm:$0x1]
        %v509 = vld [vmem:[#allocation2 + $0x14] sm:$0x1]
        %v510 = vld [vmem:[#allocation2 + $0x1c] sm:$0x1]
        %v511 = vld [vmem:[#allocation2 + $0x24] sm:$0x1]
        %v512 = vld [vmem:[#allocation2 + $0x2c] sm:$0x1]
        %v513 = vld [vmem:[#allocation2 + $0x34] sm:$0x1]
        %v514 = vld [vmem:[#allocation2 + $0x3c] sm:$0x1]
        %vm515 = vsmask.f32 3328
        %vm516 = vsmask.f32 7440
        %vm517 = vmor %vm515, %vm516
        %v519 = vshrl.u32 %v495, 16
        %v521 = vrot.slane %v519, 4
        %v522 = vshll.u32 %v495, 16
        %v524 = vrot.slane %v522, 5
        %v525 = vor.u32 %v521, %v524
        %v526 = vrot.slane %v525, 4
        %v528 = vshll.u32 %v507, 16
        %v530 = vrot.slane %v528, 5
        %v531 = vsel %vm517, %v526, %v530
        %v533 = vshrl.u32 %v496, 16
        %v535 = vrot.slane %v533, 4
        %v536 = vshll.u32 %v496, 16
        %v538 = vrot.slane %v536, 5
        %v539 = vor.u32 %v535, %v538
        %v540 = vrot.slane %v539, 4
        %v542 = vshll.u32 %v508, 16
        %v544 = vrot.slane %v542, 5
        %v545 = vsel %vm517, %v540, %v544
        %v547 = vshrl.u32 %v497, 16
        %v549 = vrot.slane %v547, 4
        %v550 = vshll.u32 %v497, 16
        %v552 = vrot.slane %v550, 5
        %v553 = vor.u32 %v549, %v552
        %v554 = vrot.slane %v553, 4
        %v556 = vshll.u32 %v509, 16
        %v558 = vrot.slane %v556, 5
        %v559 = vsel %vm517, %v554, %v558
        %v561 = vshrl.u32 %v498, 16
        %v563 = vrot.slane %v561, 4
        %v564 = vshll.u32 %v498, 16
        %v566 = vrot.slane %v564, 5
        %v567 = vor.u32 %v563, %v566
        %v568 = vrot.slane %v567, 4
        %v570 = vshll.u32 %v510, 16
        %v572 = vrot.slane %v570, 5
        %v573 = vsel %vm517, %v568, %v572
        %v575 = vshrl.u32 %v499, 16
        %v577 = vrot.slane %v575, 4
        %v578 = vshll.u32 %v499, 16
        %v580 = vrot.slane %v578, 5
        %v581 = vor.u32 %v577, %v580
        %v582 = vrot.slane %v581, 4
        %v584 = vshll.u32 %v511, 16
        %v586 = vrot.slane %v584, 5
        %v587 = vsel %vm517, %v582, %v586
        %v589 = vshrl.u32 %v500, 16
        %v591 = vrot.slane %v589, 4
        %v592 = vshll.u32 %v500, 16
        %v594 = vrot.slane %v592, 5
        %v595 = vor.u32 %v591, %v594
        %v596 = vrot.slane %v595, 4
        %v598 = vshll.u32 %v512, 16
        %v600 = vrot.slane %v598, 5
        %v601 = vsel %vm517, %v596, %v600
        %v603 = vshrl.u32 %v501, 16
        %v605 = vrot.slane %v603, 4
        %v606 = vshll.u32 %v501, 16
        %v608 = vrot.slane %v606, 5
        %v609 = vor.u32 %v605, %v608
        %v610 = vrot.slane %v609, 4
        %v612 = vshll.u32 %v513, 16
        %v614 = vrot.slane %v612, 5
        %v615 = vsel %vm517, %v610, %v614
        %v617 = vshrl.u32 %v502, 16
        %v619 = vrot.slane %v617, 4
        %v620 = vshll.u32 %v502, 16
        %v622 = vrot.slane %v620, 5
        %v623 = vor.u32 %v619, %v622
        %v624 = vrot.slane %v623, 4
        %v626 = vshll.u32 %v514, 16
        %v628 = vrot.slane %v626, 5
        %v629 = vsel %vm517, %v624, %v628
        %s630 = scalar_lea.vmem [#allocation7], 16
        %v631 = vld [vmem:[%s630] sm:$0xf]
        %v632 = vld [vmem:[%s630 + $0x4] sm:$0xf]
        %v633 = vld [vmem:[%s630 + $0x8] sm:$0xf]
        %v634 = vld [vmem:[%s630 + $0xc] sm:$0xf]
        %v635 = vunpack.c.l.b16 %v531
        %v636 = vunpack.c.l.b16 %v545
        %v637 = vunpack.c.l.b16 %v559
        %v638 = vunpack.c.l.b16 %v573
        %v639 = vunpack.c.l.b16 %v587
        %v640 = vunpack.c.l.b16 %v601
        %v641 = vunpack.c.l.b16 %v615
        %v642 = vunpack.c.l.b16 %v629
        %v643 = vpack.c.b16 %v636, %v635
        %v644 = vpack.c.b16 %v638, %v637
        %v645 = vpack.c.b16 %v640, %v639
        %v646 = vpack.c.b16 %v642, %v641
        %v651 = vunpack.c.l.b16 %v631
        %v652 = vunpack.c.l.b16 %v632
        %v653 = vunpack.c.l.b16 %v633
        %v654 = vunpack.c.l.b16 %v634
        %v655 = vpack.c.b16 %v652, %v651
        %v656 = vpack.c.b16 %v654, %v653
        %vm659 = vcmask 261120
        %v661 = vsel %vm659, %v643, 0
        %v664 = vsel %vm659, %v644, 0
        %v667 = vsel %vm659, %v645, 0
        %v670 = vsel %vm659, %v646, 0
        %672 = vmatprep.subr.bf16.mxu0 0
        %673 = vmatpush1.bf16.msra.mxu0 %v655
        %674 = vmatprep.subr.bf16.mxu0 0
        %675 = vmatpush1.bf16.msra.mxu0 %v656
        %676 = vmatprep.subr.bf16.mxu0 0
        %677 = vmatpush1.bf16.msra.mxu0 0
        %678 = vmatprep.subr.bf16.mxu0 0
        %679 = vmatpush1.bf16.msra.mxu0 0
        %680 = vmatprep.subr.bf16.mxu0 0
        %681 = vmatpush1.bf16.msra.mxu0 0
        %682 = vmatprep.subr.bf16.mxu0 0
        %683 = vmatpush1.bf16.msra.mxu0 0
        %684 = vmatprep.subr.bf16.mxu0 0
        %685 = vmatpush1.bf16.msra.mxu0 0
        %686 = vmatprep.subr.bf16.mxu0 0
        %687 = vmatpush1.bf16.msra.mxu0 0
        %688 = vmatprep.subr.bf16.mxu0 0
        %689 = vmatpush1.bf16.msra.mxu0 0
        %690 = vmatprep.subr.bf16.mxu0 0
        %691 = vmatpush1.bf16.msra.mxu0 0
        %692 = vmatprep.subr.bf16.mxu0 0
        %693 = vmatpush1.bf16.msra.mxu0 0
        %694 = vmatprep.subr.bf16.mxu0 0
        %695 = vmatpush1.bf16.msra.mxu0 0
        %696 = vmatprep.subr.bf16.mxu0 0
        %697 = vmatpush1.bf16.msra.mxu0 0
        %698 = vmatprep.subr.bf16.mxu0 0
        %699 = vmatpush1.bf16.msra.mxu0 0
        %700 = vmatprep.subr.bf16.mxu0 0
        %701 = vmatpush1.bf16.msra.mxu0 0
        %702 = vmatprep.subr.bf16.mxu0 0
        %703 = vmatpush1.bf16.msra.mxu0 0
        %704 = vmatprep.mubr.bf16.mxu0 0
        %705 = vmatmul.mubr.bf16.gmra.mrb[0].mxu0 %v661
        %v706 = vpop.f32.mrb[0].mxu0
        %v707 = vadd.f32 0.0, %v706
        %v708 = vpop.f32.mrb[0].mxu0
        %v709 = vpop.f32.mrb[0].mxu0
        %v710 = vadd.f32 0.0, %v709
        %v711 = vpop.f32.mrb[0].mxu0
        %712 = vmatprep.mubr.bf16.mxu0 0
        %713 = vmatmul.mubr.bf16.gmra.mrb[0].mxu0 %v664
        %v714 = vpop.f32.mrb[0].mxu0
        %v715 = vadd.f32 0.0, %v714
        %v716 = vpop.f32.mrb[0].mxu0
        %v717 = vpop.f32.mrb[0].mxu0
        %v718 = vadd.f32 0.0, %v717
        %v719 = vpop.f32.mrb[0].mxu0
        %720 = vmatprep.mubr.bf16.mxu0 0
        %721 = vmatmul.mubr.bf16.gmra.mrb[0].mxu0 %v667
        %v722 = vpop.f32.mrb[0].mxu0
        %v723 = vadd.f32 0.0, %v722
        %v724 = vpop.f32.mrb[0].mxu0
        %v725 = vpop.f32.mrb[0].mxu0
        %v726 = vadd.f32 0.0, %v725
        %v727 = vpop.f32.mrb[0].mxu0
        %728 = vmatprep.mubr.bf16.mxu0 0
        %729 = vmatmul.mubr.bf16.gmra.mrb[0].mxu0 %v670
        %v730 = vpop.f32.mrb[0].mxu0
        %v731 = vadd.f32 0.0, %v730
        %v732 = vpop.f32.mrb[0].mxu0
        %v733 = vpop.f32.mrb[0].mxu0
        %v734 = vadd.f32 0.0, %v733
        %v735 = vpop.f32.mrb[0].mxu0
        %736 = vdwg.mxu0
        %v745 = vunpack.c.l.b16 %v495
        %v746 = vunpack.c.l.b16 %v496
        %v747 = vunpack.c.l.b16 %v497
        %v748 = vunpack.c.l.b16 %v498
        %v749 = vunpack.c.l.b16 %v499
        %v750 = vunpack.c.l.b16 %v500
        %v751 = vunpack.c.l.b16 %v501
        %v752 = vunpack.c.l.b16 %v502
        %v753 = vpack.c.b16 %v746, %v745
        %v754 = vpack.c.b16 %v748, %v747
        %v755 = vpack.c.b16 %v750, %v749
        %v756 = vpack.c.b16 %v752, %v751
        %v761 = vunpack.c.l.b16 %v503
        %v762 = vunpack.c.l.b16 %v504
        %v763 = vunpack.c.l.b16 %v505
        %v764 = vunpack.c.l.b16 %v506
        %v765 = vpack.c.b16 %v762, %v761
        %v766 = vpack.c.b16 %v764, %v763
        %v770 = vsel %vm659, %v753, 0
        %v773 = vsel %vm659, %v754, 0
        %v776 = vsel %vm659, %v755, 0
        %v779 = vsel %vm659, %v756, 0
        %781 = vmatprep.subr.bf16.mxu0 0
        %782 = vmatpush1.bf16.msra.mxu0 %v765
        %783 = vmatprep.subr.bf16.mxu0 0
        %784 = vmatpush1.bf16.msra.mxu0 %v766
        %785 = vmatprep.subr.bf16.mxu0 0
        %786 = vmatpush1.bf16.msra.mxu0 0
        %787 = vmatprep.subr.bf16.mxu0 0
        %788 = vmatpush1.bf16.msra.mxu0 0
        %789 = vmatprep.subr.bf16.mxu0 0
        %790 = vmatpush1.bf16.msra.mxu0 0
        %791 = vmatprep.subr.bf16.mxu0 0
        %792 = vmatpush1.bf16.msra.mxu0 0
        %793 = vmatprep.subr.bf16.mxu0 0
        %794 = vmatpush1.bf16.msra.mxu0 0
        %795 = vmatprep.subr.bf16.mxu0 0
        %796 = vmatpush1.bf16.msra.mxu0 0
        %797 = vmatprep.subr.bf16.mxu0 0
        %798 = vmatpush1.bf16.msra.mxu0 0
        %799 = vmatprep.subr.bf16.mxu0 0
        %800 = vmatpush1.bf16.msra.mxu0 0
        %801 = vmatprep.subr.bf16.mxu0 0
        %802 = vmatpush1.bf16.msra.mxu0 0
        %803 = vmatprep.subr.bf16.mxu0 0
        %804 = vmatpush1.bf16.msra.mxu0 0
        %805 = vmatprep.subr.bf16.mxu0 0
        %806 = vmatpush1.bf16.msra.mxu0 0
        %807 = vmatprep.subr.bf16.mxu0 0
        %808 = vmatpush1.bf16.msra.mxu0 0
        %809 = vmatprep.subr.bf16.mxu0 0
        %810 = vmatpush1.bf16.msra.mxu0 0
        %811 = vmatprep.subr.bf16.mxu0 0
        %812 = vmatpush1.bf16.msra.mxu0 0
        %813 = vmatprep.mubr.bf16.mxu0 0
        %814 = vmatmul.mubr.bf16.gmra.mrb[0].mxu0 %v770
        %v815 = vpop.f32.mrb[0].mxu0
        %v816 = vadd.f32 %v707, %v815
        %v817 = vpop.f32.mrb[0].mxu0
        %v818 = vpop.f32.mrb[0].mxu0
        %v819 = vadd.f32 %v710, %v818
        %v820 = vpop.f32.mrb[0].mxu0
        %821 = vmatprep.mubr.bf16.mxu0 0
        %822 = vmatmul.mubr.bf16.gmra.mrb[0].mxu0 %v773
        %v823 = vpop.f32.mrb[0].mxu0
        %v824 = vadd.f32 %v715, %v823
        %v825 = vpop.f32.mrb[0].mxu0
        %v826 = vpop.f32.mrb[0].mxu0
        %v827 = vadd.f32 %v718, %v826
        %v828 = vpop.f32.mrb[0].mxu0
        %829 = vmatprep.mubr.bf16.mxu0 0
        %830 = vmatmul.mubr.bf16.gmra.mrb[0].mxu0 %v776
        %v831 = vpop.f32.mrb[0].mxu0
        %v832 = vadd.f32 %v723, %v831
        %v833 = vpop.f32.mrb[0].mxu0
        %v834 = vpop.f32.mrb[0].mxu0
        %v835 = vadd.f32 %v726, %v834
        %v836 = vpop.f32.mrb[0].mxu0
        %837 = vmatprep.mubr.bf16.mxu0 0
        %838 = vmatmul.mubr.bf16.gmra.mrb[0].mxu0 %v779
        %v839 = vpop.f32.mrb[0].mxu0
        %v840 = vadd.f32 %v731, %v839
        %v841 = vpop.f32.mrb[0].mxu0
        %v842 = vpop.f32.mrb[0].mxu0
        %v843 = vadd.f32 %v734, %v842
        %v844 = vpop.f32.mrb[0].mxu0
        %845 = vdwg.mxu0
        %v846 = vld [vmem:[#allocation2] sm:$0xe]
        %v847 = vld [vmem:[#allocation2 + $0x8] sm:$0xe]
        %v848 = vld [vmem:[#allocation2 + $0x10] sm:$0xe]
        %v849 = vld [vmem:[#allocation2 + $0x18] sm:$0xe]
        %v850 = vld [vmem:[#allocation2 + $0x20] sm:$0xe]
        %v851 = vld [vmem:[#allocation2 + $0x28] sm:$0xe]
        %v852 = vld [vmem:[#allocation2 + $0x30] sm:$0xe]
        %v853 = vld [vmem:[#allocation2 + $0x38] sm:$0xe]
        %vm870 = vcmask 1042432
        %vm871 = vcmask 1046532
        %vm872 = vmor %vm870, %vm871
        %v873 = vrot.slane %v846, 5
        %v874 = vrot.slane %v873, 4
        %v875 = vrot.slane %v507, 5
        %v876 = vsel %vm872, %v874, %v875
        %v877 = vrot.slane %v847, 5
        %v878 = vrot.slane %v877, 4
        %v879 = vrot.slane %v508, 5
        %v880 = vsel %vm872, %v878, %v879
        %v881 = vrot.slane %v848, 5
        %v882 = vrot.slane %v881, 4
        %v883 = vrot.slane %v509, 5
        %v884 = vsel %vm872, %v882, %v883
        %v885 = vrot.slane %v849, 5
        %v886 = vrot.slane %v885, 4
        %v887 = vrot.slane %v510, 5
        %v888 = vsel %vm872, %v886, %v887
        %v889 = vrot.slane %v850, 5
        %v890 = vrot.slane %v889, 4
        %v891 = vrot.slane %v511, 5
        %v892 = vsel %vm872, %v890, %v891
        %v893 = vrot.slane %v851, 5
        %v894 = vrot.slane %v893, 4
        %v895 = vrot.slane %v512, 5
        %v896 = vsel %vm872, %v894, %v895
        %v897 = vrot.slane %v852, 5
        %v898 = vrot.slane %v897, 4
        %v899 = vrot.slane %v513, 5
        %v900 = vsel %vm872, %v898, %v899
        %v901 = vrot.slane %v853, 5
        %v902 = vrot.slane %v901, 4
        %v903 = vrot.slane %v514, 5
        %v904 = vsel %vm872, %v902, %v903
        %s905 = scalar_lea.vmem [#allocation7], 32
        %v906 = vld [vmem:[%s905] sm:$0xf]
        %v907 = vld [vmem:[%s905 + $0x4] sm:$0xf]
        %v908 = vld [vmem:[%s905 + $0x8] sm:$0xf]
        %v909 = vld [vmem:[%s905 + $0xc] sm:$0xf]
        %v910 = vunpack.c.l.b16 %v876
        %v911 = vunpack.c.l.b16 %v880
        %v912 = vunpack.c.l.b16 %v884
        %v913 = vunpack.c.l.b16 %v888
        %v914 = vunpack.c.l.b16 %v892
        %v915 = vunpack.c.l.b16 %v896
        %v916 = vunpack.c.l.b16 %v900
        %v917 = vunpack.c.l.b16 %v904
        %v918 = vpack.c.b16 %v911, %v910
        %v919 = vpack.c.b16 %v913, %v912
        %v920 = vpack.c.b16 %v915, %v914
        %v921 = vpack.c.b16 %v917, %v916
        %v926 = vunpack.c.l.b16 %v906
        %v927 = vunpack.c.l.b16 %v907
        %v928 = vunpack.c.l.b16 %v908
        %v929 = vunpack.c.l.b16 %v909
        %v930 = vpack.c.b16 %v927, %v926
        %v931 = vpack.c.b16 %v929, %v928
        %v935 = vsel %vm659, %v918, 0
        %v938 = vsel %vm659, %v919, 0
        %v941 = vsel %vm659, %v920, 0
        %v944 = vsel %vm659, %v921, 0
        %946 = vmatprep.subr.bf16.mxu0 0
        %947 = vmatpush1.bf16.msra.mxu0 %v930
        %948 = vmatprep.subr.bf16.mxu0 0
        %949 = vmatpush1.bf16.msra.mxu0 %v931
        %950 = vmatprep.subr.bf16.mxu0 0
        %951 = vmatpush1.bf16.msra.mxu0 0
        %952 = vmatprep.subr.bf16.mxu0 0
        %953 = vmatpush1.bf16.msra.mxu0 0
        %954 = vmatprep.subr.bf16.mxu0 0
        %955 = vmatpush1.bf16.msra.mxu0 0
        %956 = vmatprep.subr.bf16.mxu0 0
        %957 = vmatpush1.bf16.msra.mxu0 0
        %958 = vmatprep.subr.bf16.mxu0 0
        %959 = vmatpush1.bf16.msra.mxu0 0
        %960 = vmatprep.subr.bf16.mxu0 0
        %961 = vmatpush1.bf16.msra.mxu0 0
        %962 = vmatprep.subr.bf16.mxu0 0
        %963 = vmatpush1.bf16.msra.mxu0 0
        %964 = vmatprep.subr.bf16.mxu0 0
        %965 = vmatpush1.bf16.msra.mxu0 0
        %966 = vmatprep.subr.bf16.mxu0 0
        %967 = vmatpush1.bf16.msra.mxu0 0
        %968 = vmatprep.subr.bf16.mxu0 0
        %969 = vmatpush1.bf16.msra.mxu0 0
        %970 = vmatprep.subr.bf16.mxu0 0
        %971 = vmatpush1.bf16.msra.mxu0 0
        %972 = vmatprep.subr.bf16.mxu0 0
        %973 = vmatpush1.bf16.msra.mxu0 0
        %974 = vmatprep.subr.bf16.mxu0 0
        %975 = vmatpush1.bf16.msra.mxu0 0
        %976 = vmatprep.subr.bf16.mxu0 0
        %977 = vmatpush1.bf16.msra.mxu0 0
        %978 = vmatprep.mubr.bf16.mxu0 0
        %979 = vmatmul.mubr.bf16.gmra.mrb[0].mxu0 %v935
        %v980 = vpop.f32.mrb[0].mxu0
        %v981 = vadd.f32 0.0, %v980
        %v982 = vpop.f32.mrb[0].mxu0
        %v983 = vpop.f32.mrb[0].mxu0
        %v984 = vadd.f32 0.0, %v983
        %v985 = vpop.f32.mrb[0].mxu0
        %986 = vmatprep.mubr.bf16.mxu0 0
        %987 = vmatmul.mubr.bf16.gmra.mrb[0].mxu0 %v938
        %v988 = vpop.f32.mrb[0].mxu0
        %v989 = vadd.f32 0.0, %v988
        %v990 = vpop.f32.mrb[0].mxu0
        %v991 = vpop.f32.mrb[0].mxu0
        %v992 = vadd.f32 0.0, %v991
        %v993 = vpop.f32.mrb[0].mxu0
        %994 = vmatprep.mubr.bf16.mxu0 0
        %995 = vmatmul.mubr.bf16.gmra.mrb[0].mxu0 %v941
        %v996 = vpop.f32.mrb[0].mxu0
        %v997 = vadd.f32 0.0, %v996
        %v998 = vpop.f32.mrb[0].mxu0
        %v999 = vpop.f32.mrb[0].mxu0
        %v1000 = vadd.f32 0.0, %v999
        %v1001 = vpop.f32.mrb[0].mxu0
        %1002 = vmatprep.mubr.bf16.mxu0 0
        %1003 = vmatmul.mubr.bf16.gmra.mrb[0].mxu0 %v944
        %v1004 = vpop.f32.mrb[0].mxu0
        %v1005 = vadd.f32 0.0, %v1004
        %v1006 = vpop.f32.mrb[0].mxu0
        %v1007 = vpop.f32.mrb[0].mxu0
        %v1008 = vadd.f32 0.0, %v1007
        %v1009 = vpop.f32.mrb[0].mxu0
        %1010 = vdwg.mxu0
        %v1011 = vadd.f32 %v816, %v981
        %v1012 = vadd.f32 %v819, %v984
        %v1013 = vadd.f32 %v824, %v989
        %v1014 = vadd.f32 %v827, %v992
        %v1015 = vadd.f32 %v832, %v997
        %v1016 = vadd.f32 %v835, %v1000
        %v1017 = vadd.f32 %v840, %v1005
        %v1018 = vadd.f32 %v843, %v1008
        %v1019 = vld [vmem:[%s311] sm:$0xf]
        %v1020 = vld [vmem:[%s311 + $0x8] sm:$0xf]
        %v1021 = vld [vmem:[%s311 + $0x10] sm:$0xf]
        %v1022 = vld [vmem:[%s311 + $0x18] sm:$0xf]
        %v1023 = vld [vmem:[%s311 + $0x20] sm:$0xf]
        %v1024 = vld [vmem:[%s311 + $0x28] sm:$0xf]
        %v1025 = vld [vmem:[%s311 + $0x30] sm:$0xf]
        %v1026 = vld [vmem:[%s311 + $0x38] sm:$0xf]
        %s1027 = scalar_lea.vmem [#allocation7], 48
        %v1028 = vld [vmem:[%s1027] sm:$0xf]
        %v1029 = vld [vmem:[%s1027 + $0x4] sm:$0xf]
        %v1030 = vld [vmem:[%s1027 + $0x8] sm:$0xf]
        %v1031 = vld [vmem:[%s1027 + $0xc] sm:$0xf]
        %v1040 = vunpack.c.l.b16 %v1019
        %v1041 = vunpack.c.l.b16 %v1020
        %v1042 = vunpack.c.l.b16 %v1021
        %v1043 = vunpack.c.l.b16 %v1022
        %v1044 = vunpack.c.l.b16 %v1023
        %v1045 = vunpack.c.l.b16 %v1024
        %v1046 = vunpack.c.l.b16 %v1025
        %v1047 = vunpack.c.l.b16 %v1026
        %v1048 = vpack.c.b16 %v1041, %v1040
        %v1049 = vpack.c.b16 %v1043, %v1042
        %v1050 = vpack.c.b16 %v1045, %v1044
        %v1051 = vpack.c.b16 %v1047, %v1046
        %v1056 = vunpack.c.l.b16 %v1028
        %v1057 = vunpack.c.l.b16 %v1029
        %v1058 = vunpack.c.l.b16 %v1030
        %v1059 = vunpack.c.l.b16 %v1031
        %v1060 = vpack.c.b16 %v1057, %v1056
        %v1061 = vpack.c.b16 %v1059, %v1058
        %v1065 = vsel %vm659, %v1048, 0
        %v1068 = vsel %vm659, %v1049, 0
        %v1071 = vsel %vm659, %v1050, 0
        %v1074 = vsel %vm659, %v1051, 0
        %1076 = vmatprep.subr.bf16.mxu0 0
        %1077 = vmatpush1.bf16.msra.mxu0 %v1060
        %1078 = vmatprep.subr.bf16.mxu0 0
        %1079 = vmatpush1.bf16.msra.mxu0 %v1061
        %1080 = vmatprep.subr.bf16.mxu0 0
        %1081 = vmatpush1.bf16.msra.mxu0 0
        %1082 = vmatprep.subr.bf16.mxu0 0
        %1083 = vmatpush1.bf16.msra.mxu0 0
        %1084 = vmatprep.subr.bf16.mxu0 0
        %1085 = vmatpush1.bf16.msra.mxu0 0
        %1086 = vmatprep.subr.bf16.mxu0 0
        %1087 = vmatpush1.bf16.msra.mxu0 0
        %1088 = vmatprep.subr.bf16.mxu0 0
        %1089 = vmatpush1.bf16.msra.mxu0 0
        %1090 = vmatprep.subr.bf16.mxu0 0
        %1091 = vmatpush1.bf16.msra.mxu0 0
        %1092 = vmatprep.subr.bf16.mxu0 0
        %1093 = vmatpush1.bf16.msra.mxu0 0
        %1094 = vmatprep.subr.bf16.mxu0 0
        %1095 = vmatpush1.bf16.msra.mxu0 0
        %1096 = vmatprep.subr.bf16.mxu0 0
        %1097 = vmatpush1.bf16.msra.mxu0 0
        %1098 = vmatprep.subr.bf16.mxu0 0
        %1099 = vmatpush1.bf16.msra.mxu0 0
        %1100 = vmatprep.subr.bf16.mxu0 0
        %1101 = vmatpush1.bf16.msra.mxu0 0
        %1102 = vmatprep.subr.bf16.mxu0 0
        %1103 = vmatpush1.bf16.msra.mxu0 0
        %1104 = vmatprep.subr.bf16.mxu0 0
        %1105 = vmatpush1.bf16.msra.mxu0 0
        %1106 = vmatprep.subr.bf16.mxu0 0
        %1107 = vmatpush1.bf16.msra.mxu0 0
        %1108 = vmatprep.mubr.bf16.mxu0 0
        %1109 = vmatmul.mubr.bf16.gmra.mrb[0].mxu0 %v1065
        %v1110 = vpop.f32.mrb[0].mxu0
        %v1111 = vadd.f32 0.0, %v1110
        %v1112 = vpop.f32.mrb[0].mxu0
        %v1113 = vpop.f32.mrb[0].mxu0
        %v1114 = vadd.f32 0.0, %v1113
        %v1115 = vpop.f32.mrb[0].mxu0
        %1116 = vmatprep.mubr.bf16.mxu0 0
        %1117 = vmatmul.mubr.bf16.gmra.mrb[0].mxu0 %v1068
        %v1118 = vpop.f32.mrb[0].mxu0
        %v1119 = vadd.f32 0.0, %v1118
        %v1120 = vpop.f32.mrb[0].mxu0
        %v1121 = vpop.f32.mrb[0].mxu0
        %v1122 = vadd.f32 0.0, %v1121
        %v1123 = vpop.f32.mrb[0].mxu0
        %1124 = vmatprep.mubr.bf16.mxu0 0
        %1125 = vmatmul.mubr.bf16.gmra.mrb[0].mxu0 %v1071
        %v1126 = vpop.f32.mrb[0].mxu0
        %v1127 = vadd.f32 0.0, %v1126
        %v1128 = vpop.f32.mrb[0].mxu0
        %v1129 = vpop.f32.mrb[0].mxu0
        %v1130 = vadd.f32 0.0, %v1129
        %v1131 = vpop.f32.mrb[0].mxu0
        %1132 = vmatprep.mubr.bf16.mxu0 0
        %1133 = vmatmul.mubr.bf16.gmra.mrb[0].mxu0 %v1074
        %v1134 = vpop.f32.mrb[0].mxu0
        %v1135 = vadd.f32 0.0, %v1134
        %v1136 = vpop.f32.mrb[0].mxu0
        %v1137 = vpop.f32.mrb[0].mxu0
        %v1138 = vadd.f32 0.0, %v1137
        %v1139 = vpop.f32.mrb[0].mxu0
        %1140 = vdwg.mxu0
        %v1141 = vadd.f32 %v1011, %v1111
        %v1142 = vadd.f32 %v1012, %v1114
        %v1143 = vadd.f32 %v1013, %v1119
        %v1144 = vadd.f32 %v1014, %v1122
        %v1145 = vadd.f32 %v1015, %v1127
        %v1146 = vadd.f32 %v1016, %v1130
        %v1147 = vadd.f32 %v1017, %v1135
        %v1148 = vadd.f32 %v1018, %v1138
        %v1149 = vld [vmem:[%s311] sm:$0xf]
        %v1150 = vld [vmem:[%s311 + $0x4] sm:$0x1]
        %v1151 = vld [vmem:[%s311 + $0x8] sm:$0xf]
        %v1152 = vld [vmem:[%s311 + $0xc] sm:$0x1]
        %v1153 = vld [vmem:[%s311 + $0x10] sm:$0xf]
        %v1154 = vld [vmem:[%s311 + $0x14] sm:$0x1]
        %v1155 = vld [vmem:[%s311 + $0x18] sm:$0xf]
        %v1156 = vld [vmem:[%s311 + $0x1c] sm:$0x1]
        %v1157 = vld [vmem:[%s311 + $0x20] sm:$0xf]
        %v1158 = vld [vmem:[%s311 + $0x24] sm:$0x1]
        %v1159 = vld [vmem:[%s311 + $0x28] sm:$0xf]
        %v1160 = vld [vmem:[%s311 + $0x2c] sm:$0x1]
        %v1161 = vld [vmem:[%s311 + $0x30] sm:$0xf]
        %v1162 = vld [vmem:[%s311 + $0x34] sm:$0x1]
        %v1163 = vld [vmem:[%s311 + $0x38] sm:$0xf]
        %v1164 = vld [vmem:[%s311 + $0x3c] sm:$0x1]
        %v1166 = vshrl.u32 %v1149, 16
        %v1168 = vrot.slane %v1166, 4
        %v1169 = vshll.u32 %v1149, 16
        %v1171 = vrot.slane %v1169, 5
        %v1172 = vor.u32 %v1168, %v1171
        %v1173 = vrot.slane %v1172, 4
        %v1175 = vshll.u32 %v1150, 16
        %v1177 = vrot.slane %v1175, 5
        %v1178 = vsel %vm517, %v1173, %v1177
        %v1180 = vshrl.u32 %v1151, 16
        %v1182 = vrot.slane %v1180, 4
        %v1183 = vshll.u32 %v1151, 16
        %v1185 = vrot.slane %v1183, 5
        %v1186 = vor.u32 %v1182, %v1185
        %v1187 = vrot.slane %v1186, 4
        %v1189 = vshll.u32 %v1152, 16
        %v1191 = vrot.slane %v1189, 5
        %v1192 = vsel %vm517, %v1187, %v1191
        %v1194 = vshrl.u32 %v1153, 16
        %v1196 = vrot.slane %v1194, 4
        %v1197 = vshll.u32 %v1153, 16
        %v1199 = vrot.slane %v1197, 5
        %v1200 = vor.u32 %v1196, %v1199
        %v1201 = vrot.slane %v1200, 4
        %v1203 = vshll.u32 %v1154, 16
        %v1205 = vrot.slane %v1203, 5
        %v1206 = vsel %vm517, %v1201, %v1205
        %v1208 = vshrl.u32 %v1155, 16
        %v1210 = vrot.slane %v1208, 4
        %v1211 = vshll.u32 %v1155, 16
        %v1213 = vrot.slane %v1211, 5
        %v1214 = vor.u32 %v1210, %v1213
        %v1215 = vrot.slane %v1214, 4
        %v1217 = vshll.u32 %v1156, 16
        %v1219 = vrot.slane %v1217, 5
        %v1220 = vsel %vm517, %v1215, %v1219
        %v1222 = vshrl.u32 %v1157, 16
        %v1224 = vrot.slane %v1222, 4
        %v1225 = vshll.u32 %v1157, 16
        %v1227 = vrot.slane %v1225, 5
        %v1228 = vor.u32 %v1224, %v1227
        %v1229 = vrot.slane %v1228, 4
        %v1231 = vshll.u32 %v1158, 16
        %v1233 = vrot.slane %v1231, 5
        %v1234 = vsel %vm517, %v1229, %v1233
        %v1236 = vshrl.u32 %v1159, 16
        %v1238 = vrot.slane %v1236, 4
        %v1239 = vshll.u32 %v1159, 16
        %v1241 = vrot.slane %v1239, 5
        %v1242 = vor.u32 %v1238, %v1241
        %v1243 = vrot.slane %v1242, 4
        %v1245 = vshll.u32 %v1160, 16
        %v1247 = vrot.slane %v1245, 5
        %v1248 = vsel %vm517, %v1243, %v1247
        %v1250 = vshrl.u32 %v1161, 16
        %v1252 = vrot.slane %v1250, 4
        %v1253 = vshll.u32 %v1161, 16
        %v1255 = vrot.slane %v1253, 5
        %v1256 = vor.u32 %v1252, %v1255
        %v1257 = vrot.slane %v1256, 4
        %v1259 = vshll.u32 %v1162, 16
        %v1261 = vrot.slane %v1259, 5
        %v1262 = vsel %vm517, %v1257, %v1261
        %v1264 = vshrl.u32 %v1163, 16
        %v1266 = vrot.slane %v1264, 4
        %v1267 = vshll.u32 %v1163, 16
        %v1269 = vrot.slane %v1267, 5
        %v1270 = vor.u32 %v1266, %v1269
        %v1271 = vrot.slane %v1270, 4
        %v1273 = vshll.u32 %v1164, 16
        %v1275 = vrot.slane %v1273, 5
        %v1276 = vsel %vm517, %v1271, %v1275
        %s1277 = scalar_lea.vmem [#allocation7], 64
        %v1278 = vld [vmem:[%s1277] sm:$0xf]
        %v1279 = vld [vmem:[%s1277 + $0x4] sm:$0xf]
        %v1280 = vld [vmem:[%s1277 + $0x8] sm:$0xf]
        %v1281 = vld [vmem:[%s1277 + $0xc] sm:$0xf]
        %v1282 = vunpack.c.l.b16 %v1178
        %v1283 = vunpack.c.l.b16 %v1192
        %v1284 = vunpack.c.l.b16 %v1206
        %v1285 = vunpack.c.l.b16 %v1220
        %v1286 = vunpack.c.l.b16 %v1234
        %v1287 = vunpack.c.l.b16 %v1248
        %v1288 = vunpack.c.l.b16 %v1262
        %v1289 = vunpack.c.l.b16 %v1276
        %v1290 = vpack.c.b16 %v1283, %v1282
        %v1291 = vpack.c.b16 %v1285, %v1284
        %v1292 = vpack.c.b16 %v1287, %v1286
        %v1293 = vpack.c.b16 %v1289, %v1288
        %v1298 = vunpack.c.l.b16 %v1278
        %v1299 = vunpack.c.l.b16 %v1279
        %v1300 = vunpack.c.l.b16 %v1280
        %v1301 = vunpack.c.l.b16 %v1281
        %v1302 = vpack.c.b16 %v1299, %v1298
        %v1303 = vpack.c.b16 %v1301, %v1300
        %v1307 = vsel %vm659, %v1290, 0
        %v1310 = vsel %vm659, %v1291, 0
        %v1313 = vsel %vm659, %v1292, 0
        %v1316 = vsel %vm659, %v1293, 0
        %1318 = vmatprep.subr.bf16.mxu0 0
        %1319 = vmatpush1.bf16.msra.mxu0 %v1302
        %1320 = vmatprep.subr.bf16.mxu0 0
        %1321 = vmatpush1.bf16.msra.mxu0 %v1303
        %1322 = vmatprep.subr.bf16.mxu0 0
        %1323 = vmatpush1.bf16.msra.mxu0 0
        %1324 = vmatprep.subr.bf16.mxu0 0
        %1325 = vmatpush1.bf16.msra.mxu0 0
        %1326 = vmatprep.subr.bf16.mxu0 0
        %1327 = vmatpush1.bf16.msra.mxu0 0
        %1328 = vmatprep.subr.bf16.mxu0 0
        %1329 = vmatpush1.bf16.msra.mxu0 0
        %1330 = vmatprep.subr.bf16.mxu0 0
        %1331 = vmatpush1.bf16.msra.mxu0 0
        %1332 = vmatprep.subr.bf16.mxu0 0
        %1333 = vmatpush1.bf16.msra.mxu0 0
        %1334 = vmatprep.subr.bf16.mxu0 0
        %1335 = vmatpush1.bf16.msra.mxu0 0
        %1336 = vmatprep.subr.bf16.mxu0 0
        %1337 = vmatpush1.bf16.msra.mxu0 0
        %1338 = vmatprep.subr.bf16.mxu0 0
        %1339 = vmatpush1.bf16.msra.mxu0 0
        %1340 = vmatprep.subr.bf16.mxu0 0
        %1341 = vmatpush1.bf16.msra.mxu0 0
        %1342 = vmatprep.subr.bf16.mxu0 0
        %1343 = vmatpush1.bf16.msra.mxu0 0
        %1344 = vmatprep.subr.bf16.mxu0 0
        %1345 = vmatpush1.bf16.msra.mxu0 0
        %1346 = vmatprep.subr.bf16.mxu0 0
        %1347 = vmatpush1.bf16.msra.mxu0 0
        %1348 = vmatprep.subr.bf16.mxu0 0
        %1349 = vmatpush1.bf16.msra.mxu0 0
        %1350 = vmatprep.mubr.bf16.mxu0 0
        %1351 = vmatmul.mubr.bf16.gmra.mrb[0].mxu0 %v1307
        %v1352 = vpop.f32.mrb[0].mxu0
        %v1353 = vadd.f32 0.0, %v1352
        %v1354 = vpop.f32.mrb[0].mxu0
        %v1355 = vpop.f32.mrb[0].mxu0
        %v1356 = vadd.f32 0.0, %v1355
        %v1357 = vpop.f32.mrb[0].mxu0
        %1358 = vmatprep.mubr.bf16.mxu0 0
        %1359 = vmatmul.mubr.bf16.gmra.mrb[0].mxu0 %v1310
        %v1360 = vpop.f32.mrb[0].mxu0
        %v1361 = vadd.f32 0.0, %v1360
        %v1362 = vpop.f32.mrb[0].mxu0
        %v1363 = vpop.f32.mrb[0].mxu0
        %v1364 = vadd.f32 0.0, %v1363
        %v1365 = vpop.f32.mrb[0].mxu0
        %1366 = vmatprep.mubr.bf16.mxu0 0
        %1367 = vmatmul.mubr.bf16.gmra.mrb[0].mxu0 %v1313
        %v1368 = vpop.f32.mrb[0].mxu0
        %v1369 = vadd.f32 0.0, %v1368
        %v1370 = vpop.f32.mrb[0].mxu0
        %v1371 = vpop.f32.mrb[0].mxu0
        %v1372 = vadd.f32 0.0, %v1371
        %v1373 = vpop.f32.mrb[0].mxu0
        %1374 = vmatprep.mubr.bf16.mxu0 0
        %1375 = vmatmul.mubr.bf16.gmra.mrb[0].mxu0 %v1316
        %v1376 = vpop.f32.mrb[0].mxu0
        %v1377 = vadd.f32 0.0, %v1376
        %v1378 = vpop.f32.mrb[0].mxu0
        %v1379 = vpop.f32.mrb[0].mxu0
        %v1380 = vadd.f32 0.0, %v1379
        %v1381 = vpop.f32.mrb[0].mxu0
        %1382 = vdwg.mxu0
        %v1383 = vadd.f32 %v1141, %v1353
        %v1384 = vadd.f32 %v1142, %v1356
        %v1385 = vadd.f32 %v1143, %v1361
        %v1386 = vadd.f32 %v1144, %v1364
        %v1387 = vadd.f32 %v1145, %v1369
        %v1388 = vadd.f32 %v1146, %v1372
        %v1389 = vadd.f32 %v1147, %v1377
        %v1390 = vadd.f32 %v1148, %v1380
        %v1391 = vld [vmem:[%s311] sm:$0xe]
        %v1392 = vld [vmem:[%s311 + $0x8] sm:$0xe]
        %v1393 = vld [vmem:[%s311 + $0x10] sm:$0xe]
        %v1394 = vld [vmem:[%s311 + $0x18] sm:$0xe]
        %v1395 = vld [vmem:[%s311 + $0x20] sm:$0xe]
        %v1396 = vld [vmem:[%s311 + $0x28] sm:$0xe]
        %v1397 = vld [vmem:[%s311 + $0x30] sm:$0xe]
        %v1398 = vld [vmem:[%s311 + $0x38] sm:$0xe]
        %v1415 = vrot.slane %v1391, 5
        %v1416 = vrot.slane %v1415, 4
        %v1417 = vrot.slane %v1150, 5
        %v1418 = vsel %vm872, %v1416, %v1417
        %v1419 = vrot.slane %v1392, 5
        %v1420 = vrot.slane %v1419, 4
        %v1421 = vrot.slane %v1152, 5
        %v1422 = vsel %vm872, %v1420, %v1421
        %v1423 = vrot.slane %v1393, 5
        %v1424 = vrot.slane %v1423, 4
        %v1425 = vrot.slane %v1154, 5
        %v1426 = vsel %vm872, %v1424, %v1425
        %v1427 = vrot.slane %v1394, 5
        %v1428 = vrot.slane %v1427, 4
        %v1429 = vrot.slane %v1156, 5
        %v1430 = vsel %vm872, %v1428, %v1429
        %v1431 = vrot.slane %v1395, 5
        %v1432 = vrot.slane %v1431, 4
        %v1433 = vrot.slane %v1158, 5
        %v1434 = vsel %vm872, %v1432, %v1433
        %v1435 = vrot.slane %v1396, 5
        %v1436 = vrot.slane %v1435, 4
        %v1437 = vrot.slane %v1160, 5
        %v1438 = vsel %vm872, %v1436, %v1437
        %v1439 = vrot.slane %v1397, 5
        %v1440 = vrot.slane %v1439, 4
        %v1441 = vrot.slane %v1162, 5
        %v1442 = vsel %vm872, %v1440, %v1441
        %v1443 = vrot.slane %v1398, 5
        %v1444 = vrot.slane %v1443, 4
        %v1445 = vrot.slane %v1164, 5
        %v1446 = vsel %vm872, %v1444, %v1445
        %s1447 = scalar_lea.vmem [#allocation7], 80
        %v1448 = vld [vmem:[%s1447] sm:$0xf]
        %v1449 = vld [vmem:[%s1447 + $0x4] sm:$0xf]
        %v1450 = vld [vmem:[%s1447 + $0x8] sm:$0xf]
        %v1451 = vld [vmem:[%s1447 + $0xc] sm:$0xf]
        %v1452 = vunpack.c.l.b16 %v1418
        %v1453 = vunpack.c.l.b16 %v1422
        %v1454 = vunpack.c.l.b16 %v1426
        %v1455 = vunpack.c.l.b16 %v1430
        %v1456 = vunpack.c.l.b16 %v1434
        %v1457 = vunpack.c.l.b16 %v1438
        %v1458 = vunpack.c.l.b16 %v1442
        %v1459 = vunpack.c.l.b16 %v1446
        %v1460 = vpack.c.b16 %v1453, %v1452
        %v1461 = vpack.c.b16 %v1455, %v1454
        %v1462 = vpack.c.b16 %v1457, %v1456
        %v1463 = vpack.c.b16 %v1459, %v1458
        %v1468 = vunpack.c.l.b16 %v1448
        %v1469 = vunpack.c.l.b16 %v1449
        %v1470 = vunpack.c.l.b16 %v1450
        %v1471 = vunpack.c.l.b16 %v1451
        %v1472 = vpack.c.b16 %v1469, %v1468
        %v1473 = vpack.c.b16 %v1471, %v1470
        %v1477 = vsel %vm659, %v1460, 0
        %v1480 = vsel %vm659, %v1461, 0
        %v1483 = vsel %vm659, %v1462, 0
        %v1486 = vsel %vm659, %v1463, 0
        %1488 = vmatprep.subr.bf16.mxu0 0
        %1489 = vmatpush1.bf16.msra.mxu0 %v1472
        %1490 = vmatprep.subr.bf16.mxu0 0
        %1491 = vmatpush1.bf16.msra.mxu0 %v1473
        %1492 = vmatprep.subr.bf16.mxu0 0
        %1493 = vmatpush1.bf16.msra.mxu0 0
        %1494 = vmatprep.subr.bf16.mxu0 0
        %1495 = vmatpush1.bf16.msra.mxu0 0
        %1496 = vmatprep.subr.bf16.mxu0 0
        %1497 = vmatpush1.bf16.msra.mxu0 0
        %1498 = vmatprep.subr.bf16.mxu0 0
        %1499 = vmatpush1.bf16.msra.mxu0 0
        %1500 = vmatprep.subr.bf16.mxu0 0
        %1501 = vmatpush1.bf16.msra.mxu0 0
        %1502 = vmatprep.subr.bf16.mxu0 0
        %1503 = vmatpush1.bf16.msra.mxu0 0
        %1504 = vmatprep.subr.bf16.mxu0 0
        %1505 = vmatpush1.bf16.msra.mxu0 0
        %1506 = vmatprep.subr.bf16.mxu0 0
        %1507 = vmatpush1.bf16.msra.mxu0 0
        %1508 = vmatprep.subr.bf16.mxu0 0
        %1509 = vmatpush1.bf16.msra.mxu0 0
        %1510 = vmatprep.subr.bf16.mxu0 0
        %1511 = vmatpush1.bf16.msra.mxu0 0
        %1512 = vmatprep.subr.bf16.mxu0 0
        %1513 = vmatpush1.bf16.msra.mxu0 0
        %1514 = vmatprep.subr.bf16.mxu0 0
        %1515 = vmatpush1.bf16.msra.mxu0 0
        %1516 = vmatprep.subr.bf16.mxu0 0
        %1517 = vmatpush1.bf16.msra.mxu0 0
        %1518 = vmatprep.subr.bf16.mxu0 0
        %1519 = vmatpush1.bf16.msra.mxu0 0
        %1520 = vmatprep.mubr.bf16.mxu0 0
        %1521 = vmatmul.mubr.bf16.gmra.mrb[0].mxu0 %v1477
        %v1522 = vpop.f32.mrb[0].mxu0
        %v1523 = vadd.f32 0.0, %v1522
        %v1524 = vpop.f32.mrb[0].mxu0
        %v1525 = vpop.f32.mrb[0].mxu0
        %v1526 = vadd.f32 0.0, %v1525
        %v1527 = vpop.f32.mrb[0].mxu0
        %1528 = vmatprep.mubr.bf16.mxu0 0
        %1529 = vmatmul.mubr.bf16.gmra.mrb[0].mxu0 %v1480
        %v1530 = vpop.f32.mrb[0].mxu0
        %v1531 = vadd.f32 0.0, %v1530
        %v1532 = vpop.f32.mrb[0].mxu0
        %v1533 = vpop.f32.mrb[0].mxu0
        %v1534 = vadd.f32 0.0, %v1533
        %v1535 = vpop.f32.mrb[0].mxu0
        %1536 = vmatprep.mubr.bf16.mxu0 0
        %1537 = vmatmul.mubr.bf16.gmra.mrb[0].mxu0 %v1483
        %v1538 = vpop.f32.mrb[0].mxu0
        %v1539 = vadd.f32 0.0, %v1538
        %v1540 = vpop.f32.mrb[0].mxu0
        %v1541 = vpop.f32.mrb[0].mxu0
        %v1542 = vadd.f32 0.0, %v1541
        %v1543 = vpop.f32.mrb[0].mxu0
        %1544 = vmatprep.mubr.bf16.mxu0 0
        %1545 = vmatmul.mubr.bf16.gmra.mrb[0].mxu0 %v1486
        %v1546 = vpop.f32.mrb[0].mxu0
        %v1547 = vadd.f32 0.0, %v1546
        %v1548 = vpop.f32.mrb[0].mxu0
        %v1549 = vpop.f32.mrb[0].mxu0
        %v1550 = vadd.f32 0.0, %v1549
        %v1551 = vpop.f32.mrb[0].mxu0
        %1552 = vdwg.mxu0
        %v1553 = vadd.f32 %v1383, %v1523
        %v1554 = vadd.f32 %v1384, %v1526
        %v1555 = vadd.f32 %v1385, %v1531
        %v1556 = vadd.f32 %v1386, %v1534
        %v1557 = vadd.f32 %v1387, %v1539
        %v1558 = vadd.f32 %v1388, %v1542
        %v1559 = vadd.f32 %v1389, %v1547
        %v1560 = vadd.f32 %v1390, %v1550
        %s1561 = scalar_lea.vmem [#allocation2], 16
        %v1562 = vld [vmem:[%s1561] sm:$0xf]
        %v1563 = vld [vmem:[%s1561 + $0x8] sm:$0xf]
        %v1564 = vld [vmem:[%s1561 + $0x10] sm:$0xf]
        %v1565 = vld [vmem:[%s1561 + $0x18] sm:$0xf]
        %v1566 = vld [vmem:[%s1561 + $0x20] sm:$0xf]
        %v1567 = vld [vmem:[%s1561 + $0x28] sm:$0xf]
        %v1568 = vld [vmem:[%s1561 + $0x30] sm:$0xf]
        %v1569 = vld [vmem:[%s1561 + $0x38] sm:$0xf]
        %s1570 = scalar_lea.vmem [#allocation7], 96
        %v1571 = vld [vmem:[%s1570] sm:$0xf]
        %v1572 = vld [vmem:[%s1570 + $0x4] sm:$0xf]
        %v1573 = vld [vmem:[%s1570 + $0x8] sm:$0xf]
        %v1574 = vld [vmem:[%s1570 + $0xc] sm:$0xf]
        %v1583 = vunpack.c.l.b16 %v1562
        %v1584 = vunpack.c.l.b16 %v1563
        %v1585 = vunpack.c.l.b16 %v1564
        %v1586 = vunpack.c.l.b16 %v1565
        %v1587 = vunpack.c.l.b16 %v1566
        %v1588 = vunpack.c.l.b16 %v1567
        %v1589 = vunpack.c.l.b16 %v1568
        %v1590 = vunpack.c.l.b16 %v1569
        %v1591 = vpack.c.b16 %v1584, %v1583
        %v1592 = vpack.c.b16 %v1586, %v1585
        %v1593 = vpack.c.b16 %v1588, %v1587
        %v1594 = vpack.c.b16 %v1590, %v1589
        %v1599 = vunpack.c.l.b16 %v1571
        %v1600 = vunpack.c.l.b16 %v1572
        %v1601 = vunpack.c.l.b16 %v1573
        %v1602 = vunpack.c.l.b16 %v1574
        %v1603 = vpack.c.b16 %v1600, %v1599
        %v1604 = vpack.c.b16 %v1602, %v1601
        %v1608 = vsel %vm659, %v1591, 0
        %v1611 = vsel %vm659, %v1592, 0
        %v1614 = vsel %vm659, %v1593, 0
        %v1617 = vsel %vm659, %v1594, 0
        %1619 = vmatprep.subr.bf16.mxu0 0
        %1620 = vmatpush1.bf16.msra.mxu0 %v1603
        %1621 = vmatprep.subr.bf16.mxu0 0
        %1622 = vmatpush1.bf16.msra.mxu0 %v1604
        %1623 = vmatprep.subr.bf16.mxu0 0
        %1624 = vmatpush1.bf16.msra.mxu0 0
        %1625 = vmatprep.subr.bf16.mxu0 0
        %1626 = vmatpush1.bf16.msra.mxu0 0
        %1627 = vmatprep.subr.bf16.mxu0 0
        %1628 = vmatpush1.bf16.msra.mxu0 0
        %1629 = vmatprep.subr.bf16.mxu0 0
        %1630 = vmatpush1.bf16.msra.mxu0 0
        %1631 = vmatprep.subr.bf16.mxu0 0
        %1632 = vmatpush1.bf16.msra.mxu0 0
        %1633 = vmatprep.subr.bf16.mxu0 0
        %1634 = vmatpush1.bf16.msra.mxu0 0
        %1635 = vmatprep.subr.bf16.mxu0 0
        %1636 = vmatpush1.bf16.msra.mxu0 0
        %1637 = vmatprep.subr.bf16.mxu0 0
        %1638 = vmatpush1.bf16.msra.mxu0 0
        %1639 = vmatprep.subr.bf16.mxu0 0
        %1640 = vmatpush1.bf16.msra.mxu0 0
        %1641 = vmatprep.subr.bf16.mxu0 0
        %1642 = vmatpush1.bf16.msra.mxu0 0
        %1643 = vmatprep.subr.bf16.mxu0 0
        %1644 = vmatpush1.bf16.msra.mxu0 0
        %1645 = vmatprep.subr.bf16.mxu0 0
        %1646 = vmatpush1.bf16.msra.mxu0 0
        %1647 = vmatprep.subr.bf16.mxu0 0
        %1648 = vmatpush1.bf16.msra.mxu0 0
        %1649 = vmatprep.subr.bf16.mxu0 0
        %1650 = vmatpush1.bf16.msra.mxu0 0
        %1651 = vmatprep.mubr.bf16.mxu0 0
        %1652 = vmatmul.mubr.bf16.gmra.mrb[0].mxu0 %v1608
        %v1653 = vpop.f32.mrb[0].mxu0
        %v1654 = vadd.f32 0.0, %v1653
        %v1655 = vpop.f32.mrb[0].mxu0
        %v1656 = vpop.f32.mrb[0].mxu0
        %v1657 = vadd.f32 0.0, %v1656
        %v1658 = vpop.f32.mrb[0].mxu0
        %1659 = vmatprep.mubr.bf16.mxu0 0
        %1660 = vmatmul.mubr.bf16.gmra.mrb[0].mxu0 %v1611
        %v1661 = vpop.f32.mrb[0].mxu0
        %v1662 = vadd.f32 0.0, %v1661
        %v1663 = vpop.f32.mrb[0].mxu0
        %v1664 = vpop.f32.mrb[0].mxu0
        %v1665 = vadd.f32 0.0, %v1664
        %v1666 = vpop.f32.mrb[0].mxu0
        %1667 = vmatprep.mubr.bf16.mxu0 0
        %1668 = vmatmul.mubr.bf16.gmra.mrb[0].mxu0 %v1614
        %v1669 = vpop.f32.mrb[0].mxu0
        %v1670 = vadd.f32 0.0, %v1669
        %v1671 = vpop.f32.mrb[0].mxu0
        %v1672 = vpop.f32.mrb[0].mxu0
        %v1673 = vadd.f32 0.0, %v1672
        %v1674 = vpop.f32.mrb[0].mxu0
        %1675 = vmatprep.mubr.bf16.mxu0 0
        %1676 = vmatmul.mubr.bf16.gmra.mrb[0].mxu0 %v1617
        %v1677 = vpop.f32.mrb[0].mxu0
        %v1678 = vadd.f32 0.0, %v1677
        %v1679 = vpop.f32.mrb[0].mxu0
        %v1680 = vpop.f32.mrb[0].mxu0
        %v1681 = vadd.f32 0.0, %v1680
        %v1682 = vpop.f32.mrb[0].mxu0
        %1683 = vdwg.mxu0
        %v1684 = vadd.f32 %v1553, %v1654
        %v1685 = vadd.f32 %v1554, %v1657
        %v1686 = vadd.f32 %v1555, %v1662
        %v1687 = vadd.f32 %v1556, %v1665
        %v1688 = vadd.f32 %v1557, %v1670
        %v1689 = vadd.f32 %v1558, %v1673
        %v1690 = vadd.f32 %v1559, %v1678
        %v1691 = vadd.f32 %v1560, %v1681
        %v1692 = vld [vmem:[%s1561] sm:$0xf]
        %v1693 = vld [vmem:[%s1561 + $0x4] sm:$0x1]
        %v1694 = vld [vmem:[%s1561 + $0x8] sm:$0xf]
        %v1695 = vld [vmem:[%s1561 + $0xc] sm:$0x1]
        %v1696 = vld [vmem:[%s1561 + $0x10] sm:$0xf]
        %v1697 = vld [vmem:[%s1561 + $0x14] sm:$0x1]
        %v1698 = vld [vmem:[%s1561 + $0x18] sm:$0xf]
        %v1699 = vld [vmem:[%s1561 + $0x1c] sm:$0x1]
        %v1700 = vld [vmem:[%s1561 + $0x20] sm:$0xf]
        %v1701 = vld [vmem:[%s1561 + $0x24] sm:$0x1]
        %v1702 = vld [vmem:[%s1561 + $0x28] sm:$0xf]
        %v1703 = vld [vmem:[%s1561 + $0x2c] sm:$0x1]
        %v1704 = vld [vmem:[%s1561 + $0x30] sm:$0xf]
        %v1705 = vld [vmem:[%s1561 + $0x34] sm:$0x1]
        %v1706 = vld [vmem:[%s1561 + $0x38] sm:$0xf]
        %v1707 = vld [vmem:[%s1561 + $0x3c] sm:$0x1]
        %v1709 = vshrl.u32 %v1692, 16
        %v1711 = vrot.slane %v1709, 4
        %v1712 = vshll.u32 %v1692, 16
        %v1714 = vrot.slane %v1712, 5
        %v1715 = vor.u32 %v1711, %v1714
        %v1716 = vrot.slane %v1715, 4
        %v1718 = vshll.u32 %v1693, 16
        %v1720 = vrot.slane %v1718, 5
        %v1721 = vsel %vm517, %v1716, %v1720
        %v1723 = vshrl.u32 %v1694, 16
        %v1725 = vrot.slane %v1723, 4
        %v1726 = vshll.u32 %v1694, 16
        %v1728 = vrot.slane %v1726, 5
        %v1729 = vor.u32 %v1725, %v1728
        %v1730 = vrot.slane %v1729, 4
        %v1732 = vshll.u32 %v1695, 16
        %v1734 = vrot.slane %v1732, 5
        %v1735 = vsel %vm517, %v1730, %v1734
        %v1737 = vshrl.u32 %v1696, 16
        %v1739 = vrot.slane %v1737, 4
        %v1740 = vshll.u32 %v1696, 16
        %v1742 = vrot.slane %v1740, 5
        %v1743 = vor.u32 %v1739, %v1742
        %v1744 = vrot.slane %v1743, 4
        %v1746 = vshll.u32 %v1697, 16
        %v1748 = vrot.slane %v1746, 5
        %v1749 = vsel %vm517, %v1744, %v1748
        %v1751 = vshrl.u32 %v1698, 16
        %v1753 = vrot.slane %v1751, 4
        %v1754 = vshll.u32 %v1698, 16
        %v1756 = vrot.slane %v1754, 5
        %v1757 = vor.u32 %v1753, %v1756
        %v1758 = vrot.slane %v1757, 4
        %v1760 = vshll.u32 %v1699, 16
        %v1762 = vrot.slane %v1760, 5
        %v1763 = vsel %vm517, %v1758, %v1762
        %v1765 = vshrl.u32 %v1700, 16
        %v1767 = vrot.slane %v1765, 4
        %v1768 = vshll.u32 %v1700, 16
        %v1770 = vrot.slane %v1768, 5
        %v1771 = vor.u32 %v1767, %v1770
        %v1772 = vrot.slane %v1771, 4
        %v1774 = vshll.u32 %v1701, 16
        %v1776 = vrot.slane %v1774, 5
        %v1777 = vsel %vm517, %v1772, %v1776
        %v1779 = vshrl.u32 %v1702, 16
        %v1781 = vrot.slane %v1779, 4
        %v1782 = vshll.u32 %v1702, 16
        %v1784 = vrot.slane %v1782, 5
        %v1785 = vor.u32 %v1781, %v1784
        %v1786 = vrot.slane %v1785, 4
        %v1788 = vshll.u32 %v1703, 16
        %v1790 = vrot.slane %v1788, 5
        %v1791 = vsel %vm517, %v1786, %v1790
        %v1793 = vshrl.u32 %v1704, 16
        %v1795 = vrot.slane %v1793, 4
        %v1796 = vshll.u32 %v1704, 16
        %v1798 = vrot.slane %v1796, 5
        %v1799 = vor.u32 %v1795, %v1798
        %v1800 = vrot.slane %v1799, 4
        %v1802 = vshll.u32 %v1705, 16
        %v1804 = vrot.slane %v1802, 5
        %v1805 = vsel %vm517, %v1800, %v1804
        %v1807 = vshrl.u32 %v1706, 16
        %v1809 = vrot.slane %v1807, 4
        %v1810 = vshll.u32 %v1706, 16
        %v1812 = vrot.slane %v1810, 5
        %v1813 = vor.u32 %v1809, %v1812
        %v1814 = vrot.slane %v1813, 4
        %v1816 = vshll.u32 %v1707, 16
        %v1818 = vrot.slane %v1816, 5
        %v1819 = vsel %vm517, %v1814, %v1818
        %s1820 = scalar_lea.vmem [#allocation7], 112
        %v1821 = vld [vmem:[%s1820] sm:$0xf]
        %v1822 = vld [vmem:[%s1820 + $0x4] sm:$0xf]
        %v1823 = vld [vmem:[%s1820 + $0x8] sm:$0xf]
        %v1824 = vld [vmem:[%s1820 + $0xc] sm:$0xf]
        %v1825 = vunpack.c.l.b16 %v1721
        %v1826 = vunpack.c.l.b16 %v1735
        %v1827 = vunpack.c.l.b16 %v1749
        %v1828 = vunpack.c.l.b16 %v1763
        %v1829 = vunpack.c.l.b16 %v1777
        %v1830 = vunpack.c.l.b16 %v1791
        %v1831 = vunpack.c.l.b16 %v1805
        %v1832 = vunpack.c.l.b16 %v1819
        %v1833 = vpack.c.b16 %v1826, %v1825
        %v1834 = vpack.c.b16 %v1828, %v1827
        %v1835 = vpack.c.b16 %v1830, %v1829
        %v1836 = vpack.c.b16 %v1832, %v1831
        %v1841 = vunpack.c.l.b16 %v1821
        %v1842 = vunpack.c.l.b16 %v1822
        %v1843 = vunpack.c.l.b16 %v1823
        %v1844 = vunpack.c.l.b16 %v1824
        %v1845 = vpack.c.b16 %v1842, %v1841
        %v1846 = vpack.c.b16 %v1844, %v1843
        %v1850 = vsel %vm659, %v1833, 0
        %v1853 = vsel %vm659, %v1834, 0
        %v1856 = vsel %vm659, %v1835, 0
        %v1859 = vsel %vm659, %v1836, 0
        %1861 = vmatprep.subr.bf16.mxu0 0
        %1862 = vmatpush1.bf16.msra.mxu0 %v1845
        %1863 = vmatprep.subr.bf16.mxu0 0
        %1864 = vmatpush1.bf16.msra.mxu0 %v1846
        %1865 = vmatprep.subr.bf16.mxu0 0
        %1866 = vmatpush1.bf16.msra.mxu0 0
        %1867 = vmatprep.subr.bf16.mxu0 0
        %1868 = vmatpush1.bf16.msra.mxu0 0
        %1869 = vmatprep.subr.bf16.mxu0 0
        %1870 = vmatpush1.bf16.msra.mxu0 0
        %1871 = vmatprep.subr.bf16.mxu0 0
        %1872 = vmatpush1.bf16.msra.mxu0 0
        %1873 = vmatprep.subr.bf16.mxu0 0
        %1874 = vmatpush1.bf16.msra.mxu0 0
        %1875 = vmatprep.subr.bf16.mxu0 0
        %1876 = vmatpush1.bf16.msra.mxu0 0
        %1877 = vmatprep.subr.bf16.mxu0 0
        %1878 = vmatpush1.bf16.msra.mxu0 0
        %1879 = vmatprep.subr.bf16.mxu0 0
        %1880 = vmatpush1.bf16.msra.mxu0 0
        %1881 = vmatprep.subr.bf16.mxu0 0
        %1882 = vmatpush1.bf16.msra.mxu0 0
        %1883 = vmatprep.subr.bf16.mxu0 0
        %1884 = vmatpush1.bf16.msra.mxu0 0
        %1885 = vmatprep.subr.bf16.mxu0 0
        %1886 = vmatpush1.bf16.msra.mxu0 0
        %1887 = vmatprep.subr.bf16.mxu0 0
        %1888 = vmatpush1.bf16.msra.mxu0 0
        %1889 = vmatprep.subr.bf16.mxu0 0
        %1890 = vmatpush1.bf16.msra.mxu0 0
        %1891 = vmatprep.subr.bf16.mxu0 0
        %1892 = vmatpush1.bf16.msra.mxu0 0
        %1893 = vmatprep.mubr.bf16.mxu0 0
        %1894 = vmatmul.mubr.bf16.gmra.mrb[0].mxu0 %v1850
        %v1895 = vpop.f32.mrb[0].mxu0
        %v1896 = vadd.f32 0.0, %v1895
        %v1897 = vpop.f32.mrb[0].mxu0
        %v1898 = vpop.f32.mrb[0].mxu0
        %v1899 = vadd.f32 0.0, %v1898
        %v1900 = vpop.f32.mrb[0].mxu0
        %1901 = vmatprep.mubr.bf16.mxu0 0
        %1902 = vmatmul.mubr.bf16.gmra.mrb[0].mxu0 %v1853
        %v1903 = vpop.f32.mrb[0].mxu0
        %v1904 = vadd.f32 0.0, %v1903
        %v1905 = vpop.f32.mrb[0].mxu0
        %v1906 = vpop.f32.mrb[0].mxu0
        %v1907 = vadd.f32 0.0, %v1906
        %v1908 = vpop.f32.mrb[0].mxu0
        %1909 = vmatprep.mubr.bf16.mxu0 0
        %1910 = vmatmul.mubr.bf16.gmra.mrb[0].mxu0 %v1856
        %v1911 = vpop.f32.mrb[0].mxu0
        %v1912 = vadd.f32 0.0, %v1911
        %v1913 = vpop.f32.mrb[0].mxu0
        %v1914 = vpop.f32.mrb[0].mxu0
        %v1915 = vadd.f32 0.0, %v1914
        %v1916 = vpop.f32.mrb[0].mxu0
        %1917 = vmatprep.mubr.bf16.mxu0 0
        %1918 = vmatmul.mubr.bf16.gmra.mrb[0].mxu0 %v1859
        %v1919 = vpop.f32.mrb[0].mxu0
        %v1920 = vadd.f32 0.0, %v1919
        %v1921 = vpop.f32.mrb[0].mxu0
        %v1922 = vpop.f32.mrb[0].mxu0
        %v1923 = vadd.f32 0.0, %v1922
        %v1924 = vpop.f32.mrb[0].mxu0
        %1925 = vdwg.mxu0
        %v1926 = vadd.f32 %v1684, %v1896
        %v1927 = vadd.f32 %v1685, %v1899
        %v1928 = vadd.f32 %v1686, %v1904
        %v1929 = vadd.f32 %v1687, %v1907
        %v1930 = vadd.f32 %v1688, %v1912
        %v1931 = vadd.f32 %v1689, %v1915
        %v1932 = vadd.f32 %v1690, %v1920
        %v1933 = vadd.f32 %v1691, %v1923
        %v1934 = vld [vmem:[%s1561] sm:$0xe]
        %v1935 = vld [vmem:[%s1561 + $0x8] sm:$0xe]
        %v1936 = vld [vmem:[%s1561 + $0x10] sm:$0xe]
        %v1937 = vld [vmem:[%s1561 + $0x18] sm:$0xe]
        %v1938 = vld [vmem:[%s1561 + $0x20] sm:$0xe]
        %v1939 = vld [vmem:[%s1561 + $0x28] sm:$0xe]
        %v1940 = vld [vmem:[%s1561 + $0x30] sm:$0xe]
        %v1941 = vld [vmem:[%s1561 + $0x38] sm:$0xe]
        %v1958 = vrot.slane %v1934, 5
        %v1959 = vrot.slane %v1958, 4
        %v1960 = vrot.slane %v1693, 5
        %v1961 = vsel %vm872, %v1959, %v1960
        %v1962 = vrot.slane %v1935, 5
        %v1963 = vrot.slane %v1962, 4
        %v1964 = vrot.slane %v1695, 5
        %v1965 = vsel %vm872, %v1963, %v1964
        %v1966 = vrot.slane %v1936, 5
        %v1967 = vrot.slane %v1966, 4
        %v1968 = vrot.slane %v1697, 5
        %v1969 = vsel %vm872, %v1967, %v1968
        %v1970 = vrot.slane %v1937, 5
        %v1971 = vrot.slane %v1970, 4
        %v1972 = vrot.slane %v1699, 5
        %v1973 = vsel %vm872, %v1971, %v1972
        %v1974 = vrot.slane %v1938, 5
        %v1975 = vrot.slane %v1974, 4
        %v1976 = vrot.slane %v1701, 5
        %v1977 = vsel %vm872, %v1975, %v1976
        %v1978 = vrot.slane %v1939, 5
        %v1979 = vrot.slane %v1978, 4
        %v1980 = vrot.slane %v1703, 5
        %v1981 = vsel %vm872, %v1979, %v1980
        %v1982 = vrot.slane %v1940, 5
        %v1983 = vrot.slane %v1982, 4
        %v1984 = vrot.slane %v1705, 5
        %v1985 = vsel %vm872, %v1983, %v1984
        %v1986 = vrot.slane %v1941, 5
        %v1987 = vrot.slane %v1986, 4
        %v1988 = vrot.slane %v1707, 5
        %v1989 = vsel %vm872, %v1987, %v1988
        %s1990 = scalar_lea.vmem [#allocation7], 128
        %v1991 = vld [vmem:[%s1990] sm:$0xf]
        %v1992 = vld [vmem:[%s1990 + $0x4] sm:$0xf]
        %v1993 = vld [vmem:[%s1990 + $0x8] sm:$0xf]
        %v1994 = vld [vmem:[%s1990 + $0xc] sm:$0xf]
        %v1995 = vunpack.c.l.b16 %v1961
        %v1996 = vunpack.c.l.b16 %v1965
        %v1997 = vunpack.c.l.b16 %v1969
        %v1998 = vunpack.c.l.b16 %v1973
        %v1999 = vunpack.c.l.b16 %v1977
        %v2000 = vunpack.c.l.b16 %v1981
        %v2001 = vunpack.c.l.b16 %v1985
        %v2002 = vunpack.c.l.b16 %v1989
        %v2003 = vpack.c.b16 %v1996, %v1995
        %v2004 = vpack.c.b16 %v1998, %v1997
        %v2005 = vpack.c.b16 %v2000, %v1999
        %v2006 = vpack.c.b16 %v2002, %v2001
        %v2011 = vunpack.c.l.b16 %v1991
        %v2012 = vunpack.c.l.b16 %v1992
        %v2013 = vunpack.c.l.b16 %v1993
        %v2014 = vunpack.c.l.b16 %v1994
        %v2015 = vpack.c.b16 %v2012, %v2011
        %v2016 = vpack.c.b16 %v2014, %v2013
        %v2020 = vsel %vm659, %v2003, 0
        %v2023 = vsel %vm659, %v2004, 0
        %v2026 = vsel %vm659, %v2005, 0
        %v2029 = vsel %vm659, %v2006, 0
        %2031 = vmatprep.subr.bf16.mxu0 0
        %2032 = vmatpush1.bf16.msra.mxu0 %v2015
        %2033 = vmatprep.subr.bf16.mxu0 0
        %2034 = vmatpush1.bf16.msra.mxu0 %v2016
        %2035 = vmatprep.subr.bf16.mxu0 0
        %2036 = vmatpush1.bf16.msra.mxu0 0
        %2037 = vmatprep.subr.bf16.mxu0 0
        %2038 = vmatpush1.bf16.msra.mxu0 0
        %2039 = vmatprep.subr.bf16.mxu0 0
        %2040 = vmatpush1.bf16.msra.mxu0 0
        %2041 = vmatprep.subr.bf16.mxu0 0
        %2042 = vmatpush1.bf16.msra.mxu0 0
        %2043 = vmatprep.subr.bf16.mxu0 0
        %2044 = vmatpush1.bf16.msra.mxu0 0
        %2045 = vmatprep.subr.bf16.mxu0 0
        %2046 = vmatpush1.bf16.msra.mxu0 0
        %2047 = vmatprep.subr.bf16.mxu0 0
        %2048 = vmatpush1.bf16.msra.mxu0 0
        %2049 = vmatprep.subr.bf16.mxu0 0
        %2050 = vmatpush1.bf16.msra.mxu0 0
        %2051 = vmatprep.subr.bf16.mxu0 0
        %2052 = vmatpush1.bf16.msra.mxu0 0
        %2053 = vmatprep.subr.bf16.mxu0 0
        %2054 = vmatpush1.bf16.msra.mxu0 0
        %2055 = vmatprep.subr.bf16.mxu0 0
        %2056 = vmatpush1.bf16.msra.mxu0 0
        %2057 = vmatprep.subr.bf16.mxu0 0
        %2058 = vmatpush1.bf16.msra.mxu0 0
        %2059 = vmatprep.subr.bf16.mxu0 0
        %2060 = vmatpush1.bf16.msra.mxu0 0
        %2061 = vmatprep.subr.bf16.mxu0 0
        %2062 = vmatpush1.bf16.msra.mxu0 0
        %2063 = vmatprep.mubr.bf16.mxu0 0
        %2064 = vmatmul.mubr.bf16.gmra.mrb[0].mxu0 %v2020
        %v2065 = vpop.f32.mrb[0].mxu0
        %v2066 = vadd.f32 0.0, %v2065
        %v2067 = vpop.f32.mrb[0].mxu0
        %v2068 = vpop.f32.mrb[0].mxu0
        %v2069 = vadd.f32 0.0, %v2068
        %v2070 = vpop.f32.mrb[0].mxu0
        %2071 = vmatprep.mubr.bf16.mxu0 0
        %2072 = vmatmul.mubr.bf16.gmra.mrb[0].mxu0 %v2023
        %v2073 = vpop.f32.mrb[0].mxu0
        %v2074 = vadd.f32 0.0, %v2073
        %v2075 = vpop.f32.mrb[0].mxu0
        %v2076 = vpop.f32.mrb[0].mxu0
        %v2077 = vadd.f32 0.0, %v2076
        %v2078 = vpop.f32.mrb[0].mxu0
        %2079 = vmatprep.mubr.bf16.mxu0 0
        %2080 = vmatmul.mubr.bf16.gmra.mrb[0].mxu0 %v2026
        %v2081 = vpop.f32.mrb[0].mxu0
        %v2082 = vadd.f32 0.0, %v2081
        %v2083 = vpop.f32.mrb[0].mxu0
        %v2084 = vpop.f32.mrb[0].mxu0
        %v2085 = vadd.f32 0.0, %v2084
        %v2086 = vpop.f32.mrb[0].mxu0
        %2087 = vmatprep.mubr.bf16.mxu0 0
        %2088 = vmatmul.mubr.bf16.gmra.mrb[0].mxu0 %v2029
        %v2089 = vpop.f32.mrb[0].mxu0
        %v2090 = vadd.f32 0.0, %v2089
        %v2091 = vpop.f32.mrb[0].mxu0
        %v2092 = vpop.f32.mrb[0].mxu0
        %v2093 = vadd.f32 0.0, %v2092
        %v2094 = vpop.f32.mrb[0].mxu0
        %2095 = vdwg.mxu0
        %v2096 = vadd.f32 %v1926, %v2066
        %v2097 = vadd.f32 %v1927, %v2069
        %v2098 = vadd.f32 %v1928, %v2074
        %v2099 = vadd.f32 %v1929, %v2077
        %v2100 = vadd.f32 %v1930, %v2082
        %v2101 = vadd.f32 %v1931, %v2085
        %v2102 = vadd.f32 %v1932, %v2090
        %v2103 = vadd.f32 %v1933, %v2093
        %v2104 = vlaneseq
        %v2105 = vshrl.u32 %v2104, 7
        %v2106 = vsub.s32 0, %v2105
        %v2107 = vrot.slane %v294, %v2106
        %2109 = vrot.lane.b32.xlu0 %v2107, 64
        %v2110 = vpop.permute.xlu0 %2109
        %v2112 = vadd.f32 %v2096, %v2110
        %v2113 = vadd.f32 %v2097, %v2110
        %v2114 = vadd.f32 %v2098, %v2110
        %v2115 = vadd.f32 %v2099, %v2110
        %v2116 = vadd.f32 %v2100, %v2110
        %v2117 = vadd.f32 %v2101, %v2110
        %v2118 = vadd.f32 %v2102, %v2110
        %v2119 = vadd.f32 %v2103, %v2110
        %v2120 = vmax.f32 %v2112, 0.0
        %v2121 = vmax.f32 %v2113, 0.0
        %v2122 = vmax.f32 %v2114, 0.0
        %v2123 = vmax.f32 %v2115, 0.0
        %v2124 = vmax.f32 %v2116, 0.0
        %v2125 = vmax.f32 %v2117, 0.0
        %v2126 = vmax.f32 %v2118, 0.0
        %v2127 = vmax.f32 %v2119, 0.0
        %v2128 = vpack.c.bf16 %v2121, %v2120
        %v2129 = vpack.c.bf16 %v2123, %v2122
        %v2130 = vpack.c.bf16 %v2125, %v2124
        %v2131 = vpack.c.bf16 %v2127, %v2126
        %v2132 = vld [vmem:[#allocation10] sm:$0xf]
        %v2133 = vld [vmem:[#allocation10 + $0x4] sm:$0xf]
        %v2134 = vld [vmem:[#allocation10 + $0x8] sm:$0xf]
        %v2135 = vld [vmem:[#allocation10 + $0xc] sm:$0xf]
        %v2136 = vld [vmem:[#allocation10 + $0x10] sm:$0xf]
        %v2137 = vld [vmem:[#allocation10 + $0x14] sm:$0xf]
        %v2138 = vld [vmem:[#allocation10 + $0x18] sm:$0xf]
        %v2139 = vld [vmem:[#allocation10 + $0x1c] sm:$0xf]
        %v2140 = vlaneseq
        %v2141 = vshrl.u32 %v2140, 7
        %v2142 = vsub.s32 0, %v2141
        %v2143 = vrot.slane %v295, %v2142
        %2148 = vrot.lane.b32.xlu0 %v2128, 64
        %v2149 = vpop.permute.xlu0 %2148
        %2150 = vrot.lane.b32.xlu0 %v2129, 64
        %v2151 = vpop.permute.xlu0 %2150
        %2152 = vrot.lane.b32.xlu0 %v2130, 64
        %v2153 = vpop.permute.xlu0 %2152
        %2154 = vrot.lane.b32.xlu0 %v2131, 64
        %v2155 = vpop.permute.xlu0 %2154
        %v2164 = vunpack.c.l.b16 %v2132
        %v2165 = vunpack.c.l.b16 %v2133
        %v2166 = vunpack.c.l.b16 %v2134
        %v2167 = vunpack.c.l.b16 %v2135
        %v2168 = vunpack.c.l.b16 %v2136
        %v2169 = vunpack.c.l.b16 %v2137
        %v2170 = vunpack.c.l.b16 %v2138
        %v2171 = vunpack.c.l.b16 %v2139
        %v2172 = vpack.c.b16 %v2165, %v2164
        %v2173 = vpack.c.b16 %v2167, %v2166
        %v2174 = vpack.c.b16 %v2169, %v2168
        %v2175 = vpack.c.b16 %v2171, %v2170
        %vm2180 = vcmask 523264
        %v2182 = vsel %vm2180, %v2149, 0
        %v2185 = vsel %vm2180, %v2151, 0
        %v2188 = vsel %vm2180, %v2153, 0
        %v2191 = vsel %vm2180, %v2155, 0
        %2193 = vmatprep.subr.bf16.mxu0 0
        %2194 = vmatpush1.bf16.msra.mxu0 %v2172
        %2195 = vmatprep.subr.bf16.mxu0 0
        %2196 = vmatpush1.bf16.msra.mxu0 %v2173
        %2197 = vmatprep.subr.bf16.mxu0 0
        %2198 = vmatpush1.bf16.msra.mxu0 %v2174
        %2199 = vmatprep.subr.bf16.mxu0 0
        %2200 = vmatpush1.bf16.msra.mxu0 %v2175
        %2201 = vmatprep.subr.bf16.mxu0 0
        %2202 = vmatpush1.bf16.msra.mxu0 0
        %2203 = vmatprep.subr.bf16.mxu0 0
        %2204 = vmatpush1.bf16.msra.mxu0 0
        %2205 = vmatprep.subr.bf16.mxu0 0
        %2206 = vmatpush1.bf16.msra.mxu0 0
        %2207 = vmatprep.subr.bf16.mxu0 0
        %2208 = vmatpush1.bf16.msra.mxu0 0
        %2209 = vmatprep.subr.bf16.mxu0 0
        %2210 = vmatpush1.bf16.msra.mxu0 0
        %2211 = vmatprep.subr.bf16.mxu0 0
        %2212 = vmatpush1.bf16.msra.mxu0 0
        %2213 = vmatprep.subr.bf16.mxu0 0
        %2214 = vmatpush1.bf16.msra.mxu0 0
        %2215 = vmatprep.subr.bf16.mxu0 0
        %2216 = vmatpush1.bf16.msra.mxu0 0
        %2217 = vmatprep.subr.bf16.mxu0 0
        %2218 = vmatpush1.bf16.msra.mxu0 0
        %2219 = vmatprep.subr.bf16.mxu0 0
        %2220 = vmatpush1.bf16.msra.mxu0 0
        %2221 = vmatprep.subr.bf16.mxu0 0
        %2222 = vmatpush1.bf16.msra.mxu0 0
        %2223 = vmatprep.subr.bf16.mxu0 0
        %2224 = vmatpush1.bf16.msra.mxu0 0
        %2225 = vmatprep.mubr.bf16.mxu0 0
        %2226 = vmatmul.mubr.bf16.gmra.mrb[0].mxu0 %v2182
        %v2227 = vpop.f32.mrb[0].mxu0
        %v2228 = vadd.f32 %v2143, %v2227
        %v2229 = vpop.f32.mrb[0].mxu0
        %v2230 = vpop.f32.mrb[0].mxu0
        %v2231 = vadd.f32 %v2143, %v2230
        %v2232 = vpop.f32.mrb[0].mxu0
        %2233 = vmatprep.mubr.bf16.mxu0 0
        %2234 = vmatmul.mubr.bf16.gmra.mrb[0].mxu0 %v2185
        %v2235 = vpop.f32.mrb[0].mxu0
        %v2236 = vadd.f32 %v2143, %v2235
        %v2237 = vpop.f32.mrb[0].mxu0
        %v2238 = vpop.f32.mrb[0].mxu0
        %v2239 = vadd.f32 %v2143, %v2238
        %v2240 = vpop.f32.mrb[0].mxu0
        %2241 = vmatprep.mubr.bf16.mxu0 0
        %2242 = vmatmul.mubr.bf16.gmra.mrb[0].mxu0 %v2188
        %v2243 = vpop.f32.mrb[0].mxu0
        %v2244 = vadd.f32 %v2143, %v2243
        %v2245 = vpop.f32.mrb[0].mxu0
        %v2246 = vpop.f32.mrb[0].mxu0
        %v2247 = vadd.f32 %v2143, %v2246
        %v2248 = vpop.f32.mrb[0].mxu0
        %2249 = vmatprep.mubr.bf16.mxu0 0
        %2250 = vmatmul.mubr.bf16.gmra.mrb[0].mxu0 %v2191
        %v2251 = vpop.f32.mrb[0].mxu0
        %v2252 = vadd.f32 %v2143, %v2251
        %v2253 = vpop.f32.mrb[0].mxu0
        %v2254 = vpop.f32.mrb[0].mxu0
        %v2255 = vadd.f32 %v2143, %v2254
        %v2256 = vpop.f32.mrb[0].mxu0
        %2257 = vdwg.mxu0
        %v2258 = vxor.u32 %v2228, 2147483648
        %v2259 = vxor.u32 %v2231, 2147483648
        %v2260 = vxor.u32 %v2236, 2147483648
        %v2261 = vxor.u32 %v2239, 2147483648
        %v2262 = vxor.u32 %v2244, 2147483648
        %v2263 = vxor.u32 %v2247, 2147483648
        %v2264 = vxor.u32 %v2252, 2147483648
        %v2265 = vxor.u32 %v2255, 2147483648
        %v2266 = vmul.f32 %v2258, 1.442695
        %v2267 = vpow.pop %v2266
        %v2268 = vmul.f32 %v2259, 1.442695
        %v2269 = vpow.pop %v2268
        %v2270 = vmul.f32 %v2260, 1.442695
        %v2271 = vpow.pop %v2270
        %v2272 = vmul.f32 %v2261, 1.442695
        %v2273 = vpow.pop %v2272
        %v2274 = vmul.f32 %v2262, 1.442695
        %v2275 = vpow.pop %v2274
        %v2276 = vmul.f32 %v2263, 1.442695
        %v2277 = vpow.pop %v2276
        %v2278 = vmul.f32 %v2264, 1.442695
        %v2279 = vpow.pop %v2278
        %v2280 = vmul.f32 %v2265, 1.442695
        %v2281 = vpow.pop %v2280
        %v2282 = vadd.f32 %v2267, 1.0
        %v2283 = vadd.f32 %v2269, 1.0
        %v2284 = vadd.f32 %v2271, 1.0
        %v2285 = vadd.f32 %v2273, 1.0
        %v2286 = vadd.f32 %v2275, 1.0
        %v2287 = vadd.f32 %v2277, 1.0
        %v2288 = vadd.f32 %v2279, 1.0
        %v2289 = vadd.f32 %v2281, 1.0
        %v2290 = vrcp.pop %v2282
        %v2291 = vmul.f32 1.0, %v2290
        %v2292 = vrcp.pop %v2283
        %v2293 = vmul.f32 1.0, %v2292
        %v2294 = vrcp.pop %v2284
        %v2295 = vmul.f32 1.0, %v2294
        %v2296 = vrcp.pop %v2285
        %v2297 = vmul.f32 1.0, %v2296
        %v2298 = vrcp.pop %v2286
        %v2299 = vmul.f32 1.0, %v2298
        %v2300 = vrcp.pop %v2287
        %v2301 = vmul.f32 1.0, %v2300
        %v2302 = vrcp.pop %v2288
        %v2303 = vmul.f32 1.0, %v2302
        %v2304 = vrcp.pop %v2289
        %v2305 = vmul.f32 1.0, %v2304
        %v2306 = vadd.f32 %v2291, 1.0
        %v2307 = vadd.f32 %v2293, 1.0
        %v2308 = vadd.f32 %v2295, 1.0
        %v2309 = vadd.f32 %v2297, 1.0
        %v2310 = vadd.f32 %v2299, 1.0
        %v2311 = vadd.f32 %v2301, 1.0
        %v2312 = vadd.f32 %v2303, 1.0
        %v2313 = vadd.f32 %v2305, 1.0
        %v2314 = vlaneseq
        %v2315 = vshrl.u32 %v2314, 7
        %v2316 = vsub.s32 0, %v2315
        %v2317 = vrot.slane %v288, %v2316
        %v2318 = vadd.f32 %v2096, %v2317
        %v2319 = vadd.f32 %v2097, %v2317
        %v2320 = vadd.f32 %v2098, %v2317
        %v2321 = vadd.f32 %v2099, %v2317
        %v2322 = vadd.f32 %v2100, %v2317
        %v2323 = vadd.f32 %v2101, %v2317
        %v2324 = vadd.f32 %v2102, %v2317
        %v2325 = vadd.f32 %v2103, %v2317
        %v2326 = vlaneseq
        %v2327 = vshrl.u32 %v2326, 7
        %v2328 = vsub.s32 0, %v2327
        %v2329 = vrot.slane %v289, %v2328
        %v2330 = vmul.f32 %v2318, %v2329
        %v2331 = vmul.f32 %v2319, %v2329
        %v2332 = vmul.f32 %v2320, %v2329
        %v2333 = vmul.f32 %v2321, %v2329
        %v2334 = vmul.f32 %v2322, %v2329
        %v2335 = vmul.f32 %v2323, %v2329
        %v2336 = vmul.f32 %v2324, %v2329
        %v2337 = vmul.f32 %v2325, %v2329
        %v2338 = vlaneseq
        %v2339 = vshrl.u32 %v2338, 7
        %v2340 = vsub.s32 0, %v2339
        %v2341 = vrot.slane %v290, %v2340
        %v2342 = vadd.f32 %v2330, %v2341
        %v2343 = vadd.f32 %v2331, %v2341
        %v2344 = vadd.f32 %v2332, %v2341
        %v2345 = vadd.f32 %v2333, %v2341
        %v2346 = vadd.f32 %v2334, %v2341
        %v2347 = vadd.f32 %v2335, %v2341
        %v2348 = vadd.f32 %v2336, %v2341
        %v2349 = vadd.f32 %v2337, %v2341
        %v2350 = vmax.f32 %v2342, 0.0
        %v2351 = vmax.f32 %v2343, 0.0
        %v2352 = vmax.f32 %v2344, 0.0
        %v2353 = vmax.f32 %v2345, 0.0
        %v2354 = vmax.f32 %v2346, 0.0
        %v2355 = vmax.f32 %v2347, 0.0
        %v2356 = vmax.f32 %v2348, 0.0
        %v2357 = vmax.f32 %v2349, 0.0
        %vm2358 = vcmask 519168
        %2359 = vst.msk [vmem:[#allocation3] sm:$0xf] %vm2358, 0
        %vm2360 = vcmask 516096
        %2361 = vst.msk [vmem:[#allocation3 + $0x4] sm:$0x1] %vm2360, 0
        %s2362 = scalar_lea.vmem [#allocation3], 72
        %2363 = vst.msk [vmem:[%s2362] sm:$0xf] %vm2358, 0
        %2364 = vst.msk [vmem:[%s2362 + $0x4] sm:$0x1] %vm2360, 0
        %s2365 = scalar_lea.vmem [#allocation3], 8
        %vm2366 = vcmask 516096
        %vm2367 = vmand %vm2366, %vm313
        %v2368 = vld [vmem:[%s2365] sm:$0x1]
        %v2369 = vsel %vm2367, 0, %v2368
        %2370 = vst [vmem:[%s2365] sm:$0x1] %v2369
        %v2371 = vld [vmem:[%s2365 + $0x8] sm:$0x1]
        %v2372 = vsel %vm2367, 0, %v2371
        %2373 = vst [vmem:[%s2365 + $0x8] sm:$0x1] %v2372
        %v2374 = vld [vmem:[%s2365 + $0x10] sm:$0x1]
        %v2375 = vsel %vm2367, 0, %v2374
        %2376 = vst [vmem:[%s2365 + $0x10] sm:$0x1] %v2375
        %v2377 = vld [vmem:[%s2365 + $0x18] sm:$0x1]
        %v2378 = vsel %vm2367, 0, %v2377
        %2379 = vst [vmem:[%s2365 + $0x18] sm:$0x1] %v2378
        %v2380 = vld [vmem:[%s2365 + $0x20] sm:$0x1]
        %v2381 = vsel %vm2367, 0, %v2380
        %2382 = vst [vmem:[%s2365 + $0x20] sm:$0x1] %v2381
        %v2383 = vld [vmem:[%s2365 + $0x28] sm:$0x1]
        %v2384 = vsel %vm2367, 0, %v2383
        %2385 = vst [vmem:[%s2365 + $0x28] sm:$0x1] %v2384
        %v2386 = vld [vmem:[%s2365 + $0x30] sm:$0x1]
        %v2387 = vsel %vm2367, 0, %v2386
        %2388 = vst [vmem:[%s2365 + $0x30] sm:$0x1] %v2387
        %v2389 = vld [vmem:[%s2365 + $0x38] sm:$0x1]
        %v2390 = vsel %vm2367, 0, %v2389
        %2391 = vst [vmem:[%s2365 + $0x38] sm:$0x1] %v2390
        %vm2392 = vmand %vm2366, %vm339
        %v2393 = vld [vmem:[%s2365 + $0x4] sm:$0x1]
        %v2394 = vsel %vm2392, 0, %v2393
        %2395 = vst [vmem:[%s2365 + $0x4] sm:$0x1] %v2394
        %v2396 = vld [vmem:[%s2365 + $0xc] sm:$0x1]
        %v2397 = vsel %vm2392, 0, %v2396
        %2398 = vst [vmem:[%s2365 + $0xc] sm:$0x1] %v2397
        %v2399 = vld [vmem:[%s2365 + $0x14] sm:$0x1]
        %v2400 = vsel %vm2392, 0, %v2399
        %2401 = vst [vmem:[%s2365 + $0x14] sm:$0x1] %v2400
        %v2402 = vld [vmem:[%s2365 + $0x1c] sm:$0x1]
        %v2403 = vsel %vm2392, 0, %v2402
        %2404 = vst [vmem:[%s2365 + $0x1c] sm:$0x1] %v2403
        %v2405 = vld [vmem:[%s2365 + $0x24] sm:$0x1]
        %v2406 = vsel %vm2392, 0, %v2405
        %2407 = vst [vmem:[%s2365 + $0x24] sm:$0x1] %v2406
        %v2408 = vld [vmem:[%s2365 + $0x2c] sm:$0x1]
        %v2409 = vsel %vm2392, 0, %v2408
        %2410 = vst [vmem:[%s2365 + $0x2c] sm:$0x1] %v2409
        %v2411 = vld [vmem:[%s2365 + $0x34] sm:$0x1]
        %v2412 = vsel %vm2392, 0, %v2411
        %2413 = vst [vmem:[%s2365 + $0x34] sm:$0x1] %v2412
        %v2414 = vld [vmem:[%s2365 + $0x3c] sm:$0x1]
        %v2415 = vsel %vm2392, 0, %v2414
        %2416 = vst [vmem:[%s2365 + $0x3c] sm:$0x1] %v2415
        %v2417 = vpack.c.bf16 %v2350, %v2350
        %v2418 = vpack.c.bf16 %v2351, %v2351
        %v2419 = vpack.c.bf16 %v2352, %v2352
        %v2420 = vpack.c.bf16 %v2353, %v2353
        %v2421 = vpack.c.bf16 %v2354, %v2354
        %v2422 = vpack.c.bf16 %v2355, %v2355
        %v2423 = vpack.c.bf16 %v2356, %v2356
        %v2424 = vpack.c.bf16 %v2357, %v2357
        %v2433 = vunpack.c.l.b16 %v2417
        %v2434 = vunpack.c.l.b16 %v2418
        %v2435 = vunpack.c.l.b16 %v2419
        %v2436 = vunpack.c.l.b16 %v2420
        %v2437 = vunpack.c.l.b16 %v2421
        %v2438 = vunpack.c.l.b16 %v2422
        %v2439 = vunpack.c.l.b16 %v2423
        %v2440 = vunpack.c.l.b16 %v2424
        %v2441 = vpack.c.b16 %v2433, %v2433
        %v2442 = vpack.c.b16 %v2434, %v2434
        %v2443 = vpack.c.b16 %v2435, %v2435
        %v2444 = vpack.c.b16 %v2436, %v2436
        %v2445 = vpack.c.b16 %v2437, %v2437
        %v2446 = vpack.c.b16 %v2438, %v2438
        %v2447 = vpack.c.b16 %v2439, %v2439
        %v2448 = vpack.c.b16 %v2440, %v2440
        %v2450 = vshrl.u32 %v2441, 16
        %v2452 = vrot.slane %v2450, 7
        %v2453 = vshll.u32 %v2441, 16
        %v2455 = vor.u32 %v2452, %v2453
        %v2456 = vrot.slane %v2452, 4
        %v2458 = vshrl.u32 %v2442, 16
        %v2460 = vrot.slane %v2458, 7
        %v2461 = vshll.u32 %v2442, 16
        %v2463 = vor.u32 %v2460, %v2461
        %v2464 = vrot.slane %v2460, 4
        %v2466 = vshrl.u32 %v2443, 16
        %v2468 = vrot.slane %v2466, 7
        %v2469 = vshll.u32 %v2443, 16
        %v2471 = vor.u32 %v2468, %v2469
        %v2472 = vrot.slane %v2468, 4
        %v2474 = vshrl.u32 %v2444, 16
        %v2476 = vrot.slane %v2474, 7
        %v2477 = vshll.u32 %v2444, 16
        %v2479 = vor.u32 %v2476, %v2477
        %v2480 = vrot.slane %v2476, 4
        %v2482 = vshrl.u32 %v2445, 16
        %v2484 = vrot.slane %v2482, 7
        %v2485 = vshll.u32 %v2445, 16
        %v2487 = vor.u32 %v2484, %v2485
        %v2488 = vrot.slane %v2484, 4
        %v2490 = vshrl.u32 %v2446, 16
        %v2492 = vrot.slane %v2490, 7
        %v2493 = vshll.u32 %v2446, 16
        %v2495 = vor.u32 %v2492, %v2493
        %v2496 = vrot.slane %v2492, 4
        %v2498 = vshrl.u32 %v2447, 16
        %v2500 = vrot.slane %v2498, 7
        %v2501 = vshll.u32 %v2447, 16
        %v2503 = vor.u32 %v2500, %v2501
        %v2504 = vrot.slane %v2500, 4
        %v2506 = vshrl.u32 %v2448, 16
        %v2508 = vrot.slane %v2506, 7
        %v2509 = vshll.u32 %v2448, 16
        %v2511 = vor.u32 %v2508, %v2509
        %v2512 = vrot.slane %v2508, 4
        %vm2529 = vcmask 519168
        %vm2530 = vmand %vm2529, %vm339
        %v2531 = vld [vmem:[%s2365] sm:$0xf]
        %v2532 = vsel %vm2530, %v2455, %v2531
        %2533 = vst [vmem:[%s2365] sm:$0xf] %v2532
        %v2534 = vld [vmem:[%s2365 + $0x4] sm:$0x1]
        %v2535 = vsel %vm2367, %v2456, %v2534
        %2536 = vst [vmem:[%s2365 + $0x4] sm:$0x1] %v2535
        %v2537 = vld [vmem:[%s2365 + $0x8] sm:$0xf]
        %v2538 = vsel %vm2530, %v2463, %v2537
        %2539 = vst [vmem:[%s2365 + $0x8] sm:$0xf] %v2538
        %v2540 = vld [vmem:[%s2365 + $0xc] sm:$0x1]
        %v2541 = vsel %vm2367, %v2464, %v2540
        %2542 = vst [vmem:[%s2365 + $0xc] sm:$0x1] %v2541
        %v2543 = vld [vmem:[%s2365 + $0x10] sm:$0xf]
        %v2544 = vsel %vm2530, %v2471, %v2543
        %2545 = vst [vmem:[%s2365 + $0x10] sm:$0xf] %v2544
        %v2546 = vld [vmem:[%s2365 + $0x14] sm:$0x1]
        %v2547 = vsel %vm2367, %v2472, %v2546
        %2548 = vst [vmem:[%s2365 + $0x14] sm:$0x1] %v2547
        %v2549 = vld [vmem:[%s2365 + $0x18] sm:$0xf]
        %v2550 = vsel %vm2530, %v2479, %v2549
        %2551 = vst [vmem:[%s2365 + $0x18] sm:$0xf] %v2550
        %v2552 = vld [vmem:[%s2365 + $0x1c] sm:$0x1]
        %v2553 = vsel %vm2367, %v2480, %v2552
        %2554 = vst [vmem:[%s2365 + $0x1c] sm:$0x1] %v2553
        %v2555 = vld [vmem:[%s2365 + $0x20] sm:$0xf]
        %v2556 = vsel %vm2530, %v2487, %v2555
        %2557 = vst [vmem:[%s2365 + $0x20] sm:$0xf] %v2556
        %v2558 = vld [vmem:[%s2365 + $0x24] sm:$0x1]
        %v2559 = vsel %vm2367, %v2488, %v2558
        %2560 = vst [vmem:[%s2365 + $0x24] sm:$0x1] %v2559
        %v2561 = vld [vmem:[%s2365 + $0x28] sm:$0xf]
        %v2562 = vsel %vm2530, %v2495, %v2561
        %2563 = vst [vmem:[%s2365 + $0x28] sm:$0xf] %v2562
        %v2564 = vld [vmem:[%s2365 + $0x2c] sm:$0x1]
        %v2565 = vsel %vm2367, %v2496, %v2564
        %2566 = vst [vmem:[%s2365 + $0x2c] sm:$0x1] %v2565
        %v2567 = vld [vmem:[%s2365 + $0x30] sm:$0xf]
        %v2568 = vsel %vm2530, %v2503, %v2567
        %2569 = vst [vmem:[%s2365 + $0x30] sm:$0xf] %v2568
        %v2570 = vld [vmem:[%s2365 + $0x34] sm:$0x1]
        %v2571 = vsel %vm2367, %v2504, %v2570
        %2572 = vst [vmem:[%s2365 + $0x34] sm:$0x1] %v2571
        %v2573 = vld [vmem:[%s2365 + $0x38] sm:$0xf]
        %v2574 = vsel %vm2530, %v2511, %v2573
        %2575 = vst [vmem:[%s2365 + $0x38] sm:$0xf] %v2574
        %v2576 = vld [vmem:[%s2365 + $0x3c] sm:$0x1]
        %v2577 = vsel %vm2367, %v2512, %v2576
        %2578 = vst [vmem:[%s2365 + $0x3c] sm:$0x1] %v2577
        %v2579 = vld [vmem:[#allocation3] sm:$0xf]
        %v2580 = vld [vmem:[#allocation3 + $0x8] sm:$0xf]
        %v2581 = vld [vmem:[#allocation3 + $0x10] sm:$0xf]
        %v2582 = vld [vmem:[#allocation3 + $0x18] sm:$0xf]
        %v2583 = vld [vmem:[#allocation3 + $0x20] sm:$0xf]
        %v2584 = vld [vmem:[#allocation3 + $0x28] sm:$0xf]
        %v2585 = vld [vmem:[#allocation3 + $0x30] sm:$0xf]
        %v2586 = vld [vmem:[#allocation3 + $0x38] sm:$0xf]
        %v2587 = vld [vmem:[#allocation9] sm:$0xf]
        %v2588 = vld [vmem:[#allocation9 + $0x4] sm:$0xf]
        %v2589 = vld [vmem:[#allocation9 + $0x8] sm:$0xf]
        %v2590 = vld [vmem:[#allocation9 + $0xc] sm:$0xf]
        %v2591 = vld [vmem:[#allocation9 + $0x10] sm:$0xf]
        %v2592 = vld [vmem:[#allocation9 + $0x14] sm:$0xf]
        %v2593 = vld [vmem:[#allocation9 + $0x18] sm:$0xf]
        %v2594 = vld [vmem:[#allocation9 + $0x1c] sm:$0xf]
        %v2595 = vld [vmem:[#allocation3 + $0x4] sm:$0x1]
        %v2596 = vld [vmem:[#allocation3 + $0xc] sm:$0x1]
        %v2597 = vld [vmem:[#allocation3 + $0x14] sm:$0x1]
        %v2598 = vld [vmem:[#allocation3 + $0x1c] sm:$0x1]
        %v2599 = vld [vmem:[#allocation3 + $0x24] sm:$0x1]
        %v2600 = vld [vmem:[#allocation3 + $0x2c] sm:$0x1]
        %v2601 = vld [vmem:[#allocation3 + $0x34] sm:$0x1]
        %v2602 = vld [vmem:[#allocation3 + $0x3c] sm:$0x1]
        %v2604 = vshrl.u32 %v2579, 16
        %v2606 = vrot.slane %v2604, 4
        %v2607 = vshll.u32 %v2579, 16
        %v2609 = vrot.slane %v2607, 5
        %v2610 = vor.u32 %v2606, %v2609
        %v2611 = vrot.slane %v2610, 4
        %v2613 = vshll.u32 %v2595, 16
        %v2615 = vrot.slane %v2613, 5
        %v2616 = vsel %vm517, %v2611, %v2615
        %v2618 = vshrl.u32 %v2580, 16
        %v2620 = vrot.slane %v2618, 4
        %v2621 = vshll.u32 %v2580, 16
        %v2623 = vrot.slane %v2621, 5
        %v2624 = vor.u32 %v2620, %v2623
        %v2625 = vrot.slane %v2624, 4
        %v2627 = vshll.u32 %v2596, 16
        %v2629 = vrot.slane %v2627, 5
        %v2630 = vsel %vm517, %v2625, %v2629
        %v2632 = vshrl.u32 %v2581, 16
        %v2634 = vrot.slane %v2632, 4
        %v2635 = vshll.u32 %v2581, 16
        %v2637 = vrot.slane %v2635, 5
        %v2638 = vor.u32 %v2634, %v2637
        %v2639 = vrot.slane %v2638, 4
        %v2641 = vshll.u32 %v2597, 16
        %v2643 = vrot.slane %v2641, 5
        %v2644 = vsel %vm517, %v2639, %v2643
        %v2646 = vshrl.u32 %v2582, 16
        %v2648 = vrot.slane %v2646, 4
        %v2649 = vshll.u32 %v2582, 16
        %v2651 = vrot.slane %v2649, 5
        %v2652 = vor.u32 %v2648, %v2651
        %v2653 = vrot.slane %v2652, 4
        %v2655 = vshll.u32 %v2598, 16
        %v2657 = vrot.slane %v2655, 5
        %v2658 = vsel %vm517, %v2653, %v2657
        %v2660 = vshrl.u32 %v2583, 16
        %v2662 = vrot.slane %v2660, 4
        %v2663 = vshll.u32 %v2583, 16
        %v2665 = vrot.slane %v2663, 5
        %v2666 = vor.u32 %v2662, %v2665
        %v2667 = vrot.slane %v2666, 4
        %v2669 = vshll.u32 %v2599, 16
        %v2671 = vrot.slane %v2669, 5
        %v2672 = vsel %vm517, %v2667, %v2671
        %v2674 = vshrl.u32 %v2584, 16
        %v2676 = vrot.slane %v2674, 4
        %v2677 = vshll.u32 %v2584, 16
        %v2679 = vrot.slane %v2677, 5
        %v2680 = vor.u32 %v2676, %v2679
        %v2681 = vrot.slane %v2680, 4
        %v2683 = vshll.u32 %v2600, 16
        %v2685 = vrot.slane %v2683, 5
        %v2686 = vsel %vm517, %v2681, %v2685
        %v2688 = vshrl.u32 %v2585, 16
        %v2690 = vrot.slane %v2688, 4
        %v2691 = vshll.u32 %v2585, 16
        %v2693 = vrot.slane %v2691, 5
        %v2694 = vor.u32 %v2690, %v2693
        %v2695 = vrot.slane %v2694, 4
        %v2697 = vshll.u32 %v2601, 16
        %v2699 = vrot.slane %v2697, 5
        %v2700 = vsel %vm517, %v2695, %v2699
        %v2702 = vshrl.u32 %v2586, 16
        %v2704 = vrot.slane %v2702, 4
        %v2705 = vshll.u32 %v2586, 16
        %v2707 = vrot.slane %v2705, 5
        %v2708 = vor.u32 %v2704, %v2707
        %v2709 = vrot.slane %v2708, 4
        %v2711 = vshll.u32 %v2602, 16
        %v2713 = vrot.slane %v2711, 5
        %v2714 = vsel %vm517, %v2709, %v2713
        %s2715 = scalar_lea.vmem [#allocation9], 32
        %v2716 = vld [vmem:[%s2715] sm:$0xf]
        %v2717 = vld [vmem:[%s2715 + $0x4] sm:$0xf]
        %v2718 = vld [vmem:[%s2715 + $0x8] sm:$0xf]
        %v2719 = vld [vmem:[%s2715 + $0xc] sm:$0xf]
        %v2720 = vld [vmem:[%s2715 + $0x10] sm:$0xf]
        %v2721 = vld [vmem:[%s2715 + $0x14] sm:$0xf]
        %v2722 = vld [vmem:[%s2715 + $0x18] sm:$0xf]
        %v2723 = vld [vmem:[%s2715 + $0x1c] sm:$0xf]
        %v2724 = vunpack.c.l.b16 %v2616
        %v2725 = vunpack.c.l.b16 %v2630
        %v2726 = vunpack.c.l.b16 %v2644
        %v2727 = vunpack.c.l.b16 %v2658
        %v2728 = vunpack.c.l.b16 %v2672
        %v2729 = vunpack.c.l.b16 %v2686
        %v2730 = vunpack.c.l.b16 %v2700
        %v2731 = vunpack.c.l.b16 %v2714
        %v2732 = vpack.c.b16 %v2725, %v2724
        %v2733 = vpack.c.b16 %v2727, %v2726
        %v2734 = vpack.c.b16 %v2729, %v2728
        %v2735 = vpack.c.b16 %v2731, %v2730
        %v2744 = vunpack.c.l.b16 %v2716
        %v2745 = vunpack.c.l.b16 %v2717
        %v2746 = vunpack.c.l.b16 %v2718
        %v2747 = vunpack.c.l.b16 %v2719
        %v2748 = vunpack.c.l.b16 %v2720
        %v2749 = vunpack.c.l.b16 %v2721
        %v2750 = vunpack.c.l.b16 %v2722
        %v2751 = vunpack.c.l.b16 %v2723
        %v2752 = vpack.c.b16 %v2745, %v2744
        %v2753 = vpack.c.b16 %v2747, %v2746
        %v2754 = vpack.c.b16 %v2749, %v2748
        %v2755 = vpack.c.b16 %v2751, %v2750
        %v2761 = vsel %vm2180, %v2732, 0
        %v2764 = vsel %vm2180, %v2733, 0
        %v2767 = vsel %vm2180, %v2734, 0
        %v2770 = vsel %vm2180, %v2735, 0
        %2772 = vmatprep.subr.bf16.mxu0 0
        %2773 = vmatpush1.bf16.msra.mxu0 %v2752
        %2774 = vmatprep.subr.bf16.mxu0 0
        %2775 = vmatpush1.bf16.msra.mxu0 %v2753
        %2776 = vmatprep.subr.bf16.mxu0 0
        %2777 = vmatpush1.bf16.msra.mxu0 %v2754
        %2778 = vmatprep.subr.bf16.mxu0 0
        %2779 = vmatpush1.bf16.msra.mxu0 %v2755
        %2780 = vmatprep.subr.bf16.mxu0 0
        %2781 = vmatpush1.bf16.msra.mxu0 0
        %2782 = vmatprep.subr.bf16.mxu0 0
        %2783 = vmatpush1.bf16.msra.mxu0 0
        %2784 = vmatprep.subr.bf16.mxu0 0
        %2785 = vmatpush1.bf16.msra.mxu0 0
        %2786 = vmatprep.subr.bf16.mxu0 0
        %2787 = vmatpush1.bf16.msra.mxu0 0
        %2788 = vmatprep.subr.bf16.mxu0 0
        %2789 = vmatpush1.bf16.msra.mxu0 0
        %2790 = vmatprep.subr.bf16.mxu0 0
        %2791 = vmatpush1.bf16.msra.mxu0 0
        %2792 = vmatprep.subr.bf16.mxu0 0
        %2793 = vmatpush1.bf16.msra.mxu0 0
        %2794 = vmatprep.subr.bf16.mxu0 0
        %2795 = vmatpush1.bf16.msra.mxu0 0
        %2796 = vmatprep.subr.bf16.mxu0 0
        %2797 = vmatpush1.bf16.msra.mxu0 0
        %2798 = vmatprep.subr.bf16.mxu0 0
        %2799 = vmatpush1.bf16.msra.mxu0 0
        %2800 = vmatprep.subr.bf16.mxu0 0
        %2801 = vmatpush1.bf16.msra.mxu0 0
        %2802 = vmatprep.subr.bf16.mxu0 0
        %2803 = vmatpush1.bf16.msra.mxu0 0
        %2804 = vmatprep.mubr.bf16.mxu0 0
        %2805 = vmatmul.mubr.bf16.gmra.mrb[0].mxu0 %v2761
        %v2806 = vpop.f32.mrb[0].mxu0
        %v2807 = vadd.f32 0.0, %v2806
        %v2808 = vpop.f32.mrb[0].mxu0
        %v2809 = vpop.f32.mrb[0].mxu0
        %v2810 = vadd.f32 0.0, %v2809
        %v2811 = vpop.f32.mrb[0].mxu0
        %2812 = vmatprep.mubr.bf16.mxu0 0
        %2813 = vmatmul.mubr.bf16.gmra.mrb[0].mxu0 %v2764
        %v2814 = vpop.f32.mrb[0].mxu0
        %v2815 = vadd.f32 0.0, %v2814
        %v2816 = vpop.f32.mrb[0].mxu0
        %v2817 = vpop.f32.mrb[0].mxu0
        %v2818 = vadd.f32 0.0, %v2817
        %v2819 = vpop.f32.mrb[0].mxu0
        %2820 = vmatprep.mubr.bf16.mxu0 0
        %2821 = vmatmul.mubr.bf16.gmra.mrb[0].mxu0 %v2767
        %v2822 = vpop.f32.mrb[0].mxu0
        %v2823 = vadd.f32 0.0, %v2822
        %v2824 = vpop.f32.mrb[0].mxu0
        %v2825 = vpop.f32.mrb[0].mxu0
        %v2826 = vadd.f32 0.0, %v2825
        %v2827 = vpop.f32.mrb[0].mxu0
        %2828 = vmatprep.mubr.bf16.mxu0 0
        %2829 = vmatmul.mubr.bf16.gmra.mrb[0].mxu0 %v2770
        %v2830 = vpop.f32.mrb[0].mxu0
        %v2831 = vadd.f32 0.0, %v2830
        %v2832 = vpop.f32.mrb[0].mxu0
        %v2833 = vpop.f32.mrb[0].mxu0
        %v2834 = vadd.f32 0.0, %v2833
        %v2835 = vpop.f32.mrb[0].mxu0
        %2836 = vdwg.mxu0
        %v2845 = vunpack.c.l.b16 %v2579
        %v2846 = vunpack.c.l.b16 %v2580
        %v2847 = vunpack.c.l.b16 %v2581
        %v2848 = vunpack.c.l.b16 %v2582
        %v2849 = vunpack.c.l.b16 %v2583
        %v2850 = vunpack.c.l.b16 %v2584
        %v2851 = vunpack.c.l.b16 %v2585
        %v2852 = vunpack.c.l.b16 %v2586
        %v2853 = vpack.c.b16 %v2846, %v2845
        %v2854 = vpack.c.b16 %v2848, %v2847
        %v2855 = vpack.c.b16 %v2850, %v2849
        %v2856 = vpack.c.b16 %v2852, %v2851
        %v2865 = vunpack.c.l.b16 %v2587
        %v2866 = vunpack.c.l.b16 %v2588
        %v2867 = vunpack.c.l.b16 %v2589
        %v2868 = vunpack.c.l.b16 %v2590
        %v2869 = vunpack.c.l.b16 %v2591
        %v2870 = vunpack.c.l.b16 %v2592
        %v2871 = vunpack.c.l.b16 %v2593
        %v2872 = vunpack.c.l.b16 %v2594
        %v2873 = vpack.c.b16 %v2866, %v2865
        %v2874 = vpack.c.b16 %v2868, %v2867
        %v2875 = vpack.c.b16 %v2870, %v2869
        %v2876 = vpack.c.b16 %v2872, %v2871
        %v2882 = vsel %vm2180, %v2853, 0
        %v2885 = vsel %vm2180, %v2854, 0
        %v2888 = vsel %vm2180, %v2855, 0
        %v2891 = vsel %vm2180, %v2856, 0
        %2893 = vmatprep.subr.bf16.mxu0 0
        %2894 = vmatpush1.bf16.msra.mxu0 %v2873
        %2895 = vmatprep.subr.bf16.mxu0 0
        %2896 = vmatpush1.bf16.msra.mxu0 %v2874
        %2897 = vmatprep.subr.bf16.mxu0 0
        %2898 = vmatpush1.bf16.msra.mxu0 %v2875
        %2899 = vmatprep.subr.bf16.mxu0 0
        %2900 = vmatpush1.bf16.msra.mxu0 %v2876
        %2901 = vmatprep.subr.bf16.mxu0 0
        %2902 = vmatpush1.bf16.msra.mxu0 0
        %2903 = vmatprep.subr.bf16.mxu0 0
        %2904 = vmatpush1.bf16.msra.mxu0 0
        %2905 = vmatprep.subr.bf16.mxu0 0
        %2906 = vmatpush1.bf16.msra.mxu0 0
        %2907 = vmatprep.subr.bf16.mxu0 0
        %2908 = vmatpush1.bf16.msra.mxu0 0
        %2909 = vmatprep.subr.bf16.mxu0 0
        %2910 = vmatpush1.bf16.msra.mxu0 0
        %2911 = vmatprep.subr.bf16.mxu0 0
        %2912 = vmatpush1.bf16.msra.mxu0 0
        %2913 = vmatprep.subr.bf16.mxu0 0
        %2914 = vmatpush1.bf16.msra.mxu0 0
        %2915 = vmatprep.subr.bf16.mxu0 0
        %2916 = vmatpush1.bf16.msra.mxu0 0
        %2917 = vmatprep.subr.bf16.mxu0 0
        %2918 = vmatpush1.bf16.msra.mxu0 0
        %2919 = vmatprep.subr.bf16.mxu0 0
        %2920 = vmatpush1.bf16.msra.mxu0 0
        %2921 = vmatprep.subr.bf16.mxu0 0
        %2922 = vmatpush1.bf16.msra.mxu0 0
        %2923 = vmatprep.subr.bf16.mxu0 0
        %2924 = vmatpush1.bf16.msra.mxu0 0
        %2925 = vmatprep.mubr.bf16.mxu0 0
        %2926 = vmatmul.mubr.bf16.gmra.mrb[0].mxu0 %v2882
        %v2927 = vpop.f32.mrb[0].mxu0
        %v2928 = vadd.f32 %v2807, %v2927
        %v2929 = vpop.f32.mrb[0].mxu0
        %v2930 = vpop.f32.mrb[0].mxu0
        %v2931 = vadd.f32 %v2810, %v2930
        %v2932 = vpop.f32.mrb[0].mxu0
        %2933 = vmatprep.mubr.bf16.mxu0 0
        %2934 = vmatmul.mubr.bf16.gmra.mrb[0].mxu0 %v2885
        %v2935 = vpop.f32.mrb[0].mxu0
        %v2936 = vadd.f32 %v2815, %v2935
        %v2937 = vpop.f32.mrb[0].mxu0
        %v2938 = vpop.f32.mrb[0].mxu0
        %v2939 = vadd.f32 %v2818, %v2938
        %v2940 = vpop.f32.mrb[0].mxu0
        %2941 = vmatprep.mubr.bf16.mxu0 0
        %2942 = vmatmul.mubr.bf16.gmra.mrb[0].mxu0 %v2888
        %v2943 = vpop.f32.mrb[0].mxu0
        %v2944 = vadd.f32 %v2823, %v2943
        %v2945 = vpop.f32.mrb[0].mxu0
        %v2946 = vpop.f32.mrb[0].mxu0
        %v2947 = vadd.f32 %v2826, %v2946
        %v2948 = vpop.f32.mrb[0].mxu0
        %2949 = vmatprep.mubr.bf16.mxu0 0
        %2950 = vmatmul.mubr.bf16.gmra.mrb[0].mxu0 %v2891
        %v2951 = vpop.f32.mrb[0].mxu0
        %v2952 = vadd.f32 %v2831, %v2951
        %v2953 = vpop.f32.mrb[0].mxu0
        %v2954 = vpop.f32.mrb[0].mxu0
        %v2955 = vadd.f32 %v2834, %v2954
        %v2956 = vpop.f32.mrb[0].mxu0
        %2957 = vdwg.mxu0
        %v2958 = vld [vmem:[#allocation3] sm:$0xe]
        %v2959 = vld [vmem:[#allocation3 + $0x8] sm:$0xe]
        %v2960 = vld [vmem:[#allocation3 + $0x10] sm:$0xe]
        %v2961 = vld [vmem:[#allocation3 + $0x18] sm:$0xe]
        %v2962 = vld [vmem:[#allocation3 + $0x20] sm:$0xe]
        %v2963 = vld [vmem:[#allocation3 + $0x28] sm:$0xe]
        %v2964 = vld [vmem:[#allocation3 + $0x30] sm:$0xe]
        %v2965 = vld [vmem:[#allocation3 + $0x38] sm:$0xe]
        %v2982 = vrot.slane %v2958, 5
        %v2983 = vrot.slane %v2982, 4
        %v2984 = vrot.slane %v2595, 5
        %v2985 = vsel %vm872, %v2983, %v2984
        %v2986 = vrot.slane %v2959, 5
        %v2987 = vrot.slane %v2986, 4
        %v2988 = vrot.slane %v2596, 5
        %v2989 = vsel %vm872, %v2987, %v2988
        %v2990 = vrot.slane %v2960, 5
        %v2991 = vrot.slane %v2990, 4
        %v2992 = vrot.slane %v2597, 5
        %v2993 = vsel %vm872, %v2991, %v2992
        %v2994 = vrot.slane %v2961, 5
        %v2995 = vrot.slane %v2994, 4
        %v2996 = vrot.slane %v2598, 5
        %v2997 = vsel %vm872, %v2995, %v2996
        %v2998 = vrot.slane %v2962, 5
        %v2999 = vrot.slane %v2998, 4
        %v3000 = vrot.slane %v2599, 5
        %v3001 = vsel %vm872, %v2999, %v3000
        %v3002 = vrot.slane %v2963, 5
        %v3003 = vrot.slane %v3002, 4
        %v3004 = vrot.slane %v2600, 5
        %v3005 = vsel %vm872, %v3003, %v3004
        %v3006 = vrot.slane %v2964, 5
        %v3007 = vrot.slane %v3006, 4
        %v3008 = vrot.slane %v2601, 5
        %v3009 = vsel %vm872, %v3007, %v3008
        %v3010 = vrot.slane %v2965, 5
        %v3011 = vrot.slane %v3010, 4
        %v3012 = vrot.slane %v2602, 5
        %v3013 = vsel %vm872, %v3011, %v3012
        %s3014 = scalar_lea.vmem [#allocation9], 64
        %v3015 = vld [vmem:[%s3014] sm:$0xf]
        %v3016 = vld [vmem:[%s3014 + $0x4] sm:$0xf]
        %v3017 = vld [vmem:[%s3014 + $0x8] sm:$0xf]
        %v3018 = vld [vmem:[%s3014 + $0xc] sm:$0xf]
        %v3019 = vld [vmem:[%s3014 + $0x10] sm:$0xf]
        %v3020 = vld [vmem:[%s3014 + $0x14] sm:$0xf]
        %v3021 = vld [vmem:[%s3014 + $0x18] sm:$0xf]
        %v3022 = vld [vmem:[%s3014 + $0x1c] sm:$0xf]
        %v3023 = vunpack.c.l.b16 %v2985
        %v3024 = vunpack.c.l.b16 %v2989
        %v3025 = vunpack.c.l.b16 %v2993
        %v3026 = vunpack.c.l.b16 %v2997
        %v3027 = vunpack.c.l.b16 %v3001
        %v3028 = vunpack.c.l.b16 %v3005
        %v3029 = vunpack.c.l.b16 %v3009
        %v3030 = vunpack.c.l.b16 %v3013
        %v3031 = vpack.c.b16 %v3024, %v3023
        %v3032 = vpack.c.b16 %v3026, %v3025
        %v3033 = vpack.c.b16 %v3028, %v3027
        %v3034 = vpack.c.b16 %v3030, %v3029
        %v3043 = vunpack.c.l.b16 %v3015
        %v3044 = vunpack.c.l.b16 %v3016
        %v3045 = vunpack.c.l.b16 %v3017
        %v3046 = vunpack.c.l.b16 %v3018
        %v3047 = vunpack.c.l.b16 %v3019
        %v3048 = vunpack.c.l.b16 %v3020
        %v3049 = vunpack.c.l.b16 %v3021
        %v3050 = vunpack.c.l.b16 %v3022
        %v3051 = vpack.c.b16 %v3044, %v3043
        %v3052 = vpack.c.b16 %v3046, %v3045
        %v3053 = vpack.c.b16 %v3048, %v3047
        %v3054 = vpack.c.b16 %v3050, %v3049
        %v3060 = vsel %vm2180, %v3031, 0
        %v3063 = vsel %vm2180, %v3032, 0
        %v3066 = vsel %vm2180, %v3033, 0
        %v3069 = vsel %vm2180, %v3034, 0
        %3071 = vmatprep.subr.bf16.mxu0 0
        %3072 = vmatpush1.bf16.msra.mxu0 %v3051
        %3073 = vmatprep.subr.bf16.mxu0 0
        %3074 = vmatpush1.bf16.msra.mxu0 %v3052
        %3075 = vmatprep.subr.bf16.mxu0 0
        %3076 = vmatpush1.bf16.msra.mxu0 %v3053
        %3077 = vmatprep.subr.bf16.mxu0 0
        %3078 = vmatpush1.bf16.msra.mxu0 %v3054
        %3079 = vmatprep.subr.bf16.mxu0 0
        %3080 = vmatpush1.bf16.msra.mxu0 0
        %3081 = vmatprep.subr.bf16.mxu0 0
        %3082 = vmatpush1.bf16.msra.mxu0 0
        %3083 = vmatprep.subr.bf16.mxu0 0
        %3084 = vmatpush1.bf16.msra.mxu0 0
        %3085 = vmatprep.subr.bf16.mxu0 0
        %3086 = vmatpush1.bf16.msra.mxu0 0
        %3087 = vmatprep.subr.bf16.mxu0 0
        %3088 = vmatpush1.bf16.msra.mxu0 0
        %3089 = vmatprep.subr.bf16.mxu0 0
        %3090 = vmatpush1.bf16.msra.mxu0 0
        %3091 = vmatprep.subr.bf16.mxu0 0
        %3092 = vmatpush1.bf16.msra.mxu0 0
        %3093 = vmatprep.subr.bf16.mxu0 0
        %3094 = vmatpush1.bf16.msra.mxu0 0
        %3095 = vmatprep.subr.bf16.mxu0 0
        %3096 = vmatpush1.bf16.msra.mxu0 0
        %3097 = vmatprep.subr.bf16.mxu0 0
        %3098 = vmatpush1.bf16.msra.mxu0 0
        %3099 = vmatprep.subr.bf16.mxu0 0
        %3100 = vmatpush1.bf16.msra.mxu0 0
        %3101 = vmatprep.subr.bf16.mxu0 0
        %3102 = vmatpush1.bf16.msra.mxu0 0
        %3103 = vmatprep.mubr.bf16.mxu0 0
        %3104 = vmatmul.mubr.bf16.gmra.mrb[0].mxu0 %v3060
        %v3105 = vpop.f32.mrb[0].mxu0
        %v3106 = vadd.f32 0.0, %v3105
        %v3107 = vpop.f32.mrb[0].mxu0
        %v3108 = vpop.f32.mrb[0].mxu0
        %v3109 = vadd.f32 0.0, %v3108
        %v3110 = vpop.f32.mrb[0].mxu0
        %3111 = vmatprep.mubr.bf16.mxu0 0
        %3112 = vmatmul.mubr.bf16.gmra.mrb[0].mxu0 %v3063
        %v3113 = vpop.f32.mrb[0].mxu0
        %v3114 = vadd.f32 0.0, %v3113
        %v3115 = vpop.f32.mrb[0].mxu0
        %v3116 = vpop.f32.mrb[0].mxu0
        %v3117 = vadd.f32 0.0, %v3116
        %v3118 = vpop.f32.mrb[0].mxu0
        %3119 = vmatprep.mubr.bf16.mxu0 0
        %3120 = vmatmul.mubr.bf16.gmra.mrb[0].mxu0 %v3066
        %v3121 = vpop.f32.mrb[0].mxu0
        %v3122 = vadd.f32 0.0, %v3121
        %v3123 = vpop.f32.mrb[0].mxu0
        %v3124 = vpop.f32.mrb[0].mxu0
        %v3125 = vadd.f32 0.0, %v3124
        %v3126 = vpop.f32.mrb[0].mxu0
        %3127 = vmatprep.mubr.bf16.mxu0 0
        %3128 = vmatmul.mubr.bf16.gmra.mrb[0].mxu0 %v3069
        %v3129 = vpop.f32.mrb[0].mxu0
        %v3130 = vadd.f32 0.0, %v3129
        %v3131 = vpop.f32.mrb[0].mxu0
        %v3132 = vpop.f32.mrb[0].mxu0
        %v3133 = vadd.f32 0.0, %v3132
        %v3134 = vpop.f32.mrb[0].mxu0
        %3135 = vdwg.mxu0
        %v3136 = vadd.f32 %v2928, %v3106
        %v3137 = vadd.f32 %v2931, %v3109
        %v3138 = vadd.f32 %v2936, %v3114
        %v3139 = vadd.f32 %v2939, %v3117
        %v3140 = vadd.f32 %v2944, %v3122
        %v3141 = vadd.f32 %v2947, %v3125
        %v3142 = vadd.f32 %v2952, %v3130
        %v3143 = vadd.f32 %v2955, %v3133
        %v3144 = vld [vmem:[%s2365] sm:$0xf]
        %v3145 = vld [vmem:[%s2365 + $0x8] sm:$0xf]
        %v3146 = vld [vmem:[%s2365 + $0x10] sm:$0xf]
        %v3147 = vld [vmem:[%s2365 + $0x18] sm:$0xf]
        %v3148 = vld [vmem:[%s2365 + $0x20] sm:$0xf]
        %v3149 = vld [vmem:[%s2365 + $0x28] sm:$0xf]
        %v3150 = vld [vmem:[%s2365 + $0x30] sm:$0xf]
        %v3151 = vld [vmem:[%s2365 + $0x38] sm:$0xf]
        %s3152 = scalar_lea.vmem [#allocation9], 96
        %v3153 = vld [vmem:[%s3152] sm:$0xf]
        %v3154 = vld [vmem:[%s3152 + $0x4] sm:$0xf]
        %v3155 = vld [vmem:[%s3152 + $0x8] sm:$0xf]
        %v3156 = vld [vmem:[%s3152 + $0xc] sm:$0xf]
        %v3157 = vld [vmem:[%s3152 + $0x10] sm:$0xf]
        %v3158 = vld [vmem:[%s3152 + $0x14] sm:$0xf]
        %v3159 = vld [vmem:[%s3152 + $0x18] sm:$0xf]
        %v3160 = vld [vmem:[%s3152 + $0x1c] sm:$0xf]
        %v3169 = vunpack.c.l.b16 %v3144
        %v3170 = vunpack.c.l.b16 %v3145
        %v3171 = vunpack.c.l.b16 %v3146
        %v3172 = vunpack.c.l.b16 %v3147
        %v3173 = vunpack.c.l.b16 %v3148
        %v3174 = vunpack.c.l.b16 %v3149
        %v3175 = vunpack.c.l.b16 %v3150
        %v3176 = vunpack.c.l.b16 %v3151
        %v3177 = vpack.c.b16 %v3170, %v3169
        %v3178 = vpack.c.b16 %v3172, %v3171
        %v3179 = vpack.c.b16 %v3174, %v3173
        %v3180 = vpack.c.b16 %v3176, %v3175
        %v3189 = vunpack.c.l.b16 %v3153
        %v3190 = vunpack.c.l.b16 %v3154
        %v3191 = vunpack.c.l.b16 %v3155
        %v3192 = vunpack.c.l.b16 %v3156
        %v3193 = vunpack.c.l.b16 %v3157
        %v3194 = vunpack.c.l.b16 %v3158
        %v3195 = vunpack.c.l.b16 %v3159
        %v3196 = vunpack.c.l.b16 %v3160
        %v3197 = vpack.c.b16 %v3190, %v3189
        %v3198 = vpack.c.b16 %v3192, %v3191
        %v3199 = vpack.c.b16 %v3194, %v3193
        %v3200 = vpack.c.b16 %v3196, %v3195
        %v3206 = vsel %vm2180, %v3177, 0
        %v3209 = vsel %vm2180, %v3178, 0
        %v3212 = vsel %vm2180, %v3179, 0
        %v3215 = vsel %vm2180, %v3180, 0
        %3217 = vmatprep.subr.bf16.mxu0 0
        %3218 = vmatpush1.bf16.msra.mxu0 %v3197
        %3219 = vmatprep.subr.bf16.mxu0 0
        %3220 = vmatpush1.bf16.msra.mxu0 %v3198
        %3221 = vmatprep.subr.bf16.mxu0 0
        %3222 = vmatpush1.bf16.msra.mxu0 %v3199
        %3223 = vmatprep.subr.bf16.mxu0 0
        %3224 = vmatpush1.bf16.msra.mxu0 %v3200
        %3225 = vmatprep.subr.bf16.mxu0 0
        %3226 = vmatpush1.bf16.msra.mxu0 0
        %3227 = vmatprep.subr.bf16.mxu0 0
        %3228 = vmatpush1.bf16.msra.mxu0 0
        %3229 = vmatprep.subr.bf16.mxu0 0
        %3230 = vmatpush1.bf16.msra.mxu0 0
        %3231 = vmatprep.subr.bf16.mxu0 0
        %3232 = vmatpush1.bf16.msra.mxu0 0
        %3233 = vmatprep.subr.bf16.mxu0 0
        %3234 = vmatpush1.bf16.msra.mxu0 0
        %3235 = vmatprep.subr.bf16.mxu0 0
        %3236 = vmatpush1.bf16.msra.mxu0 0
        %3237 = vmatprep.subr.bf16.mxu0 0
        %3238 = vmatpush1.bf16.msra.mxu0 0
        %3239 = vmatprep.subr.bf16.mxu0 0
        %3240 = vmatpush1.bf16.msra.mxu0 0
        %3241 = vmatprep.subr.bf16.mxu0 0
        %3242 = vmatpush1.bf16.msra.mxu0 0
        %3243 = vmatprep.subr.bf16.mxu0 0
        %3244 = vmatpush1.bf16.msra.mxu0 0
        %3245 = vmatprep.subr.bf16.mxu0 0
        %3246 = vmatpush1.bf16.msra.mxu0 0
        %3247 = vmatprep.subr.bf16.mxu0 0
        %3248 = vmatpush1.bf16.msra.mxu0 0
        %3249 = vmatprep.mubr.bf16.mxu0 0
        %3250 = vmatmul.mubr.bf16.gmra.mrb[0].mxu0 %v3206
        %v3251 = vpop.f32.mrb[0].mxu0
        %v3252 = vadd.f32 0.0, %v3251
        %v3253 = vpop.f32.mrb[0].mxu0
        %v3254 = vpop.f32.mrb[0].mxu0
        %v3255 = vadd.f32 0.0, %v3254
        %v3256 = vpop.f32.mrb[0].mxu0
        %3257 = vmatprep.mubr.bf16.mxu0 0
        %3258 = vmatmul.mubr.bf16.gmra.mrb[0].mxu0 %v3209
        %v3259 = vpop.f32.mrb[0].mxu0
        %v3260 = vadd.f32 0.0, %v3259
        %v3261 = vpop.f32.mrb[0].mxu0
        %v3262 = vpop.f32.mrb[0].mxu0
        %v3263 = vadd.f32 0.0, %v3262
        %v3264 = vpop.f32.mrb[0].mxu0
        %3265 = vmatprep.mubr.bf16.mxu0 0
        %3266 = vmatmul.mubr.bf16.gmra.mrb[0].mxu0 %v3212
        %v3267 = vpop.f32.mrb[0].mxu0
        %v3268 = vadd.f32 0.0, %v3267
        %v3269 = vpop.f32.mrb[0].mxu0
        %v3270 = vpop.f32.mrb[0].mxu0
        %v3271 = vadd.f32 0.0, %v3270
        %v3272 = vpop.f32.mrb[0].mxu0
        %3273 = vmatprep.mubr.bf16.mxu0 0
        %3274 = vmatmul.mubr.bf16.gmra.mrb[0].mxu0 %v3215
        %v3275 = vpop.f32.mrb[0].mxu0
        %v3276 = vadd.f32 0.0, %v3275
        %v3277 = vpop.f32.mrb[0].mxu0
        %v3278 = vpop.f32.mrb[0].mxu0
        %v3279 = vadd.f32 0.0, %v3278
        %v3280 = vpop.f32.mrb[0].mxu0
        %3281 = vdwg.mxu0
        %v3282 = vadd.f32 %v3136, %v3252
        %v3283 = vadd.f32 %v3137, %v3255
        %v3284 = vadd.f32 %v3138, %v3260
        %v3285 = vadd.f32 %v3139, %v3263
        %v3286 = vadd.f32 %v3140, %v3268
        %v3287 = vadd.f32 %v3141, %v3271
        %v3288 = vadd.f32 %v3142, %v3276
        %v3289 = vadd.f32 %v3143, %v3279
        %v3290 = vld [vmem:[%s2365] sm:$0xf]
        %v3291 = vld [vmem:[%s2365 + $0x4] sm:$0x1]
        %v3292 = vld [vmem:[%s2365 + $0x8] sm:$0xf]
        %v3293 = vld [vmem:[%s2365 + $0xc] sm:$0x1]
        %v3294 = vld [vmem:[%s2365 + $0x10] sm:$0xf]
        %v3295 = vld [vmem:[%s2365 + $0x14] sm:$0x1]
        %v3296 = vld [vmem:[%s2365 + $0x18] sm:$0xf]
        %v3297 = vld [vmem:[%s2365 + $0x1c] sm:$0x1]
        %v3298 = vld [vmem:[%s2365 + $0x20] sm:$0xf]
        %v3299 = vld [vmem:[%s2365 + $0x24] sm:$0x1]
        %v3300 = vld [vmem:[%s2365 + $0x28] sm:$0xf]
        %v3301 = vld [vmem:[%s2365 + $0x2c] sm:$0x1]
        %v3302 = vld [vmem:[%s2365 + $0x30] sm:$0xf]
        %v3303 = vld [vmem:[%s2365 + $0x34] sm:$0x1]
        %v3304 = vld [vmem:[%s2365 + $0x38] sm:$0xf]
        %v3305 = vld [vmem:[%s2365 + $0x3c] sm:$0x1]
        %v3307 = vshrl.u32 %v3290, 16
        %v3309 = vrot.slane %v3307, 4
        %v3310 = vshll.u32 %v3290, 16
        %v3312 = vrot.slane %v3310, 5
        %v3313 = vor.u32 %v3309, %v3312
        %v3314 = vrot.slane %v3313, 4
        %v3316 = vshll.u32 %v3291, 16
        %v3318 = vrot.slane %v3316, 5
        %v3319 = vsel %vm517, %v3314, %v3318
        %v3321 = vshrl.u32 %v3292, 16
        %v3323 = vrot.slane %v3321, 4
        %v3324 = vshll.u32 %v3292, 16
        %v3326 = vrot.slane %v3324, 5
        %v3327 = vor.u32 %v3323, %v3326
        %v3328 = vrot.slane %v3327, 4
        %v3330 = vshll.u32 %v3293, 16
        %v3332 = vrot.slane %v3330, 5
        %v3333 = vsel %vm517, %v3328, %v3332
        %v3335 = vshrl.u32 %v3294, 16
        %v3337 = vrot.slane %v3335, 4
        %v3338 = vshll.u32 %v3294, 16
        %v3340 = vrot.slane %v3338, 5
        %v3341 = vor.u32 %v3337, %v3340
        %v3342 = vrot.slane %v3341, 4
        %v3344 = vshll.u32 %v3295, 16
        %v3346 = vrot.slane %v3344, 5
        %v3347 = vsel %vm517, %v3342, %v3346
        %v3349 = vshrl.u32 %v3296, 16
        %v3351 = vrot.slane %v3349, 4
        %v3352 = vshll.u32 %v3296, 16
        %v3354 = vrot.slane %v3352, 5
        %v3355 = vor.u32 %v3351, %v3354
        %v3356 = vrot.slane %v3355, 4
        %v3358 = vshll.u32 %v3297, 16
        %v3360 = vrot.slane %v3358, 5
        %v3361 = vsel %vm517, %v3356, %v3360
        %v3363 = vshrl.u32 %v3298, 16
        %v3365 = vrot.slane %v3363, 4
        %v3366 = vshll.u32 %v3298, 16
        %v3368 = vrot.slane %v3366, 5
        %v3369 = vor.u32 %v3365, %v3368
        %v3370 = vrot.slane %v3369, 4
        %v3372 = vshll.u32 %v3299, 16
        %v3374 = vrot.slane %v3372, 5
        %v3375 = vsel %vm517, %v3370, %v3374
        %v3377 = vshrl.u32 %v3300, 16
        %v3379 = vrot.slane %v3377, 4
        %v3380 = vshll.u32 %v3300, 16
        %v3382 = vrot.slane %v3380, 5
        %v3383 = vor.u32 %v3379, %v3382
        %v3384 = vrot.slane %v3383, 4
        %v3386 = vshll.u32 %v3301, 16
        %v3388 = vrot.slane %v3386, 5
        %v3389 = vsel %vm517, %v3384, %v3388
        %v3391 = vshrl.u32 %v3302, 16
        %v3393 = vrot.slane %v3391, 4
        %v3394 = vshll.u32 %v3302, 16
        %v3396 = vrot.slane %v3394, 5
        %v3397 = vor.u32 %v3393, %v3396
        %v3398 = vrot.slane %v3397, 4
        %v3400 = vshll.u32 %v3303, 16
        %v3402 = vrot.slane %v3400, 5
        %v3403 = vsel %vm517, %v3398, %v3402
        %v3405 = vshrl.u32 %v3304, 16
        %v3407 = vrot.slane %v3405, 4
        %v3408 = vshll.u32 %v3304, 16
        %v3410 = vrot.slane %v3408, 5
        %v3411 = vor.u32 %v3407, %v3410
        %v3412 = vrot.slane %v3411, 4
        %v3414 = vshll.u32 %v3305, 16
        %v3416 = vrot.slane %v3414, 5
        %v3417 = vsel %vm517, %v3412, %v3416
        %s3418 = scalar_lea.vmem [#allocation9], 128
        %v3419 = vld [vmem:[%s3418] sm:$0xf]
        %v3420 = vld [vmem:[%s3418 + $0x4] sm:$0xf]
        %v3421 = vld [vmem:[%s3418 + $0x8] sm:$0xf]
        %v3422 = vld [vmem:[%s3418 + $0xc] sm:$0xf]
        %v3423 = vld [vmem:[%s3418 + $0x10] sm:$0xf]
        %v3424 = vld [vmem:[%s3418 + $0x14] sm:$0xf]
        %v3425 = vld [vmem:[%s3418 + $0x18] sm:$0xf]
        %v3426 = vld [vmem:[%s3418 + $0x1c] sm:$0xf]
        %v3427 = vunpack.c.l.b16 %v3319
        %v3428 = vunpack.c.l.b16 %v3333
        %v3429 = vunpack.c.l.b16 %v3347
        %v3430 = vunpack.c.l.b16 %v3361
        %v3431 = vunpack.c.l.b16 %v3375
        %v3432 = vunpack.c.l.b16 %v3389
        %v3433 = vunpack.c.l.b16 %v3403
        %v3434 = vunpack.c.l.b16 %v3417
        %v3435 = vpack.c.b16 %v3428, %v3427
        %v3436 = vpack.c.b16 %v3430, %v3429
        %v3437 = vpack.c.b16 %v3432, %v3431
        %v3438 = vpack.c.b16 %v3434, %v3433
        %v3447 = vunpack.c.l.b16 %v3419
        %v3448 = vunpack.c.l.b16 %v3420
        %v3449 = vunpack.c.l.b16 %v3421
        %v3450 = vunpack.c.l.b16 %v3422
        %v3451 = vunpack.c.l.b16 %v3423
        %v3452 = vunpack.c.l.b16 %v3424
        %v3453 = vunpack.c.l.b16 %v3425
        %v3454 = vunpack.c.l.b16 %v3426
        %v3455 = vpack.c.b16 %v3448, %v3447
        %v3456 = vpack.c.b16 %v3450, %v3449
        %v3457 = vpack.c.b16 %v3452, %v3451
        %v3458 = vpack.c.b16 %v3454, %v3453
        %v3464 = vsel %vm2180, %v3435, 0
        %v3467 = vsel %vm2180, %v3436, 0
        %v3470 = vsel %vm2180, %v3437, 0
        %v3473 = vsel %vm2180, %v3438, 0
        %3475 = vmatprep.subr.bf16.mxu0 0
        %3476 = vmatpush1.bf16.msra.mxu0 %v3455
        %3477 = vmatprep.subr.bf16.mxu0 0
        %3478 = vmatpush1.bf16.msra.mxu0 %v3456
        %3479 = vmatprep.subr.bf16.mxu0 0
        %3480 = vmatpush1.bf16.msra.mxu0 %v3457
        %3481 = vmatprep.subr.bf16.mxu0 0
        %3482 = vmatpush1.bf16.msra.mxu0 %v3458
        %3483 = vmatprep.subr.bf16.mxu0 0
        %3484 = vmatpush1.bf16.msra.mxu0 0
        %3485 = vmatprep.subr.bf16.mxu0 0
        %3486 = vmatpush1.bf16.msra.mxu0 0
        %3487 = vmatprep.subr.bf16.mxu0 0
        %3488 = vmatpush1.bf16.msra.mxu0 0
        %3489 = vmatprep.subr.bf16.mxu0 0
        %3490 = vmatpush1.bf16.msra.mxu0 0
        %3491 = vmatprep.subr.bf16.mxu0 0
        %3492 = vmatpush1.bf16.msra.mxu0 0
        %3493 = vmatprep.subr.bf16.mxu0 0
        %3494 = vmatpush1.bf16.msra.mxu0 0
        %3495 = vmatprep.subr.bf16.mxu0 0
        %3496 = vmatpush1.bf16.msra.mxu0 0
        %3497 = vmatprep.subr.bf16.mxu0 0
        %3498 = vmatpush1.bf16.msra.mxu0 0
        %3499 = vmatprep.subr.bf16.mxu0 0
        %3500 = vmatpush1.bf16.msra.mxu0 0
        %3501 = vmatprep.subr.bf16.mxu0 0
        %3502 = vmatpush1.bf16.msra.mxu0 0
        %3503 = vmatprep.subr.bf16.mxu0 0
        %3504 = vmatpush1.bf16.msra.mxu0 0
        %3505 = vmatprep.subr.bf16.mxu0 0
        %3506 = vmatpush1.bf16.msra.mxu0 0
        %3507 = vmatprep.mubr.bf16.mxu0 0
        %3508 = vmatmul.mubr.bf16.gmra.mrb[0].mxu0 %v3464
        %v3509 = vpop.f32.mrb[0].mxu0
        %v3510 = vadd.f32 0.0, %v3509
        %v3511 = vpop.f32.mrb[0].mxu0
        %v3512 = vpop.f32.mrb[0].mxu0
        %v3513 = vadd.f32 0.0, %v3512
        %v3514 = vpop.f32.mrb[0].mxu0
        %3515 = vmatprep.mubr.bf16.mxu0 0
        %3516 = vmatmul.mubr.bf16.gmra.mrb[0].mxu0 %v3467
        %v3517 = vpop.f32.mrb[0].mxu0
        %v3518 = vadd.f32 0.0, %v3517
        %v3519 = vpop.f32.mrb[0].mxu0
        %v3520 = vpop.f32.mrb[0].mxu0
        %v3521 = vadd.f32 0.0, %v3520
        %v3522 = vpop.f32.mrb[0].mxu0
        %3523 = vmatprep.mubr.bf16.mxu0 0
        %3524 = vmatmul.mubr.bf16.gmra.mrb[0].mxu0 %v3470
        %v3525 = vpop.f32.mrb[0].mxu0
        %v3526 = vadd.f32 0.0, %v3525
        %v3527 = vpop.f32.mrb[0].mxu0
        %v3528 = vpop.f32.mrb[0].mxu0
        %v3529 = vadd.f32 0.0, %v3528
        %v3530 = vpop.f32.mrb[0].mxu0
        %3531 = vmatprep.mubr.bf16.mxu0 0
        %3532 = vmatmul.mubr.bf16.gmra.mrb[0].mxu0 %v3473
        %v3533 = vpop.f32.mrb[0].mxu0
        %v3534 = vadd.f32 0.0, %v3533
        %v3535 = vpop.f32.mrb[0].mxu0
        %v3536 = vpop.f32.mrb[0].mxu0
        %v3537 = vadd.f32 0.0, %v3536
        %v3538 = vpop.f32.mrb[0].mxu0
        %3539 = vdwg.mxu0
        %v3540 = vadd.f32 %v3282, %v3510
        %v3541 = vadd.f32 %v3283, %v3513
        %v3542 = vadd.f32 %v3284, %v3518
        %v3543 = vadd.f32 %v3285, %v3521
        %v3544 = vadd.f32 %v3286, %v3526
        %v3545 = vadd.f32 %v3287, %v3529
        %v3546 = vadd.f32 %v3288, %v3534
        %v3547 = vadd.f32 %v3289, %v3537
        %v3548 = vld [vmem:[%s2365] sm:$0xe]
        %v3549 = vld [vmem:[%s2365 + $0x8] sm:$0xe]
        %v3550 = vld [vmem:[%s2365 + $0x10] sm:$0xe]
        %v3551 = vld [vmem:[%s2365 + $0x18] sm:$0xe]
        %v3552 = vld [vmem:[%s2365 + $0x20] sm:$0xe]
        %v3553 = vld [vmem:[%s2365 + $0x28] sm:$0xe]
        %v3554 = vld [vmem:[%s2365 + $0x30] sm:$0xe]
        %v3555 = vld [vmem:[%s2365 + $0x38] sm:$0xe]
        %v3572 = vrot.slane %v3548, 5
        %v3573 = vrot.slane %v3572, 4
        %v3574 = vrot.slane %v3291, 5
        %v3575 = vsel %vm872, %v3573, %v3574
        %v3576 = vrot.slane %v3549, 5
        %v3577 = vrot.slane %v3576, 4
        %v3578 = vrot.slane %v3293, 5
        %v3579 = vsel %vm872, %v3577, %v3578
        %v3580 = vrot.slane %v3550, 5
        %v3581 = vrot.slane %v3580, 4
        %v3582 = vrot.slane %v3295, 5
        %v3583 = vsel %vm872, %v3581, %v3582
        %v3584 = vrot.slane %v3551, 5
        %v3585 = vrot.slane %v3584, 4
        %v3586 = vrot.slane %v3297, 5
        %v3587 = vsel %vm872, %v3585, %v3586
        %v3588 = vrot.slane %v3552, 5
        %v3589 = vrot.slane %v3588, 4
        %v3590 = vrot.slane %v3299, 5
        %v3591 = vsel %vm872, %v3589, %v3590
        %v3592 = vrot.slane %v3553, 5
        %v3593 = vrot.slane %v3592, 4
        %v3594 = vrot.slane %v3301, 5
        %v3595 = vsel %vm872, %v3593, %v3594
        %v3596 = vrot.slane %v3554, 5
        %v3597 = vrot.slane %v3596, 4
        %v3598 = vrot.slane %v3303, 5
        %v3599 = vsel %vm872, %v3597, %v3598
        %v3600 = vrot.slane %v3555, 5
        %v3601 = vrot.slane %v3600, 4
        %v3602 = vrot.slane %v3305, 5
        %v3603 = vsel %vm872, %v3601, %v3602
        %s3604 = scalar_lea.vmem [#allocation9], 160
        %v3605 = vld [vmem:[%s3604] sm:$0xf]
        %v3606 = vld [vmem:[%s3604 + $0x4] sm:$0xf]
        %v3607 = vld [vmem:[%s3604 + $0x8] sm:$0xf]
        %v3608 = vld [vmem:[%s3604 + $0xc] sm:$0xf]
        %v3609 = vld [vmem:[%s3604 + $0x10] sm:$0xf]
        %v3610 = vld [vmem:[%s3604 + $0x14] sm:$0xf]
        %v3611 = vld [vmem:[%s3604 + $0x18] sm:$0xf]
        %v3612 = vld [vmem:[%s3604 + $0x1c] sm:$0xf]
        %v3613 = vunpack.c.l.b16 %v3575
        %v3614 = vunpack.c.l.b16 %v3579
        %v3615 = vunpack.c.l.b16 %v3583
        %v3616 = vunpack.c.l.b16 %v3587
        %v3617 = vunpack.c.l.b16 %v3591
        %v3618 = vunpack.c.l.b16 %v3595
        %v3619 = vunpack.c.l.b16 %v3599
        %v3620 = vunpack.c.l.b16 %v3603
        %v3621 = vpack.c.b16 %v3614, %v3613
        %v3622 = vpack.c.b16 %v3616, %v3615
        %v3623 = vpack.c.b16 %v3618, %v3617
        %v3624 = vpack.c.b16 %v3620, %v3619
        %v3633 = vunpack.c.l.b16 %v3605
        %v3634 = vunpack.c.l.b16 %v3606
        %v3635 = vunpack.c.l.b16 %v3607
        %v3636 = vunpack.c.l.b16 %v3608
        %v3637 = vunpack.c.l.b16 %v3609
        %v3638 = vunpack.c.l.b16 %v3610
        %v3639 = vunpack.c.l.b16 %v3611
        %v3640 = vunpack.c.l.b16 %v3612
        %v3641 = vpack.c.b16 %v3634, %v3633
        %v3642 = vpack.c.b16 %v3636, %v3635
        %v3643 = vpack.c.b16 %v3638, %v3637
        %v3644 = vpack.c.b16 %v3640, %v3639
        %v3650 = vsel %vm2180, %v3621, 0
        %v3653 = vsel %vm2180, %v3622, 0
        %v3656 = vsel %vm2180, %v3623, 0
        %v3659 = vsel %vm2180, %v3624, 0
        %3661 = vmatprep.subr.bf16.mxu0 0
        %3662 = vmatpush1.bf16.msra.mxu0 %v3641
        %3663 = vmatprep.subr.bf16.mxu0 0
        %3664 = vmatpush1.bf16.msra.mxu0 %v3642
        %3665 = vmatprep.subr.bf16.mxu0 0
        %3666 = vmatpush1.bf16.msra.mxu0 %v3643
        %3667 = vmatprep.subr.bf16.mxu0 0
        %3668 = vmatpush1.bf16.msra.mxu0 %v3644
        %3669 = vmatprep.subr.bf16.mxu0 0
        %3670 = vmatpush1.bf16.msra.mxu0 0
        %3671 = vmatprep.subr.bf16.mxu0 0
        %3672 = vmatpush1.bf16.msra.mxu0 0
        %3673 = vmatprep.subr.bf16.mxu0 0
        %3674 = vmatpush1.bf16.msra.mxu0 0
        %3675 = vmatprep.subr.bf16.mxu0 0
        %3676 = vmatpush1.bf16.msra.mxu0 0
        %3677 = vmatprep.subr.bf16.mxu0 0
        %3678 = vmatpush1.bf16.msra.mxu0 0
        %3679 = vmatprep.subr.bf16.mxu0 0
        %3680 = vmatpush1.bf16.msra.mxu0 0
        %3681 = vmatprep.subr.bf16.mxu0 0
        %3682 = vmatpush1.bf16.msra.mxu0 0
        %3683 = vmatprep.subr.bf16.mxu0 0
        %3684 = vmatpush1.bf16.msra.mxu0 0
        %3685 = vmatprep.subr.bf16.mxu0 0
        %3686 = vmatpush1.bf16.msra.mxu0 0
        %3687 = vmatprep.subr.bf16.mxu0 0
        %3688 = vmatpush1.bf16.msra.mxu0 0
        %3689 = vmatprep.subr.bf16.mxu0 0
        %3690 = vmatpush1.bf16.msra.mxu0 0
        %3691 = vmatprep.subr.bf16.mxu0 0
        %3692 = vmatpush1.bf16.msra.mxu0 0
        %3693 = vmatprep.mubr.bf16.mxu0 0
        %3694 = vmatmul.mubr.bf16.gmra.mrb[0].mxu0 %v3650
        %v3695 = vpop.f32.mrb[0].mxu0
        %v3696 = vadd.f32 0.0, %v3695
        %v3697 = vpop.f32.mrb[0].mxu0
        %v3698 = vpop.f32.mrb[0].mxu0
        %v3699 = vadd.f32 0.0, %v3698
        %v3700 = vpop.f32.mrb[0].mxu0
        %3701 = vmatprep.mubr.bf16.mxu0 0
        %3702 = vmatmul.mubr.bf16.gmra.mrb[0].mxu0 %v3653
        %v3703 = vpop.f32.mrb[0].mxu0
        %v3704 = vadd.f32 0.0, %v3703
        %v3705 = vpop.f32.mrb[0].mxu0
        %v3706 = vpop.f32.mrb[0].mxu0
        %v3707 = vadd.f32 0.0, %v3706
        %v3708 = vpop.f32.mrb[0].mxu0
        %3709 = vmatprep.mubr.bf16.mxu0 0
        %3710 = vmatmul.mubr.bf16.gmra.mrb[0].mxu0 %v3656
        %v3711 = vpop.f32.mrb[0].mxu0
        %v3712 = vadd.f32 0.0, %v3711
        %v3713 = vpop.f32.mrb[0].mxu0
        %v3714 = vpop.f32.mrb[0].mxu0
        %v3715 = vadd.f32 0.0, %v3714
        %v3716 = vpop.f32.mrb[0].mxu0
        %3717 = vmatprep.mubr.bf16.mxu0 0
        %3718 = vmatmul.mubr.bf16.gmra.mrb[0].mxu0 %v3659
        %v3719 = vpop.f32.mrb[0].mxu0
        %v3720 = vadd.f32 0.0, %v3719
        %v3721 = vpop.f32.mrb[0].mxu0
        %v3722 = vpop.f32.mrb[0].mxu0
        %v3723 = vadd.f32 0.0, %v3722
        %v3724 = vpop.f32.mrb[0].mxu0
        %3725 = vdwg.mxu0
        %v3726 = vadd.f32 %v3540, %v3696
        %v3727 = vadd.f32 %v3541, %v3699
        %v3728 = vadd.f32 %v3542, %v3704
        %v3729 = vadd.f32 %v3543, %v3707
        %v3730 = vadd.f32 %v3544, %v3712
        %v3731 = vadd.f32 %v3545, %v3715
        %v3732 = vadd.f32 %v3546, %v3720
        %v3733 = vadd.f32 %v3547, %v3723
        %s3734 = scalar_lea.vmem [#allocation3], 16
        %v3735 = vld [vmem:[%s3734] sm:$0xf]
        %v3736 = vld [vmem:[%s3734 + $0x8] sm:$0xf]
        %v3737 = vld [vmem:[%s3734 + $0x10] sm:$0xf]
        %v3738 = vld [vmem:[%s3734 + $0x18] sm:$0xf]
        %v3739 = vld [vmem:[%s3734 + $0x20] sm:$0xf]
        %v3740 = vld [vmem:[%s3734 + $0x28] sm:$0xf]
        %v3741 = vld [vmem:[%s3734 + $0x30] sm:$0xf]
        %v3742 = vld [vmem:[%s3734 + $0x38] sm:$0xf]
        %s3743 = scalar_lea.vmem [#allocation9], 192
        %v3744 = vld [vmem:[%s3743] sm:$0xf]
        %v3745 = vld [vmem:[%s3743 + $0x4] sm:$0xf]
        %v3746 = vld [vmem:[%s3743 + $0x8] sm:$0xf]
        %v3747 = vld [vmem:[%s3743 + $0xc] sm:$0xf]
        %v3748 = vld [vmem:[%s3743 + $0x10] sm:$0xf]
        %v3749 = vld [vmem:[%s3743 + $0x14] sm:$0xf]
        %v3750 = vld [vmem:[%s3743 + $0x18] sm:$0xf]
        %v3751 = vld [vmem:[%s3743 + $0x1c] sm:$0xf]
        %v3760 = vunpack.c.l.b16 %v3735
        %v3761 = vunpack.c.l.b16 %v3736
        %v3762 = vunpack.c.l.b16 %v3737
        %v3763 = vunpack.c.l.b16 %v3738
        %v3764 = vunpack.c.l.b16 %v3739
        %v3765 = vunpack.c.l.b16 %v3740
        %v3766 = vunpack.c.l.b16 %v3741
        %v3767 = vunpack.c.l.b16 %v3742
        %v3768 = vpack.c.b16 %v3761, %v3760
        %v3769 = vpack.c.b16 %v3763, %v3762
        %v3770 = vpack.c.b16 %v3765, %v3764
        %v3771 = vpack.c.b16 %v3767, %v3766
        %v3780 = vunpack.c.l.b16 %v3744
        %v3781 = vunpack.c.l.b16 %v3745
        %v3782 = vunpack.c.l.b16 %v3746
        %v3783 = vunpack.c.l.b16 %v3747
        %v3784 = vunpack.c.l.b16 %v3748
        %v3785 = vunpack.c.l.b16 %v3749
        %v3786 = vunpack.c.l.b16 %v3750
        %v3787 = vunpack.c.l.b16 %v3751
        %v3788 = vpack.c.b16 %v3781, %v3780
        %v3789 = vpack.c.b16 %v3783, %v3782
        %v3790 = vpack.c.b16 %v3785, %v3784
        %v3791 = vpack.c.b16 %v3787, %v3786
        %v3797 = vsel %vm2180, %v3768, 0
        %v3800 = vsel %vm2180, %v3769, 0
        %v3803 = vsel %vm2180, %v3770, 0
        %v3806 = vsel %vm2180, %v3771, 0
        %3808 = vmatprep.subr.bf16.mxu0 0
        %3809 = vmatpush1.bf16.msra.mxu0 %v3788
        %3810 = vmatprep.subr.bf16.mxu0 0
        %3811 = vmatpush1.bf16.msra.mxu0 %v3789
        %3812 = vmatprep.subr.bf16.mxu0 0
        %3813 = vmatpush1.bf16.msra.mxu0 %v3790
        %3814 = vmatprep.subr.bf16.mxu0 0
        %3815 = vmatpush1.bf16.msra.mxu0 %v3791
        %3816 = vmatprep.subr.bf16.mxu0 0
        %3817 = vmatpush1.bf16.msra.mxu0 0
        %3818 = vmatprep.subr.bf16.mxu0 0
        %3819 = vmatpush1.bf16.msra.mxu0 0
        %3820 = vmatprep.subr.bf16.mxu0 0
        %3821 = vmatpush1.bf16.msra.mxu0 0
        %3822 = vmatprep.subr.bf16.mxu0 0
        %3823 = vmatpush1.bf16.msra.mxu0 0
        %3824 = vmatprep.subr.bf16.mxu0 0
        %3825 = vmatpush1.bf16.msra.mxu0 0
        %3826 = vmatprep.subr.bf16.mxu0 0
        %3827 = vmatpush1.bf16.msra.mxu0 0
        %3828 = vmatprep.subr.bf16.mxu0 0
        %3829 = vmatpush1.bf16.msra.mxu0 0
        %3830 = vmatprep.subr.bf16.mxu0 0
        %3831 = vmatpush1.bf16.msra.mxu0 0
        %3832 = vmatprep.subr.bf16.mxu0 0
        %3833 = vmatpush1.bf16.msra.mxu0 0
        %3834 = vmatprep.subr.bf16.mxu0 0
        %3835 = vmatpush1.bf16.msra.mxu0 0
        %3836 = vmatprep.subr.bf16.mxu0 0
        %3837 = vmatpush1.bf16.msra.mxu0 0
        %3838 = vmatprep.subr.bf16.mxu0 0
        %3839 = vmatpush1.bf16.msra.mxu0 0
        %3840 = vmatprep.mubr.bf16.mxu0 0
        %3841 = vmatmul.mubr.bf16.gmra.mrb[0].mxu0 %v3797
        %v3842 = vpop.f32.mrb[0].mxu0
        %v3843 = vadd.f32 0.0, %v3842
        %v3844 = vpop.f32.mrb[0].mxu0
        %v3845 = vpop.f32.mrb[0].mxu0
        %v3846 = vadd.f32 0.0, %v3845
        %v3847 = vpop.f32.mrb[0].mxu0
        %3848 = vmatprep.mubr.bf16.mxu0 0
        %3849 = vmatmul.mubr.bf16.gmra.mrb[0].mxu0 %v3800
        %v3850 = vpop.f32.mrb[0].mxu0
        %v3851 = vadd.f32 0.0, %v3850
        %v3852 = vpop.f32.mrb[0].mxu0
        %v3853 = vpop.f32.mrb[0].mxu0
        %v3854 = vadd.f32 0.0, %v3853
        %v3855 = vpop.f32.mrb[0].mxu0
        %3856 = vmatprep.mubr.bf16.mxu0 0
        %3857 = vmatmul.mubr.bf16.gmra.mrb[0].mxu0 %v3803
        %v3858 = vpop.f32.mrb[0].mxu0
        %v3859 = vadd.f32 0.0, %v3858
        %v3860 = vpop.f32.mrb[0].mxu0
        %v3861 = vpop.f32.mrb[0].mxu0
        %v3862 = vadd.f32 0.0, %v3861
        %v3863 = vpop.f32.mrb[0].mxu0
        %3864 = vmatprep.mubr.bf16.mxu0 0
        %3865 = vmatmul.mubr.bf16.gmra.mrb[0].mxu0 %v3806
        %v3866 = vpop.f32.mrb[0].mxu0
        %v3867 = vadd.f32 0.0, %v3866
        %v3868 = vpop.f32.mrb[0].mxu0
        %v3869 = vpop.f32.mrb[0].mxu0
        %v3870 = vadd.f32 0.0, %v3869
        %v3871 = vpop.f32.mrb[0].mxu0
        %3872 = vdwg.mxu0
        %v3873 = vadd.f32 %v3726, %v3843
        %v3874 = vadd.f32 %v3727, %v3846
        %v3875 = vadd.f32 %v3728, %v3851
        %v3876 = vadd.f32 %v3729, %v3854
        %v3877 = vadd.f32 %v3730, %v3859
        %v3878 = vadd.f32 %v3731, %v3862
        %v3879 = vadd.f32 %v3732, %v3867
        %v3880 = vadd.f32 %v3733, %v3870
        %v3881 = vld [vmem:[%s3734] sm:$0xf]
        %v3882 = vld [vmem:[%s3734 + $0x4] sm:$0x1]
        %v3883 = vld [vmem:[%s3734 + $0x8] sm:$0xf]
        %v3884 = vld [vmem:[%s3734 + $0xc] sm:$0x1]
        %v3885 = vld [vmem:[%s3734 + $0x10] sm:$0xf]
        %v3886 = vld [vmem:[%s3734 + $0x14] sm:$0x1]
        %v3887 = vld [vmem:[%s3734 + $0x18] sm:$0xf]
        %v3888 = vld [vmem:[%s3734 + $0x1c] sm:$0x1]
        %v3889 = vld [vmem:[%s3734 + $0x20] sm:$0xf]
        %v3890 = vld [vmem:[%s3734 + $0x24] sm:$0x1]
        %v3891 = vld [vmem:[%s3734 + $0x28] sm:$0xf]
        %v3892 = vld [vmem:[%s3734 + $0x2c] sm:$0x1]
        %v3893 = vld [vmem:[%s3734 + $0x30] sm:$0xf]
        %v3894 = vld [vmem:[%s3734 + $0x34] sm:$0x1]
        %v3895 = vld [vmem:[%s3734 + $0x38] sm:$0xf]
        %v3896 = vld [vmem:[%s3734 + $0x3c] sm:$0x1]
        %v3898 = vshrl.u32 %v3881, 16
        %v3900 = vrot.slane %v3898, 4
        %v3901 = vshll.u32 %v3881, 16
        %v3903 = vrot.slane %v3901, 5
        %v3904 = vor.u32 %v3900, %v3903
        %v3905 = vrot.slane %v3904, 4
        %v3907 = vshll.u32 %v3882, 16
        %v3909 = vrot.slane %v3907, 5
        %v3910 = vsel %vm517, %v3905, %v3909
        %v3912 = vshrl.u32 %v3883, 16
        %v3914 = vrot.slane %v3912, 4
        %v3915 = vshll.u32 %v3883, 16
        %v3917 = vrot.slane %v3915, 5
        %v3918 = vor.u32 %v3914, %v3917
        %v3919 = vrot.slane %v3918, 4
        %v3921 = vshll.u32 %v3884, 16
        %v3923 = vrot.slane %v3921, 5
        %v3924 = vsel %vm517, %v3919, %v3923
        %v3926 = vshrl.u32 %v3885, 16
        %v3928 = vrot.slane %v3926, 4
        %v3929 = vshll.u32 %v3885, 16
        %v3931 = vrot.slane %v3929, 5
        %v3932 = vor.u32 %v3928, %v3931
        %v3933 = vrot.slane %v3932, 4
        %v3935 = vshll.u32 %v3886, 16
        %v3937 = vrot.slane %v3935, 5
        %v3938 = vsel %vm517, %v3933, %v3937
        %v3940 = vshrl.u32 %v3887, 16
        %v3942 = vrot.slane %v3940, 4
        %v3943 = vshll.u32 %v3887, 16
        %v3945 = vrot.slane %v3943, 5
        %v3946 = vor.u32 %v3942, %v3945
        %v3947 = vrot.slane %v3946, 4
        %v3949 = vshll.u32 %v3888, 16
        %v3951 = vrot.slane %v3949, 5
        %v3952 = vsel %vm517, %v3947, %v3951
        %v3954 = vshrl.u32 %v3889, 16
        %v3956 = vrot.slane %v3954, 4
        %v3957 = vshll.u32 %v3889, 16
        %v3959 = vrot.slane %v3957, 5
        %v3960 = vor.u32 %v3956, %v3959
        %v3961 = vrot.slane %v3960, 4
        %v3963 = vshll.u32 %v3890, 16
        %v3965 = vrot.slane %v3963, 5
        %v3966 = vsel %vm517, %v3961, %v3965
        %v3968 = vshrl.u32 %v3891, 16
        %v3970 = vrot.slane %v3968, 4
        %v3971 = vshll.u32 %v3891, 16
        %v3973 = vrot.slane %v3971, 5
        %v3974 = vor.u32 %v3970, %v3973
        %v3975 = vrot.slane %v3974, 4
        %v3977 = vshll.u32 %v3892, 16
        %v3979 = vrot.slane %v3977, 5
        %v3980 = vsel %vm517, %v3975, %v3979
        %v3982 = vshrl.u32 %v3893, 16
        %v3984 = vrot.slane %v3982, 4
        %v3985 = vshll.u32 %v3893, 16
        %v3987 = vrot.slane %v3985, 5
        %v3988 = vor.u32 %v3984, %v3987
        %v3989 = vrot.slane %v3988, 4
        %v3991 = vshll.u32 %v3894, 16
        %v3993 = vrot.slane %v3991, 5
        %v3994 = vsel %vm517, %v3989, %v3993
        %v3996 = vshrl.u32 %v3895, 16
        %v3998 = vrot.slane %v3996, 4
        %v3999 = vshll.u32 %v3895, 16
        %v4001 = vrot.slane %v3999, 5
        %v4002 = vor.u32 %v3998, %v4001
        %v4003 = vrot.slane %v4002, 4
        %v4005 = vshll.u32 %v3896, 16
        %v4007 = vrot.slane %v4005, 5
        %v4008 = vsel %vm517, %v4003, %v4007
        %s4009 = scalar_lea.vmem [#allocation9], 224
        %v4010 = vld [vmem:[%s4009] sm:$0xf]
        %v4011 = vld [vmem:[%s4009 + $0x4] sm:$0xf]
        %v4012 = vld [vmem:[%s4009 + $0x8] sm:$0xf]
        %v4013 = vld [vmem:[%s4009 + $0xc] sm:$0xf]
        %v4014 = vld [vmem:[%s4009 + $0x10] sm:$0xf]
        %v4015 = vld [vmem:[%s4009 + $0x14] sm:$0xf]
        %v4016 = vld [vmem:[%s4009 + $0x18] sm:$0xf]
        %v4017 = vld [vmem:[%s4009 + $0x1c] sm:$0xf]
        %v4018 = vunpack.c.l.b16 %v3910
        %v4019 = vunpack.c.l.b16 %v3924
        %v4020 = vunpack.c.l.b16 %v3938
        %v4021 = vunpack.c.l.b16 %v3952
        %v4022 = vunpack.c.l.b16 %v3966
        %v4023 = vunpack.c.l.b16 %v3980
        %v4024 = vunpack.c.l.b16 %v3994
        %v4025 = vunpack.c.l.b16 %v4008
        %v4026 = vpack.c.b16 %v4019, %v4018
        %v4027 = vpack.c.b16 %v4021, %v4020
        %v4028 = vpack.c.b16 %v4023, %v4022
        %v4029 = vpack.c.b16 %v4025, %v4024
        %v4038 = vunpack.c.l.b16 %v4010
        %v4039 = vunpack.c.l.b16 %v4011
        %v4040 = vunpack.c.l.b16 %v4012
        %v4041 = vunpack.c.l.b16 %v4013
        %v4042 = vunpack.c.l.b16 %v4014
        %v4043 = vunpack.c.l.b16 %v4015
        %v4044 = vunpack.c.l.b16 %v4016
        %v4045 = vunpack.c.l.b16 %v4017
        %v4046 = vpack.c.b16 %v4039, %v4038
        %v4047 = vpack.c.b16 %v4041, %v4040
        %v4048 = vpack.c.b16 %v4043, %v4042
        %v4049 = vpack.c.b16 %v4045, %v4044
        %v4055 = vsel %vm2180, %v4026, 0
        %v4058 = vsel %vm2180, %v4027, 0
        %v4061 = vsel %vm2180, %v4028, 0
        %v4064 = vsel %vm2180, %v4029, 0
        %4066 = vmatprep.subr.bf16.mxu0 0
        %4067 = vmatpush1.bf16.msra.mxu0 %v4046
        %4068 = vmatprep.subr.bf16.mxu0 0
        %4069 = vmatpush1.bf16.msra.mxu0 %v4047
        %4070 = vmatprep.subr.bf16.mxu0 0
        %4071 = vmatpush1.bf16.msra.mxu0 %v4048
        %4072 = vmatprep.subr.bf16.mxu0 0
        %4073 = vmatpush1.bf16.msra.mxu0 %v4049
        %4074 = vmatprep.subr.bf16.mxu0 0
        %4075 = vmatpush1.bf16.msra.mxu0 0
        %4076 = vmatprep.subr.bf16.mxu0 0
        %4077 = vmatpush1.bf16.msra.mxu0 0
        %4078 = vmatprep.subr.bf16.mxu0 0
        %4079 = vmatpush1.bf16.msra.mxu0 0
        %4080 = vmatprep.subr.bf16.mxu0 0
        %4081 = vmatpush1.bf16.msra.mxu0 0
        %4082 = vmatprep.subr.bf16.mxu0 0
        %4083 = vmatpush1.bf16.msra.mxu0 0
        %4084 = vmatprep.subr.bf16.mxu0 0
        %4085 = vmatpush1.bf16.msra.mxu0 0
        %4086 = vmatprep.subr.bf16.mxu0 0
        %4087 = vmatpush1.bf16.msra.mxu0 0
        %4088 = vmatprep.subr.bf16.mxu0 0
        %4089 = vmatpush1.bf16.msra.mxu0 0
        %4090 = vmatprep.subr.bf16.mxu0 0
        %4091 = vmatpush1.bf16.msra.mxu0 0
        %4092 = vmatprep.subr.bf16.mxu0 0
        %4093 = vmatpush1.bf16.msra.mxu0 0
        %4094 = vmatprep.subr.bf16.mxu0 0
        %4095 = vmatpush1.bf16.msra.mxu0 0
        %4096 = vmatprep.subr.bf16.mxu0 0
        %4097 = vmatpush1.bf16.msra.mxu0 0
        %4098 = vmatprep.mubr.bf16.mxu0 0
        %4099 = vmatmul.mubr.bf16.gmra.mrb[0].mxu0 %v4055
        %v4100 = vpop.f32.mrb[0].mxu0
        %v4101 = vadd.f32 0.0, %v4100
        %v4102 = vpop.f32.mrb[0].mxu0
        %v4103 = vpop.f32.mrb[0].mxu0
        %v4104 = vadd.f32 0.0, %v4103
        %v4105 = vpop.f32.mrb[0].mxu0
        %4106 = vmatprep.mubr.bf16.mxu0 0
        %4107 = vmatmul.mubr.bf16.gmra.mrb[0].mxu0 %v4058
        %v4108 = vpop.f32.mrb[0].mxu0
        %v4109 = vadd.f32 0.0, %v4108
        %v4110 = vpop.f32.mrb[0].mxu0
        %v4111 = vpop.f32.mrb[0].mxu0
        %v4112 = vadd.f32 0.0, %v4111
        %v4113 = vpop.f32.mrb[0].mxu0
        %4114 = vmatprep.mubr.bf16.mxu0 0
        %4115 = vmatmul.mubr.bf16.gmra.mrb[0].mxu0 %v4061
        %v4116 = vpop.f32.mrb[0].mxu0
        %v4117 = vadd.f32 0.0, %v4116
        %v4118 = vpop.f32.mrb[0].mxu0
        %v4119 = vpop.f32.mrb[0].mxu0
        %v4120 = vadd.f32 0.0, %v4119
        %v4121 = vpop.f32.mrb[0].mxu0
        %4122 = vmatprep.mubr.bf16.mxu0 0
        %4123 = vmatmul.mubr.bf16.gmra.mrb[0].mxu0 %v4064
        %v4124 = vpop.f32.mrb[0].mxu0
        %v4125 = vadd.f32 0.0, %v4124
        %v4126 = vpop.f32.mrb[0].mxu0
        %v4127 = vpop.f32.mrb[0].mxu0
        %v4128 = vadd.f32 0.0, %v4127
        %v4129 = vpop.f32.mrb[0].mxu0
        %4130 = vdwg.mxu0
        %v4131 = vadd.f32 %v3873, %v4101
        %v4132 = vadd.f32 %v3874, %v4104
        %v4133 = vadd.f32 %v3875, %v4109
        %v4134 = vadd.f32 %v3876, %v4112
        %v4135 = vadd.f32 %v3877, %v4117
        %v4136 = vadd.f32 %v3878, %v4120
        %v4137 = vadd.f32 %v3879, %v4125
        %v4138 = vadd.f32 %v3880, %v4128
        %v4139 = vld [vmem:[%s3734] sm:$0xe]
        %v4140 = vld [vmem:[%s3734 + $0x8] sm:$0xe]
        %v4141 = vld [vmem:[%s3734 + $0x10] sm:$0xe]
        %v4142 = vld [vmem:[%s3734 + $0x18] sm:$0xe]
        %v4143 = vld [vmem:[%s3734 + $0x20] sm:$0xe]
        %v4144 = vld [vmem:[%s3734 + $0x28] sm:$0xe]
        %v4145 = vld [vmem:[%s3734 + $0x30] sm:$0xe]
        %v4146 = vld [vmem:[%s3734 + $0x38] sm:$0xe]
        %v4163 = vrot.slane %v4139, 5
        %v4164 = vrot.slane %v4163, 4
        %v4165 = vrot.slane %v3882, 5
        %v4166 = vsel %vm872, %v4164, %v4165
        %v4167 = vrot.slane %v4140, 5
        %v4168 = vrot.slane %v4167, 4
        %v4169 = vrot.slane %v3884, 5
        %v4170 = vsel %vm872, %v4168, %v4169
        %v4171 = vrot.slane %v4141, 5
        %v4172 = vrot.slane %v4171, 4
        %v4173 = vrot.slane %v3886, 5
        %v4174 = vsel %vm872, %v4172, %v4173
        %v4175 = vrot.slane %v4142, 5
        %v4176 = vrot.slane %v4175, 4
        %v4177 = vrot.slane %v3888, 5
        %v4178 = vsel %vm872, %v4176, %v4177
        %v4179 = vrot.slane %v4143, 5
        %v4180 = vrot.slane %v4179, 4
        %v4181 = vrot.slane %v3890, 5
        %v4182 = vsel %vm872, %v4180, %v4181
        %v4183 = vrot.slane %v4144, 5
        %v4184 = vrot.slane %v4183, 4
        %v4185 = vrot.slane %v3892, 5
        %v4186 = vsel %vm872, %v4184, %v4185
        %v4187 = vrot.slane %v4145, 5
        %v4188 = vrot.slane %v4187, 4
        %v4189 = vrot.slane %v3894, 5
        %v4190 = vsel %vm872, %v4188, %v4189
        %v4191 = vrot.slane %v4146, 5
        %v4192 = vrot.slane %v4191, 4
        %v4193 = vrot.slane %v3896, 5
        %v4194 = vsel %vm872, %v4192, %v4193
        %s4195 = scalar_lea.vmem [#allocation9], 256
        %v4196 = vld [vmem:[%s4195] sm:$0xf]
        %v4197 = vld [vmem:[%s4195 + $0x4] sm:$0xf]
        %v4198 = vld [vmem:[%s4195 + $0x8] sm:$0xf]
        %v4199 = vld [vmem:[%s4195 + $0xc] sm:$0xf]
        %v4200 = vld [vmem:[%s4195 + $0x10] sm:$0xf]
        %v4201 = vld [vmem:[%s4195 + $0x14] sm:$0xf]
        %v4202 = vld [vmem:[%s4195 + $0x18] sm:$0xf]
        %v4203 = vld [vmem:[%s4195 + $0x1c] sm:$0xf]
        %v4204 = vunpack.c.l.b16 %v4166
        %v4205 = vunpack.c.l.b16 %v4170
        %v4206 = vunpack.c.l.b16 %v4174
        %v4207 = vunpack.c.l.b16 %v4178
        %v4208 = vunpack.c.l.b16 %v4182
        %v4209 = vunpack.c.l.b16 %v4186
        %v4210 = vunpack.c.l.b16 %v4190
        %v4211 = vunpack.c.l.b16 %v4194
        %v4212 = vpack.c.b16 %v4205, %v4204
        %v4213 = vpack.c.b16 %v4207, %v4206
        %v4214 = vpack.c.b16 %v4209, %v4208
        %v4215 = vpack.c.b16 %v4211, %v4210
        %v4224 = vunpack.c.l.b16 %v4196
        %v4225 = vunpack.c.l.b16 %v4197
        %v4226 = vunpack.c.l.b16 %v4198
        %v4227 = vunpack.c.l.b16 %v4199
        %v4228 = vunpack.c.l.b16 %v4200
        %v4229 = vunpack.c.l.b16 %v4201
        %v4230 = vunpack.c.l.b16 %v4202
        %v4231 = vunpack.c.l.b16 %v4203
        %v4232 = vpack.c.b16 %v4225, %v4224
        %v4233 = vpack.c.b16 %v4227, %v4226
        %v4234 = vpack.c.b16 %v4229, %v4228
        %v4235 = vpack.c.b16 %v4231, %v4230
        %v4241 = vsel %vm2180, %v4212, 0
        %v4244 = vsel %vm2180, %v4213, 0
        %v4247 = vsel %vm2180, %v4214, 0
        %v4250 = vsel %vm2180, %v4215, 0
        %4252 = vmatprep.subr.bf16.mxu0 0
        %4253 = vmatpush1.bf16.msra.mxu0 %v4232
        %4254 = vmatprep.subr.bf16.mxu0 0
        %4255 = vmatpush1.bf16.msra.mxu0 %v4233
        %4256 = vmatprep.subr.bf16.mxu0 0
        %4257 = vmatpush1.bf16.msra.mxu0 %v4234
        %4258 = vmatprep.subr.bf16.mxu0 0
        %4259 = vmatpush1.bf16.msra.mxu0 %v4235
        %4260 = vmatprep.subr.bf16.mxu0 0
        %4261 = vmatpush1.bf16.msra.mxu0 0
        %4262 = vmatprep.subr.bf16.mxu0 0
        %4263 = vmatpush1.bf16.msra.mxu0 0
        %4264 = vmatprep.subr.bf16.mxu0 0
        %4265 = vmatpush1.bf16.msra.mxu0 0
        %4266 = vmatprep.subr.bf16.mxu0 0
        %4267 = vmatpush1.bf16.msra.mxu0 0
        %4268 = vmatprep.subr.bf16.mxu0 0
        %4269 = vmatpush1.bf16.msra.mxu0 0
        %4270 = vmatprep.subr.bf16.mxu0 0
        %4271 = vmatpush1.bf16.msra.mxu0 0
        %4272 = vmatprep.subr.bf16.mxu0 0
        %4273 = vmatpush1.bf16.msra.mxu0 0
        %4274 = vmatprep.subr.bf16.mxu0 0
        %4275 = vmatpush1.bf16.msra.mxu0 0
        %4276 = vmatprep.subr.bf16.mxu0 0
        %4277 = vmatpush1.bf16.msra.mxu0 0
        %4278 = vmatprep.subr.bf16.mxu0 0
        %4279 = vmatpush1.bf16.msra.mxu0 0
        %4280 = vmatprep.subr.bf16.mxu0 0
        %4281 = vmatpush1.bf16.msra.mxu0 0
        %4282 = vmatprep.subr.bf16.mxu0 0
        %4283 = vmatpush1.bf16.msra.mxu0 0
        %4284 = vmatprep.mubr.bf16.mxu0 0
        %4285 = vmatmul.mubr.bf16.gmra.mrb[0].mxu0 %v4241
        %v4286 = vpop.f32.mrb[0].mxu0
        %v4287 = vadd.f32 0.0, %v4286
        %v4288 = vpop.f32.mrb[0].mxu0
        %v4289 = vpop.f32.mrb[0].mxu0
        %v4290 = vadd.f32 0.0, %v4289
        %v4291 = vpop.f32.mrb[0].mxu0
        %4292 = vmatprep.mubr.bf16.mxu0 0
        %4293 = vmatmul.mubr.bf16.gmra.mrb[0].mxu0 %v4244
        %v4294 = vpop.f32.mrb[0].mxu0
        %v4295 = vadd.f32 0.0, %v4294
        %v4296 = vpop.f32.mrb[0].mxu0
        %v4297 = vpop.f32.mrb[0].mxu0
        %v4298 = vadd.f32 0.0, %v4297
        %v4299 = vpop.f32.mrb[0].mxu0
        %4300 = vmatprep.mubr.bf16.mxu0 0
        %4301 = vmatmul.mubr.bf16.gmra.mrb[0].mxu0 %v4247
        %v4302 = vpop.f32.mrb[0].mxu0
        %v4303 = vadd.f32 0.0, %v4302
        %v4304 = vpop.f32.mrb[0].mxu0
        %v4305 = vpop.f32.mrb[0].mxu0
        %v4306 = vadd.f32 0.0, %v4305
        %v4307 = vpop.f32.mrb[0].mxu0
        %4308 = vmatprep.mubr.bf16.mxu0 0
        %4309 = vmatmul.mubr.bf16.gmra.mrb[0].mxu0 %v4250
        %v4310 = vpop.f32.mrb[0].mxu0
        %v4311 = vadd.f32 0.0, %v4310
        %v4312 = vpop.f32.mrb[0].mxu0
        %v4313 = vpop.f32.mrb[0].mxu0
        %v4314 = vadd.f32 0.0, %v4313
        %v4315 = vpop.f32.mrb[0].mxu0
        %4316 = vdwg.mxu0
        %v4317 = vadd.f32 %v4131, %v4287
        %v4318 = vadd.f32 %v4132, %v4290
        %v4319 = vadd.f32 %v4133, %v4295
        %v4320 = vadd.f32 %v4134, %v4298
        %v4321 = vadd.f32 %v4135, %v4303
        %v4322 = vadd.f32 %v4136, %v4306
        %v4323 = vadd.f32 %v4137, %v4311
        %v4324 = vadd.f32 %v4138, %v4314
        %v4325 = vlaneseq
        %v4326 = vshrl.u32 %v4325, 7
        %v4327 = vsub.s32 0, %v4326
        %v4328 = vrot.slane %v291, %v4327
        %v4329 = vadd.f32 %v4317, %v4328
        %v4330 = vadd.f32 %v4318, %v4328
        %v4331 = vadd.f32 %v4319, %v4328
        %v4332 = vadd.f32 %v4320, %v4328
        %v4333 = vadd.f32 %v4321, %v4328
        %v4334 = vadd.f32 %v4322, %v4328
        %v4335 = vadd.f32 %v4323, %v4328
        %v4336 = vadd.f32 %v4324, %v4328
        %v4337 = vlaneseq
        %v4338 = vshrl.u32 %v4337, 7
        %v4339 = vsub.s32 0, %v4338
        %v4340 = vrot.slane %v292, %v4339
        %v4341 = vmul.f32 %v4329, %v4340
        %v4342 = vmul.f32 %v4330, %v4340
        %v4343 = vmul.f32 %v4331, %v4340
        %v4344 = vmul.f32 %v4332, %v4340
        %v4345 = vmul.f32 %v4333, %v4340
        %v4346 = vmul.f32 %v4334, %v4340
        %v4347 = vmul.f32 %v4335, %v4340
        %v4348 = vmul.f32 %v4336, %v4340
        %v4349 = vlaneseq
        %v4350 = vshrl.u32 %v4349, 7
        %v4351 = vsub.s32 0, %v4350
        %v4352 = vrot.slane %v293, %v4351
        %v4353 = vadd.f32 %v4341, %v4352
        %v4354 = vadd.f32 %v4342, %v4352
        %v4355 = vadd.f32 %v4343, %v4352
        %v4356 = vadd.f32 %v4344, %v4352
        %v4357 = vadd.f32 %v4345, %v4352
        %v4358 = vadd.f32 %v4346, %v4352
        %v4359 = vadd.f32 %v4347, %v4352
        %v4360 = vadd.f32 %v4348, %v4352
        %v4361 = vmax.f32 %v4353, 0.0
        %v4362 = vmax.f32 %v4354, 0.0
        %v4363 = vmax.f32 %v4355, 0.0
        %v4364 = vmax.f32 %v4356, 0.0
        %v4365 = vmax.f32 %v4357, 0.0
        %v4366 = vmax.f32 %v4358, 0.0
        %v4367 = vmax.f32 %v4359, 0.0
        %v4368 = vmax.f32 %v4360, 0.0
        %v4369 = vmul.f32 %v2306, %v4361
        %v4370 = vmul.f32 %v2307, %v4362
        %v4371 = vmul.f32 %v2308, %v4363
        %v4372 = vmul.f32 %v2309, %v4364
        %v4373 = vmul.f32 %v2310, %v4365
        %v4374 = vmul.f32 %v2311, %v4366
        %v4375 = vmul.f32 %v2312, %v4367
        %v4376 = vmul.f32 %v2313, %v4368
        %4377 = vst.msk [vmem:[%s286] sm:$0xff] %vm2180, %v4369
        %4378 = vst.msk [vmem:[%s286 + $0x8] sm:$0xff] %vm2180, %v4370
        %4379 = vst.msk [vmem:[%s286 + $0x10] sm:$0xff] %vm2180, %v4371
        %4380 = vst.msk [vmem:[%s286 + $0x18] sm:$0xff] %vm2180, %v4372
        %4381 = vst.msk [vmem:[%s286 + $0x20] sm:$0xff] %vm2180, %v4373
        %4382 = vst.msk [vmem:[%s286 + $0x28] sm:$0xff] %vm2180, %v4374
        %4383 = vst.msk [vmem:[%s286 + $0x30] sm:$0xff] %vm2180, %v4375
        %4384 = vst.msk [vmem:[%s286 + $0x38] sm:$0xff] %vm2180, %v4376
        %s4385 = sand.u32 %s142, 1
        %s4386 = scalar_lea.sflag [#allocation6], %s4385
        %s4387 = sand.u32 %s142, 1
        %s4388 = smul.addr %s4387, 64
        %s4389 = scalar_lea.vmem [#allocation12], %s4388
        // Predicated region
        $region57: #{tpu_custom_call.1} parent=39 // pred_check
          %p4390 = pneg %p152
        $region58: #{tpu_custom_call.1} parent=39 // pred_check_branch
          %4392 = sbr.rel (%p4390) target = $region60
        $region59: #{tpu_custom_call.1} parent=39 // pred_region
          %s4394 = ssub.s32 1024, 1024
          %4395 = vsyncadd %s4386, %s4394
          %s4396 = smul.addr %s24, 8
          %s4397 = smul.addr %s4396, 128
          %s4398 = scalar_lea.hbm %s5, %s4397
          %s4399 = sshll.u32 %s4389, 4
          %s4400 = int_to_ptr.vmem [resolvable:$true] %s4399
          %4405 = dma.vmem_to_hbm [thread:$0]  %s4400, 1024, %s4398, %s4386, 128, 128, 8
        $region60: #{tpu_custom_call.1} parent=39 // pred_fallthru
          _
      $region40: #{tpu_custom_call.1} parent=5 // pred_fallthru
        _
      %p4406 = scmp.le.s32.totalorder 2, %s19
      // Predicated region
      $region61: #{tpu_custom_call.1} parent=5 // pred_check
        %p4407 = pneg %p4406
      $region62: #{tpu_custom_call.1} parent=5 // pred_check_branch
        %4409 = sbr.rel (%p4407) target = $region64
      $region63: #{tpu_custom_call.1} parent=5 // pred_region
        %s4410 = ssub.s32 %s19, 2
        // Predicated region
        $region65: #{tpu_custom_call.1} parent=63 // pred_check
          %p4411 = pneg %p158
        $region66: #{tpu_custom_call.1} parent=63 // pred_check_branch
          %4413 = sbr.rel (%p4411) target = $region68
        $region67: #{tpu_custom_call.1} parent=63 // pred_region
          %s4414 = sand.u32 %s143, 1
          %s4415 = scalar_lea.sflag [#allocation6], %s4414
          %s4416 = sand.u32 %s143, 1
          %s4417 = smul.addr %s4416, 64
          %s4418 = scalar_lea.vmem [#allocation12], %s4417
          %4419 = dma.done %s4415, 1024
        $region68: #{tpu_custom_call.1} parent=63 // pred_fallthru
          _
      $region64: #{tpu_custom_call.1} parent=5 // pred_fallthru
        _
    $region6: #{tpu_custom_call.1} parent=1 // loop_footer
      %s23 = sadd.s32 1, %s19
    $region7: #{tpu_custom_call.1} parent=1 // loop_footer_branch
      %18 = sbr.rel target = $region3
    $region8: #{tpu_custom_call.1} parent=1 // loop_exit
      _
    %4420 = vsyncpa [#allocation5], 1
    %s4421 = scalar_lea.sflag [#allocation5], 1
    %4422 = vsyncpa %s4421, 1
    %4423 = vsyncpa [#allocation8], 1
    %4424 = vsyncpa [#allocation11], 1
    %4425 = vsyncpa [#allocation6], 1
    %s4426 = scalar_lea.sflag [#allocation6], 1
    %4427 = vsyncpa %s4426, 1

</llo_original>
